<compile_context>
chip_gen: v7x
topology: tpu7x:2x2x1
jax: 0.10.0
libtpu: 0.0.40
codegen_flags: <defaults>
</compile_context>

<pallas_src>
import numpy as np
import jax
import jax.numpy as jnp
from jax.experimental import pallas as pl
from jax.experimental.pallas import tpu as pltpu


# ---------------------------------------------------------------------------
# Fused Pallas kernel: all pyramid stages, one batch element per outer grid
# step, C-tile reduction on the inner grid axis.
# ---------------------------------------------------------------------------
def _make_fused_kernel(seg_offs, seg_sizes):
    num_stages = len(seg_sizes)

    def kernel(*refs):
        # refs: x, P_all, w_all, b_all, u_0..u_{S-1}, o_0..o_{S-1}, acc_scratch
        x_ref, p_ref, w_ref, b_ref = refs[0:4]
        u_refs = refs[4:4 + num_stages]
        o_refs = refs[4 + num_stages:4 + 2 * num_stages]
        acc_ref = refs[-1]

        k = pl.program_id(1)                       # C-tile (reduction) index

        @pl.when(k == 0)
        def _init():
            acc_ref[...] = jnp.zeros_like(acc_ref)

        # Adaptive-avg-pool for ALL stages at once: (SS_PAD, HW) @ (HW, Ct).
        x = x_ref[0]                                                   # (HW, Ct) bf16
        pooled = jnp.dot(p_ref[...], x,
                         preferred_element_type=jnp.float32)           # (SS_PAD, Ct) f32

        # Per-stage 1x1 conv (BN scale folded into weights), accumulated over
        # C tiles into the resident f32 scratch.  All slices are 8-aligned.
        for s in range(num_stages):
            off, seg = seg_offs[s], seg_sizes[s]
            acc_ref[off:off + seg, :] += jnp.dot(
                pooled[off:off + seg, :], w_ref[s],
                preferred_element_type=jnp.float32)                    # (seg, O)

        @pl.when(k == pl.num_programs(1) - 1)
        def _finalize():
            for s in range(num_stages):
                off, seg = seg_offs[s], seg_sizes[s]
                # BN bias + ReLU (scale already folded into the conv weight).
                bn = jnp.maximum(acc_ref[off:off + seg, :] + b_ref[s], 0.0)
                # Bilinear upsample (align_corners=True) as a dense matmul;
                # zero columns for the padded segment rows kill their garbage.
                up = jnp.dot(u_refs[s][...], bn,
                             preferred_element_type=jnp.float32)       # (HW, O)
                o_refs[s][0] = up.astype(o_refs[s].dtype)

    return kernel


def _choose_c_tile(C):
    for ct in (256, 128):
        if C % ct == 0:
            return ct
    return C  # small / odd channel counts: single full-C block


def _run_fused(x_bf, p_bf, w_all, b_all, u_list, seg_offs, seg_sizes, out_dtype):
    N, HW, C = x_bf.shape
    S, _, O = w_all.shape
    SS_PAD = p_bf.shape[0]
    ct = _choose_c_tile(C)
    n_ct = C // ct

    kernel = _make_fused_kernel(tuple(seg_offs), tuple(seg_sizes))

    in_specs = [
        pl.BlockSpec((1, HW, ct), lambda n, k: (n, 0, k)),     # x, C-tiled
        pl.BlockSpec((SS_PAD, HW), lambda n, k: (0, 0)),        # stacked pool operator
        pl.BlockSpec((S, ct, O), lambda n, k: (0, k, 0)),       # folded conv weights
        pl.BlockSpec((S, 1, O), lambda n, k: (0, 0, 0)),        # folded BN bias
    ] + [
        pl.BlockSpec((HW, seg), lambda n, k: (0, 0)) for seg in seg_sizes
    ]
    out_specs = tuple(
        pl.BlockSpec((1, HW, O), lambda n, k: (n, 0, 0)) for _ in range(S)
    )
    out_shape = tuple(
        jax.ShapeDtypeStruct((N, HW, O), out_dtype) for _ in range(S)
    )

    return pl.pallas_call(
        kernel,
        out_shape=out_shape,
        grid=(N, n_ct),
        in_specs=in_specs,
        out_specs=out_specs,
        scratch_shapes=[pltpu.VMEM((SS_PAD, O), jnp.float32)],
        compiler_params=pltpu.CompilerParams(
            dimension_semantics=("parallel", "arbitrary"),
            vmem_limit_bytes=64 * 1024 * 1024,
        ),
    )(x_bf, p_bf, w_all, b_all, *u_list)


# ---------------------------------------------------------------------------
# Exact linear operators for adaptive-avg-pool / bilinear (align_corners=True).
# ---------------------------------------------------------------------------
def _adaptive_pool_matrix_1d(out_size, in_size):
    P = np.zeros((out_size, in_size), dtype=np.float32)
    for i in range(out_size):
        start = (i * in_size) // out_size
        end = -((-(i + 1) * in_size) // out_size)   # ceil((i+1)*in/out)
        P[i, start:end] = 1.0 / (end - start)
    return P


def _bilinear_matrix_1d(out_size, in_size):
    U = np.zeros((out_size, in_size), dtype=np.float32)
    if in_size == 1:
        U[:, 0] = 1.0
        return U
    scale = (in_size - 1) / (out_size - 1) if out_size > 1 else 0.0
    for Y in range(out_size):
        src = Y * scale
        i0 = min(int(np.floor(src)), in_size - 1)
        i1 = min(i0 + 1, in_size - 1)
        frac = src - i0
        U[Y, i0] += 1.0 - frac
        U[Y, i1] += frac
    return U


def _build_operators(sizes, H, W):
    """Stacked pool operator (SS_PAD, HW) + per-stage upsample operators (HW, seg)."""
    HW = H * W
    seg_sizes = [-(-(s * s) // 8) * 8 for s in sizes]          # pad to 8 sublanes
    seg_offs = np.cumsum([0] + seg_sizes[:-1]).tolist()
    SS_PAD = int(sum(seg_sizes))

    P_all = np.zeros((SS_PAD, HW), dtype=np.float32)
    u_list = []
    for s, off, seg in zip(sizes, seg_offs, seg_sizes):
        Ph = _adaptive_pool_matrix_1d(s, H)                     # (s, H)
        Pw = _adaptive_pool_matrix_1d(s, W)                     # (s, W)
        Uh = _bilinear_matrix_1d(H, s)                          # (H, s)
        Uw = _bilinear_matrix_1d(W, s)                          # (W, s)
        P2 = np.einsum("iy,jx->ijyx", Ph, Pw).reshape(s * s, HW)
        P_all[off:off + s * s, :] = P2
        U2T = np.einsum("Yi,Xj->YXij", Uh, Uw).reshape(HW, s * s)
        Upad = np.zeros((HW, seg), dtype=np.float32)
        Upad[:, :s * s] = U2T
        u_list.append(jnp.asarray(Upad))
    return jnp.asarray(P_all), u_list, [int(o) for o in seg_offs], seg_sizes


# ---------------------------------------------------------------------------
# Parameters + forward.
# ---------------------------------------------------------------------------
def init_psp_params(key, features, out_features, sizes):
    """Deterministic synthetic params; BN folded (scale into weight, bias kept)."""
    eps = 1e-5
    w_list, b_list = [], []
    for _ in sizes:
        key, kw, kg, kb, km, kv = jax.random.split(key, 6)
        w = jax.random.normal(kw, (out_features, features), jnp.float32) * 0.1
        gamma = 1.0 + 0.1 * jax.random.normal(kg, (out_features,), jnp.float32)
        beta = 0.1 * jax.random.normal(kb, (out_features,), jnp.float32)
        mean = 0.1 * jax.random.normal(km, (out_features,), jnp.float32)
        var = jnp.abs(jax.random.normal(kv, (out_features,), jnp.float32)) + 0.5
        # TODO(synk): BN is folded as inference-mode (running-stats) affine;
        # training-mode batch statistics are not reproduced here.
        scale = gamma / jnp.sqrt(var + eps)
        bias = beta - mean * scale
        w_list.append((scale[:, None] * w).T)        # (C, O), BN scale folded in
        b_list.append(bias[None, :])                  # (1, O)
    return dict(w_all=jnp.stack(w_list, 0),           # (S, C, O)
                b_all=jnp.stack(b_list, 0))           # (S, 1, O)


def psp_module_forward(feats, params, sizes=(1, 2, 3, 6)):
    """feats: (N, C, H, W) f32.  Returns [prior_s for s in sizes] + [feats] in NCHW."""
    N, C, H, W = feats.shape
    HW = H * W
    w_all = params["w_all"]
    b_all = params["b_all"]
    O = w_all.shape[-1]

    p_all, u_list, seg_offs, seg_sizes = _build_operators(sizes, H, W)

    # Channels-last + bf16 for the memory-bound pooling phase.
    x_cl = jnp.transpose(feats, (0, 2, 3, 1)).reshape(N, HW, C).astype(jnp.bfloat16)
    p_bf = p_all.astype(jnp.bfloat16)

    outs = _run_fused(x_cl, p_bf, w_all, b_all, u_list, seg_offs, seg_sizes,
                      feats.dtype)
    priors = [jnp.transpose(o.reshape(N, H, W, O), (0, 3, 1, 2)) for o in outs]
    return priors + [feats]


# ---------------------------------------------------------------------------
# Plain-JAX reference (uses the same bf16-quantized x / pool operator).
# ---------------------------------------------------------------------------
def _reference_forward(feats, p_bf, w_all, b_all, u_list, seg_offs, seg_sizes):
    N, C, H, W = feats.shape
    HW = H * W
    x = jnp.transpose(feats, (0, 2, 3, 1)).reshape(N, HW, C)
    x = x.astype(jnp.bfloat16).astype(jnp.float32)
    P = p_bf.astype(jnp.float32)
    hi = jax.lax.Precision.HIGHEST
    pooled = jnp.einsum("sh,nhc->nsc", P, x, precision=hi)
    outs = []
    for s in range(len(seg_sizes)):
        off, seg = seg_offs[s], seg_sizes[s]
        conv = jnp.einsum("nsc,co->nso", pooled[:, off:off + seg, :], w_all[s],
                          precision=hi)
        bn = jnp.maximum(conv + b_all[s][None], 0.0)
        up = jnp.einsum("hs,nso->nho", u_list[s], bn, precision=hi)
        outs.append(jnp.transpose(up.reshape(N, H, W, -1), (0, 3, 1, 2)))
    return outs


if __name__ == "__main__":
    N, C, H, W = 2, 4, 16, 16
    out_features = 8
    sizes = (1, 2, 3, 6)

    key = jax.random.PRNGKey(0)
    key, kx = jax.random.split(key)
    feats = jax.random.normal(kx, (N, C, H, W), dtype=jnp.float32)
    params = init_psp_params(key, C, out_features, sizes)

    outs = psp_module_forward(feats, params, sizes)
    outs = jax.block_until_ready(outs)

    # Verify against plain-JAX reference (same bf16 quantization of x / pool op).
    p_all, u_list, seg_offs, seg_sizes = _build_operators(sizes, H, W)
    refs = _reference_forward(feats, p_all.astype(jnp.bfloat16),
                              params["w_all"], params["b_all"],
                              u_list, seg_offs, seg_sizes)
    for out, ref in zip(outs[:-1], refs):
        np.testing.assert_allclose(np.asarray(out), np.asarray(ref),
                                   rtol=2e-2, atol=1e-2)
    np.testing.assert_allclose(np.asarray(outs[-1]), np.asarray(feats))

    print("KERNEL_OK")
</pallas_src>

<mosaic_0001>
module attributes {stable_mosaic.version = 11 : i64} {
  func.func @kernel(%arg0: i32, %arg1: i32, %arg2: memref<1x256x4xbf16, #tpu.memory_space<vmem>>, %arg3: memref<72x256xbf16, #tpu.memory_space<vmem>>, %arg4: memref<4x4x8xf32, #tpu.memory_space<vmem>>, %arg5: memref<4x1x8xf32, #tpu.memory_space<vmem>>, %arg6: memref<256x8xf32, #tpu.memory_space<vmem>>, %arg7: memref<256x8xf32, #tpu.memory_space<vmem>>, %arg8: memref<256x16xf32, #tpu.memory_space<vmem>>, %arg9: memref<256x40xf32, #tpu.memory_space<vmem>>, %arg10: memref<1x256x8xf32, #tpu.memory_space<vmem>>, %arg11: memref<1x256x8xf32, #tpu.memory_space<vmem>>, %arg12: memref<1x256x8xf32, #tpu.memory_space<vmem>>, %arg13: memref<1x256x8xf32, #tpu.memory_space<vmem>>, %arg14: memref<72x8xf32, #tpu.memory_space<vmem>>) attributes {dimension_semantics = [#tpu.dimension_semantics<parallel>, #tpu.dimension_semantics<arbitrary>], iteration_bounds = array<i64: 2, 1>, scalar_prefetch = 0 : i64, scratch_operands = 1 : i64, tpu.core_type = #tpu.core_type<tc>, window_params = [{transform_indices = @transform_0, window_bounds = array<i64: 1, 256, 4>}, {pipeline_mode = #tpu.pipeline_mode<synchronous>, transform_indices = @transform_1, window_bounds = array<i64: 72, 256>}, {transform_indices = @transform_2, window_bounds = array<i64: 4, 4, 8>}, {pipeline_mode = #tpu.pipeline_mode<synchronous>, transform_indices = @transform_3, window_bounds = array<i64: 4, 1, 8>}, {pipeline_mode = #tpu.pipeline_mode<synchronous>, transform_indices = @transform_4, window_bounds = array<i64: 256, 8>}, {pipeline_mode = #tpu.pipeline_mode<synchronous>, transform_indices = @transform_5, window_bounds = array<i64: 256, 8>}, {pipeline_mode = #tpu.pipeline_mode<synchronous>, transform_indices = @transform_6, window_bounds = array<i64: 256, 16>}, {pipeline_mode = #tpu.pipeline_mode<synchronous>, transform_indices = @transform_7, window_bounds = array<i64: 256, 40>}, {transform_indices = @transform_8, window_bounds = array<i64: 1, 256, 8>}, {transform_indices = @transform_9, window_bounds = array<i64: 1, 256, 8>}, {transform_indices = @transform_10, window_bounds = array<i64: 1, 256, 8>}, {transform_indices = @transform_11, window_bounds = array<i64: 1, 256, 8>}]} {
    %c0_i32 = arith.constant 0 : i32
    %0 = arith.cmpi eq, %arg1, %c0_i32 : i32
    %1 = arith.extui %0 : i1 to i32
    %c0_i32_0 = arith.constant 0 : i32
    %2 = arith.cmpi ne, %1, %c0_i32_0 : i32
    scf.if %2 {
      %cst_33 = arith.constant 0.000000e+00 : f32
      %38 = vector.broadcast %cst_33 : f32 to vector<72x8xf32>
      %c0_34 = arith.constant 0 : index
      %c0_35 = arith.constant 0 : index
      %39 = vector.load %arg14[%c0_34, %c0_35] : memref<72x8xf32, #tpu.memory_space<vmem>>, vector<72x8xf32>
      tpu.vector_store %arg14[%c0_34, %c0_35], %38 {strides = array<i32>} : memref<72x8xf32, #tpu.memory_space<vmem>>, vector<72x8xf32>,
    } else {
    }
    %c0 = arith.constant 0 : index
    %c0_1 = arith.constant 0 : index
    %c0_2 = arith.constant 0 : index
    %3 = vector.load %arg2[%c0, %c0_1, %c0_2] : memref<1x256x4xbf16, #tpu.memory_space<vmem>>, vector<1x256x4xbf16>
    %4 = vector.shape_cast %3 : vector<1x256x4xbf16> to vector<256x4xbf16>
    %c0_3 = arith.constant 0 : index
    %c0_4 = arith.constant 0 : index
    %5 = vector.load %arg3[%c0_3, %c0_4] : memref<72x256xbf16, #tpu.memory_space<vmem>>, vector<72x256xbf16>
    %cst = arith.constant dense<0.000000e+00> : vector<72x4xf32>
    %6 = tpu.matmul %5, %4, %cst {dimension_numbers = #tpu.dot_dimension_numbers<[1], [0], [0], [1], [0, 0, 1, 1], [], []>} : vector<72x256xbf16>, vector<256x4xbf16>, vector<72x4xf32> -> vector<72x4xf32>
    %c0_5 = arith.constant 0 : index
    %c0_6 = arith.constant 0 : index
    %7 = vector.load %arg14[%c0_5, %c0_6] : memref<72x8xf32, #tpu.memory_space<vmem>>, vector<8x8xf32>
    %8 = vector.extract_strided_slice %6 {offsets = [0, 0], sizes = [8, 4], strides = [1, 1]} : vector<72x4xf32> to vector<8x4xf32>
    %c0_7 = arith.constant 0 : index
    %c0_8 = arith.constant 0 : index
    %c0_9 = arith.constant 0 : index
    %9 = vector.load %arg4[%c0_7, %c0_8, %c0_9] : memref<4x4x8xf32, #tpu.memory_space<vmem>>, vector<1x4x8xf32>
    %10 = vector.shape_cast %9 : vector<1x4x8xf32> to vector<4x8xf32>
    %cst_10 = arith.constant dense<0.000000e+00> : vector<8x8xf32>
    %11 = tpu.matmul %8, %10, %cst_10 {dimension_numbers = #tpu.dot_dimension_numbers<[1], [0], [0], [1], [0, 0, 1, 1], [], []>} : vector<8x4xf32>, vector<4x8xf32>, vector<8x8xf32> -> vector<8x8xf32>
    %12 = arith.addf %7, %11 : vector<8x8xf32>
    %c0_11 = arith.constant 0 : index
    %c0_12 = arith.constant 0 : index
    %13 = vector.load %arg14[%c0_11, %c0_12] : memref<72x8xf32, #tpu.memory_space<vmem>>, vector<8x8xf32>
    tpu.vector_store %arg14[%c0_11, %c0_12], %12 {strides = array<i32>} : memref<72x8xf32, #tpu.memory_space<vmem>>, vector<8x8xf32>,
    %c8 = arith.constant 8 : index
    %c0_13 = arith.constant 0 : index
    %14 = vector.load %arg14[%c8, %c0_13] : memref<72x8xf32, #tpu.memory_space<vmem>>, vector<8x8xf32>
    %15 = vector.extract_strided_slice %6 {offsets = [8, 0], sizes = [8, 4], strides = [1, 1]} : vector<72x4xf32> to vector<8x4xf32>
    %c1 = arith.constant 1 : index
    %c0_14 = arith.constant 0 : index
    %c0_15 = arith.constant 0 : index
    %16 = vector.load %arg4[%c1, %c0_14, %c0_15] : memref<4x4x8xf32, #tpu.memory_space<vmem>>, vector<1x4x8xf32>
    %17 = vector.shape_cast %16 : vector<1x4x8xf32> to vector<4x8xf32>
    %cst_16 = arith.constant dense<0.000000e+00> : vector<8x8xf32>
    %18 = tpu.matmul %15, %17, %cst_16 {dimension_numbers = #tpu.dot_dimension_numbers<[1], [0], [0], [1], [0, 0, 1, 1], [], []>} : vector<8x4xf32>, vector<4x8xf32>, vector<8x8xf32> -> vector<8x8xf32>
    %19 = arith.addf %14, %18 : vector<8x8xf32>
    %c8_17 = arith.constant 8 : index
    %c0_18 = arith.constant 0 : index
    %20 = vector.load %arg14[%c8_17, %c0_18] : memref<72x8xf32, #tpu.memory_space<vmem>>, vector<8x8xf32>
    tpu.vector_store %arg14[%c8_17, %c0_18], %19 {strides = array<i32>} : memref<72x8xf32, #tpu.memory_space<vmem>>, vector<8x8xf32>,
    %c16 = arith.constant 16 : index
    %c0_19 = arith.constant 0 : index
    %21 = vector.load %arg14[%c16, %c0_19] : memref<72x8xf32, #tpu.memory_space<vmem>>, vector<16x8xf32>
    %22 = vector.extract_strided_slice %6 {offsets = [16, 0], sizes = [16, 4], strides = [1, 1]} : vector<72x4xf32> to vector<16x4xf32>
    %c2 = arith.constant 2 : index
    %c0_20 = arith.constant 0 : index
    %c0_21 = arith.constant 0 : index
    %23 = vector.load %arg4[%c2, %c0_20, %c0_21] : memref<4x4x8xf32, #tpu.memory_space<vmem>>, vector<1x4x8xf32>
    %24 = vector.shape_cast %23 : vector<1x4x8xf32> to vector<4x8xf32>
    %cst_22 = arith.constant dense<0.000000e+00> : vector<16x8xf32>
    %25 = tpu.matmul %22, %24, %cst_22 {dimension_numbers = #tpu.dot_dimension_numbers<[1], [0], [0], [1], [0, 0, 1, 1], [], []>} : vector<16x4xf32>, vector<4x8xf32>, vector<16x8xf32> -> vector<16x8xf32>
    %26 = arith.addf %21, %25 : vector<16x8xf32>
    %c16_23 = arith.constant 16 : index
    %c0_24 = arith.constant 0 : index
    %27 = vector.load %arg14[%c16_23, %c0_24] : memref<72x8xf32, #tpu.memory_space<vmem>>, vector<16x8xf32>
    tpu.vector_store %arg14[%c16_23, %c0_24], %26 {strides = array<i32>} : memref<72x8xf32, #tpu.memory_space<vmem>>, vector<16x8xf32>,
    %c32 = arith.constant 32 : index
    %c0_25 = arith.constant 0 : index
    %28 = vector.load %arg14[%c32, %c0_25] : memref<72x8xf32, #tpu.memory_space<vmem>>, vector<40x8xf32>
    %29 = vector.extract_strided_slice %6 {offsets = [32, 0], sizes = [40, 4], strides = [1, 1]} : vector<72x4xf32> to vector<40x4xf32>
    %c3 = arith.constant 3 : index
    %c0_26 = arith.constant 0 : index
    %c0_27 = arith.constant 0 : index
    %30 = vector.load %arg4[%c3, %c0_26, %c0_27] : memref<4x4x8xf32, #tpu.memory_space<vmem>>, vector<1x4x8xf32>
    %31 = vector.shape_cast %30 : vector<1x4x8xf32> to vector<4x8xf32>
    %cst_28 = arith.constant dense<0.000000e+00> : vector<40x8xf32>
    %32 = tpu.matmul %29, %31, %cst_28 {dimension_numbers = #tpu.dot_dimension_numbers<[1], [0], [0], [1], [0, 0, 1, 1], [], []>} : vector<40x4xf32>, vector<4x8xf32>, vector<40x8xf32> -> vector<40x8xf32>
    %33 = arith.addf %28, %32 : vector<40x8xf32>
    %c32_29 = arith.constant 32 : index
    %c0_30 = arith.constant 0 : index
    %34 = vector.load %arg14[%c32_29, %c0_30] : memref<72x8xf32, #tpu.memory_space<vmem>>, vector<40x8xf32>
    tpu.vector_store %arg14[%c32_29, %c0_30], %33 {strides = array<i32>} : memref<72x8xf32, #tpu.memory_space<vmem>>, vector<40x8xf32>,
    %c0_i32_31 = arith.constant 0 : i32
    %35 = arith.cmpi eq, %arg1, %c0_i32_31 : i32
    %36 = arith.extui %35 : i1 to i32
    %c0_i32_32 = arith.constant 0 : i32
    %37 = arith.cmpi ne, %36, %c0_i32_32 : i32
    scf.if %37 {
      %c0_33 = arith.constant 0 : index
      %c0_34 = arith.constant 0 : index
      %38 = vector.load %arg14[%c0_33, %c0_34] : memref<72x8xf32, #tpu.memory_space<vmem>>, vector<8x8xf32>
      %c0_35 = arith.constant 0 : index
      %c0_36 = arith.constant 0 : index
      %c0_37 = arith.constant 0 : index
      %39 = vector.load %arg5[%c0_35, %c0_36, %c0_37] : memref<4x1x8xf32, #tpu.memory_space<vmem>>, vector<1x1x8xf32>
      %40 = vector.shape_cast %39 : vector<1x1x8xf32> to vector<1x8xf32>
      %41 = vector.broadcast %40 : vector<1x8xf32> to vector<8x8xf32>
      %42 = arith.addf %38, %41 : vector<8x8xf32>
      %cst_38 = arith.constant 0.000000e+00 : f32
      %43 = vector.broadcast %cst_38 : f32 to vector<8x8xf32>
      %44 = arith.maximumf %42, %43 : vector<8x8xf32>
      %c0_39 = arith.constant 0 : index
      %c0_40 = arith.constant 0 : index
      %45 = vector.load %arg6[%c0_39, %c0_40] : memref<256x8xf32, #tpu.memory_space<vmem>>, vector<256x8xf32>
      %cst_41 = arith.constant dense<0.000000e+00> : vector<256x8xf32>
      %46 = tpu.matmul %45, %44, %cst_41 {dimension_numbers = #tpu.dot_dimension_numbers<[1], [0], [0], [1], [0, 0, 1, 1], [], []>} : vector<256x8xf32>, vector<8x8xf32>, vector<256x8xf32> -> vector<256x8xf32>
      %c0_42 = arith.constant 0 : index
      %c0_43 = arith.constant 0 : index
      %c0_44 = arith.constant 0 : index
      %47 = vector.load %arg10[%c0_42, %c0_43, %c0_44] : memref<1x256x8xf32, #tpu.memory_space<vmem>>, vector<1x256x8xf32>
      %48 = vector.shape_cast %47 : vector<1x256x8xf32> to vector<256x8xf32>
      %49 = vector.shape_cast %46 : vector<256x8xf32> to vector<1x256x8xf32>
      tpu.vector_store %arg10[%c0_42, %c0_43, %c0_44], %49 {strides = array<i32>} : memref<1x256x8xf32, #tpu.memory_space<vmem>>, vector<1x256x8xf32>,
      %c8_45 = arith.constant 8 : index
      %c0_46 = arith.constant 0 : index
      %50 = vector.load %arg14[%c8_45, %c0_46] : memref<72x8xf32, #tpu.memory_space<vmem>>, vector<8x8xf32>
      %c1_47 = arith.constant 1 : index
      %c0_48 = arith.constant 0 : index
      %c0_49 = arith.constant 0 : index
      %51 = vector.load %arg5[%c1_47, %c0_48, %c0_49] : memref<4x1x8xf32, #tpu.memory_space<vmem>>, vector<1x1x8xf32>
      %52 = vector.shape_cast %51 : vector<1x1x8xf32> to vector<1x8xf32>
      %53 = vector.broadcast %52 : vector<1x8xf32> to vector<8x8xf32>
      %54 = arith.addf %50, %53 : vector<8x8xf32>
      %cst_50 = arith.constant 0.000000e+00 : f32
      %55 = vector.broadcast %cst_50 : f32 to vector<8x8xf32>
      %56 = arith.maximumf %54, %55 : vector<8x8xf32>
      %c0_51 = arith.constant 0 : index
      %c0_52 = arith.constant 0 : index
      %57 = vector.load %arg7[%c0_51, %c0_52] : memref<256x8xf32, #tpu.memory_space<vmem>>, vector<256x8xf32>
      %cst_53 = arith.constant dense<0.000000e+00> : vector<256x8xf32>
      %58 = tpu.matmul %57, %56, %cst_53 {dimension_numbers = #tpu.dot_dimension_numbers<[1], [0], [0], [1], [0, 0, 1, 1], [], []>} : vector<256x8xf32>, vector<8x8xf32>, vector<256x8xf32> -> vector<256x8xf32>
      %c0_54 = arith.constant 0 : index
      %c0_55 = arith.constant 0 : index
      %c0_56 = arith.constant 0 : index
      %59 = vector.load %arg11[%c0_54, %c0_55, %c0_56] : memref<1x256x8xf32, #tpu.memory_space<vmem>>, vector<1x256x8xf32>
      %60 = vector.shape_cast %59 : vector<1x256x8xf32> to vector<256x8xf32>
      %61 = vector.shape_cast %58 : vector<256x8xf32> to vector<1x256x8xf32>
      tpu.vector_store %arg11[%c0_54, %c0_55, %c0_56], %61 {strides = array<i32>} : memref<1x256x8xf32, #tpu.memory_space<vmem>>, vector<1x256x8xf32>,
      %c16_57 = arith.constant 16 : index
      %c0_58 = arith.constant 0 : index
      %62 = vector.load %arg14[%c16_57, %c0_58] : memref<72x8xf32, #tpu.memory_space<vmem>>, vector<16x8xf32>
      %c2_59 = arith.constant 2 : index
      %c0_60 = arith.constant 0 : index
      %c0_61 = arith.constant 0 : index
      %63 = vector.load %arg5[%c2_59, %c0_60, %c0_61] : memref<4x1x8xf32, #tpu.memory_space<vmem>>, vector<1x1x8xf32>
      %64 = vector.shape_cast %63 : vector<1x1x8xf32> to vector<1x8xf32>
      %65 = vector.broadcast %64 : vector<1x8xf32> to vector<16x8xf32>
      %66 = arith.addf %62, %65 : vector<16x8xf32>
      %cst_62 = arith.constant 0.000000e+00 : f32
      %67 = vector.broadcast %cst_62 : f32 to vector<16x8xf32>
      %68 = arith.maximumf %66, %67 : vector<16x8xf32>
      %c0_63 = arith.constant 0 : index
      %c0_64 = arith.constant 0 : index
      %69 = vector.load %arg8[%c0_63, %c0_64] : memref<256x16xf32, #tpu.memory_space<vmem>>, vector<256x16xf32>
      %cst_65 = arith.constant dense<0.000000e+00> : vector<256x8xf32>
      %70 = tpu.matmul %69, %68, %cst_65 {dimension_numbers = #tpu.dot_dimension_numbers<[1], [0], [0], [1], [0, 0, 1, 1], [], []>} : vector<256x16xf32>, vector<16x8xf32>, vector<256x8xf32> -> vector<256x8xf32>
      %c0_66 = arith.constant 0 : index
      %c0_67 = arith.constant 0 : index
      %c0_68 = arith.constant 0 : index
      %71 = vector.load %arg12[%c0_66, %c0_67, %c0_68] : memref<1x256x8xf32, #tpu.memory_space<vmem>>, vector<1x256x8xf32>
      %72 = vector.shape_cast %71 : vector<1x256x8xf32> to vector<256x8xf32>
      %73 = vector.shape_cast %70 : vector<256x8xf32> to vector<1x256x8xf32>
      tpu.vector_store %arg12[%c0_66, %c0_67, %c0_68], %73 {strides = array<i32>} : memref<1x256x8xf32, #tpu.memory_space<vmem>>, vector<1x256x8xf32>,
      %c32_69 = arith.constant 32 : index
      %c0_70 = arith.constant 0 : index
      %74 = vector.load %arg14[%c32_69, %c0_70] : memref<72x8xf32, #tpu.memory_space<vmem>>, vector<40x8xf32>
      %c3_71 = arith.constant 3 : index
      %c0_72 = arith.constant 0 : index
      %c0_73 = arith.constant 0 : index
      %75 = vector.load %arg5[%c3_71, %c0_72, %c0_73] : memref<4x1x8xf32, #tpu.memory_space<vmem>>, vector<1x1x8xf32>
      %76 = vector.shape_cast %75 : vector<1x1x8xf32> to vector<1x8xf32>
      %77 = vector.broadcast %76 : vector<1x8xf32> to vector<40x8xf32>
      %78 = arith.addf %74, %77 : vector<40x8xf32>
      %cst_74 = arith.constant 0.000000e+00 : f32
      %79 = vector.broadcast %cst_74 : f32 to vector<40x8xf32>
      %80 = arith.maximumf %78, %79 : vector<40x8xf32>
      %c0_75 = arith.constant 0 : index
      %c0_76 = arith.constant 0 : index
      %81 = vector.load %arg9[%c0_75, %c0_76] : memref<256x40xf32, #tpu.memory_space<vmem>>, vector<256x40xf32>
      %cst_77 = arith.constant dense<0.000000e+00> : vector<256x8xf32>
      %82 = tpu.matmul %81, %80, %cst_77 {dimension_numbers = #tpu.dot_dimension_numbers<[1], [0], [0], [1], [0, 0, 1, 1], [], []>} : vector<256x40xf32>, vector<40x8xf32>, vector<256x8xf32> -> vector<256x8xf32>
      %c0_78 = arith.constant 0 : index
      %c0_79 = arith.constant 0 : index
      %c0_80 = arith.constant 0 : index
      %83 = vector.load %arg13[%c0_78, %c0_79, %c0_80] : memref<1x256x8xf32, #tpu.memory_space<vmem>>, vector<1x256x8xf32>
      %84 = vector.shape_cast %83 : vector<1x256x8xf32> to vector<256x8xf32>
      %85 = vector.shape_cast %82 : vector<256x8xf32> to vector<1x256x8xf32>
      tpu.vector_store %arg13[%c0_78, %c0_79, %c0_80], %85 {strides = array<i32>} : memref<1x256x8xf32, #tpu.memory_space<vmem>>, vector<1x256x8xf32>,
    } else {
    }
    return
  }
  func.func @transform_0(%arg0: i32, %arg1: i32) -> (i32, i32, i32) {
    %c0_i32 = arith.constant 0 : i32
    %c0_i32_0 = arith.constant 0 : i32
    return %arg0, %c0_i32, %arg1 : i32, i32, i32
  }
  func.func @transform_1(%arg0: i32, %arg1: i32) -> (i32, i32) {
    %c0_i32 = arith.constant 0 : i32
    %c0_i32_0 = arith.constant 0 : i32
    %c0_i32_1 = arith.constant 0 : i32
    return %c0_i32, %c0_i32_0 : i32, i32
  }
  func.func @transform_2(%arg0: i32, %arg1: i32) -> (i32, i32, i32) {
    %c0_i32 = arith.constant 0 : i32
    %c0_i32_0 = arith.constant 0 : i32
    %c0_i32_1 = arith.constant 0 : i32
    return %c0_i32, %arg1, %c0_i32_0 : i32, i32, i32
  }
  func.func @transform_3(%arg0: i32, %arg1: i32) -> (i32, i32, i32) {
    %c0_i32 = arith.constant 0 : i32
    %c0_i32_0 = arith.constant 0 : i32
    %c0_i32_1 = arith.constant 0 : i32
    %c0_i32_2 = arith.constant 0 : i32
    return %c0_i32, %c0_i32_0, %c0_i32_1 : i32, i32, i32
  }
  func.func @transform_4(%arg0: i32, %arg1: i32) -> (i32, i32) {
    %c0_i32 = arith.constant 0 : i32
    %c0_i32_0 = arith.constant 0 : i32
    %c0_i32_1 = arith.constant 0 : i32
    return %c0_i32, %c0_i32_0 : i32, i32
  }
  func.func @transform_5(%arg0: i32, %arg1: i32) -> (i32, i32) {
    %c0_i32 = arith.constant 0 : i32
    %c0_i32_0 = arith.constant 0 : i32
    %c0_i32_1 = arith.constant 0 : i32
    return %c0_i32, %c0_i32_0 : i32, i32
  }
  func.func @transform_6(%arg0: i32, %arg1: i32) -> (i32, i32) {
    %c0_i32 = arith.constant 0 : i32
    %c0_i32_0 = arith.constant 0 : i32
    %c0_i32_1 = arith.constant 0 : i32
    return %c0_i32, %c0_i32_0 : i32, i32
  }
  func.func @transform_7(%arg0: i32, %arg1: i32) -> (i32, i32) {
    %c0_i32 = arith.constant 0 : i32
    %c0_i32_0 = arith.constant 0 : i32
    %c0_i32_1 = arith.constant 0 : i32
    return %c0_i32, %c0_i32_0 : i32, i32
  }
  func.func @transform_8(%arg0: i32, %arg1: i32) -> (i32, i32, i32) {
    %c0_i32 = arith.constant 0 : i32
    %c0_i32_0 = arith.constant 0 : i32
    %c0_i32_1 = arith.constant 0 : i32
    return %arg0, %c0_i32, %c0_i32_0 : i32, i32, i32
  }
  func.func @transform_9(%arg0: i32, %arg1: i32) -> (i32, i32, i32) {
    %c0_i32 = arith.constant 0 : i32
    %c0_i32_0 = arith.constant 0 : i32
    %c0_i32_1 = arith.constant 0 : i32
    return %arg0, %c0_i32, %c0_i32_0 : i32, i32, i32
  }
  func.func @transform_10(%arg0: i32, %arg1: i32) -> (i32, i32, i32) {
    %c0_i32 = arith.constant 0 : i32
    %c0_i32_0 = arith.constant 0 : i32
    %c0_i32_1 = arith.constant 0 : i32
    return %arg0, %c0_i32, %c0_i32_0 : i32, i32, i32
  }
  func.func @transform_11(%arg0: i32, %arg1: i32) -> (i32, i32, i32) {
    %c0_i32 = arith.constant 0 : i32
    %c0_i32_0 = arith.constant 0 : i32
    %c0_i32_1 = arith.constant 0 : i32
    return %arg0, %c0_i32, %c0_i32_0 : i32, i32, i32
  }
}

</mosaic_0001>

<llo_original>
// kernel: tpu_custom_call.1
$region0: #{tpu_custom_call.1}
  #allocation0 [shape = 'u32[]', space=smem, size = 0x4, offset = 0x4, fixed_abs, tag = 'smem constant byte address 0x4 - core index']
  #allocation1 [shape = 'u32[144,128]{1,0:T(1,128)}', space=vmem, size = 0x12000, scoped, tag = 'internal scratch']
  #allocation2 [shape = 'f32[72,8]{1,0:T(8,128)}', space=vmem, size = 0x9000, scoped, tag = 'scratch operand']
  %s0 = inlined_call_operand.hbm [shape: bf16[2,256,4], index: 0, kind: input, shape index: {}]
  %s1 = inlined_call_operand.hbm [shape: bf16[72,256], index: 1, kind: input, shape index: {}]
  %s2 = inlined_call_operand.hbm [shape: f32[4,4,8], index: 2, kind: input, shape index: {}]
  %s3 = inlined_call_operand.hbm [shape: f32[4,1,8], index: 3, kind: input, shape index: {}]
  %s4 = inlined_call_operand.hbm [shape: f32[256,8], index: 4, kind: input, shape index: {}]
  %s5 = inlined_call_operand.hbm [shape: f32[256,8], index: 5, kind: input, shape index: {}]
  %s6 = inlined_call_operand.hbm [shape: f32[256,16], index: 6, kind: input, shape index: {}]
  %s7 = inlined_call_operand.hbm [shape: f32[256,40], index: 7, kind: input, shape index: {}]
  %s8 = inlined_call_operand.hbm [shape: f32[2,256,8], index: 8, kind: output, shape index: {0}]
  %s9 = inlined_call_operand.hbm [shape: f32[2,256,8], index: 9, kind: output, shape index: {1}]
  %s10 = inlined_call_operand.hbm [shape: f32[2,256,8], index: 10, kind: output, shape index: {2}]
  %s11 = inlined_call_operand.hbm [shape: f32[2,256,8], index: 11, kind: output, shape index: {3}]
  %12 = xla_tuple %s8, %s9, %s10, %s11
  %s13 = sld [smem:[#allocation0]]
  $region129: #{tpu_custom_call.1} parent=0
    _
  %s15 = ssub.s32 1, %s13
  %s16 = scalar_select 0, %s15, %s13
  $region1: #{tpu_custom_call.1} parent=0
    #allocation3 [shape = 'u8[131072]{0}', space=vmem, size = 0x20000, scoped, tag = 'input window, operand 0']
    #allocation4 [shape = 's32[2]{0}', space=sflag, size = 0x8, scoped, tag = 'scoped memory for tpu_custom_call.1']
    #allocation5 [shape = 's32[2]{0}', space=sflag, size = 0x8, scoped, tag = 'scoped memory for tpu_custom_call.1']
    #allocation6 [shape = 'u8[36864]{0}', space=vmem, size = 0x9000, scoped, tag = 'input window, operand 1, single buffered']
    #allocation7 [shape = 's32[1]{0}', space=sflag, size = 0x4, scoped, tag = 'scoped memory for tpu_custom_call.1']
    #allocation8 [shape = 'u8[8192]{0}', space=vmem, size = 0x2000, scoped, tag = 'input window, operand 2, single buffered']
    #allocation9 [shape = 'u8[2048]{0}', space=vmem, size = 0x800, scoped, tag = 'input window, operand 3, single buffered']
    #allocation10 [shape = 's32[1]{0}', space=sflag, size = 0x4, scoped, tag = 'scoped memory for tpu_custom_call.1']
    #allocation11 [shape = 'u8[131072]{0}', space=vmem, size = 0x20000, scoped, tag = 'input window, operand 4, single buffered']
    #allocation12 [shape = 'u8[131072]{0}', space=vmem, size = 0x20000, scoped, tag = 'input window, operand 5, single buffered']
    #allocation13 [shape = 's32[1]{0}', space=sflag, size = 0x4, scoped, tag = 'scoped memory for tpu_custom_call.1']
    #allocation14 [shape = 'u8[131072]{0}', space=vmem, size = 0x20000, scoped, tag = 'input window, operand 6, single buffered']
    #allocation15 [shape = 'u8[131072]{0}', space=vmem, size = 0x20000, scoped, tag = 'input window, operand 7, single buffered']
    #allocation16 [shape = 's32[1]{0}', space=sflag, size = 0x4, scoped, tag = 'scoped memory for tpu_custom_call.1']
    #allocation17 [shape = 'u8[262144]{0}', space=vmem, size = 0x40000, scoped, tag = 'output window, operand 0']
    #allocation18 [shape = 'u8[262144]{0}', space=vmem, size = 0x40000, scoped, tag = 'output window, operand 1']
    #allocation19 [shape = 's32[2]{0}', space=sflag, size = 0x8, scoped, tag = 'scoped memory for tpu_custom_call.1']
    #allocation20 [shape = 'u8[262144]{0}', space=vmem, size = 0x40000, scoped, tag = 'output window, operand 2']
    #allocation21 [shape = 'u8[262144]{0}', space=vmem, size = 0x40000, scoped, tag = 'output window, operand 3']
    #allocation22 [shape = 's32[2]{0}', space=sflag, size = 0x8, scoped, tag = 'scoped memory for tpu_custom_call.1']
    %17 = vsyncpa [#allocation4], 0
    %s18 = scalar_lea.sflag [#allocation4], 1
    %19 = vsyncpa %s18, 0
    %20 = vsyncpa [#allocation7], 0
    %21 = vsyncpa [#allocation10], 0
    %22 = vsyncpa [#allocation13], 0
    %23 = vsyncpa [#allocation16], 0
    %24 = vsyncpa [#allocation5], 0
    %s25 = scalar_lea.sflag [#allocation5], 1
    %26 = vsyncpa %s25, 0
    %27 = vsyncpa [#allocation19], 0
    %s28 = scalar_lea.sflag [#allocation19], 1
    %29 = vsyncpa %s28, 0
    %30 = vsyncpa [#allocation22], 0
    %s31 = scalar_lea.sflag [#allocation22], 1
    %32 = vsyncpa %s31, 0
    loop: start=0, step=1, limit=4
    $region2: #{tpu_custom_call.1} parent=1 // loop_pre_header
      _
    $region3: #{tpu_custom_call.1} parent=1 // loop_header
      %s34 = sphi 0, %s38
      %p35 = scmp.ge.s32.totalorder %s34, 4
      %s41 = sphi 0, %s53
      %s42 = sphi 0, %s49
      %s43 = sphi 0, %s41
      %s44 = sphi 0, %s42
      %s45 = sphi 0, %s43
      %s46 = sphi 0, %s44
      %s58 = sphi 0, %s60
      %s61 = sphi 0, %s58
      %s62 = sphi 0, %s61
      %s78 = sphi 0, %s62
      %s82 = sphi 0, %s82
      %s84 = sphi 0, %s82
      %s85 = sphi 0, %s84
      %s99 = sphi 0, %s85
      %s105 = sphi 0, %s107
      %s108 = sphi 0, %s105
      %s109 = sphi 0, %s108
      %s125 = sphi 0, %s109
      %s129 = sphi 0, %s129
      %s131 = sphi 0, %s129
      %s132 = sphi 0, %s131
      %s146 = sphi 0, %s132
      %s150 = sphi 0, %s150
      %s152 = sphi 0, %s150
      %s153 = sphi 0, %s152
      %s167 = sphi 0, %s153
      %s171 = sphi 0, %s171
      %s173 = sphi 0, %s171
      %s174 = sphi 0, %s173
      %s188 = sphi 0, %s174
      %s192 = sphi 0, %s192
      %s194 = sphi 0, %s192
      %s195 = sphi 0, %s194
      %s209 = sphi 0, %s195
      %s213 = sphi 0, %s213
      %s215 = sphi 0, %s213
      %s216 = sphi 0, %s215
      %s230 = sphi 0, %s216
      %s236 = sphi 0, %s238
      %s239 = sphi 0, %s236
      %s240 = sphi 0, %s239
      %s256 = sphi 0, %s240
      %s262 = sphi 0, %s264
      %s265 = sphi 0, %s262
      %s266 = sphi 0, %s265
      %s282 = sphi 0, %s266
      %s288 = sphi 0, %s290
      %s291 = sphi 0, %s288
      %s292 = sphi 0, %s291
      %s308 = sphi 0, %s292
      %s314 = sphi 0, %s316
      %s317 = sphi 0, %s314
      %s318 = sphi 0, %s317
      %s334 = sphi 0, %s318
    $region4: #{tpu_custom_call.1} parent=1 // loop_header_branch
      %37 = sbr.rel (%p35) target = $region8
    $region5: #{tpu_custom_call.1} parent=1 // loop_body
      %s39 = ssub.s32 %s34, 1
      %s40 = ssub.s32 %s34, 2
      %s47 = sadd.s32 1, %s42
      %p48 = scmp.ge.s32.totalorder %s47, 1
      %s49 = scalar_select %p48, 0, %s47
      %s50 = sadd.s32 1, %s41
      %s51 = scalar_select %p48, %s50, %s41
      %p52 = scmp.ge.s32.totalorder %s51, 2
      %s53 = scalar_select %p52, 0, %s51
      %s54 = ssub.s32 %s41, %s53
      %s55 = ssub.s32 %s42, %s49
      %s56 = sor.u32 %s54, %s55
      %p57 = scmp.eq.s32.totalorder %s56, 0
      %s59 = sadd.s32 %s58, 1
      %s60 = scalar_select %p57, %s58, %s59
      %p63 = pneg %p57
      %p64 = scmp.eq.s32.totalorder %s34, 1
      %p65 = por %p63, %p64
      %p66 = scmp.ne.s32.totalorder %s58, %s61
      %p67 = scmp.eq.s32.totalorder %s34, 0
      %p68 = por %p66, %p67
      %p69 = scmp.ne.s32.totalorder %s58, %s61
      %p70 = scmp.eq.s32.totalorder %s39, 1
      %p71 = por %p69, %p70
      %p72 = scmp.ne.s32.totalorder %s61, %s62
      %p73 = scmp.eq.s32.totalorder %s39, 0
      %p74 = por %p72, %p73
      %p75 = scmp.ne.s32.totalorder %s61, %s62
      %p76 = scmp.eq.s32.totalorder %s40, 1
      %p77 = por %p75, %p76
      %p79 = scmp.ne.s32.totalorder %s62, %s78
      %p80 = scmp.eq.s32.totalorder %s40, 0
      %p81 = por %p79, %p80
      %s83 = sadd.s32 %s82, 1
      %p86 = scmp.eq.s32.totalorder %s34, 1
      %p87 = scmp.ne.s32.totalorder %s82, %s84
      %p88 = scmp.eq.s32.totalorder %s34, 0
      %p89 = por %p87, %p88
      %p90 = scmp.ne.s32.totalorder %s82, %s84
      %p91 = scmp.eq.s32.totalorder %s39, 1
      %p92 = por %p90, %p91
      %p93 = scmp.ne.s32.totalorder %s84, %s85
      %p94 = scmp.eq.s32.totalorder %s39, 0
      %p95 = por %p93, %p94
      %p96 = scmp.ne.s32.totalorder %s84, %s85
      %p97 = scmp.eq.s32.totalorder %s40, 1
      %p98 = por %p96, %p97
      %p100 = scmp.ne.s32.totalorder %s85, %s99
      %p101 = scmp.eq.s32.totalorder %s40, 0
      %p102 = por %p100, %p101
      %s103 = ssub.s32 %s42, %s49
      %p104 = scmp.eq.s32.totalorder %s103, 0
      %s106 = sadd.s32 %s105, 1
      %s107 = scalar_select %p104, %s105, %s106
      %p110 = pneg %p104
      %p111 = scmp.eq.s32.totalorder %s34, 1
      %p112 = por %p110, %p111
      %p113 = scmp.ne.s32.totalorder %s105, %s108
      %p114 = scmp.eq.s32.totalorder %s34, 0
      %p115 = por %p113, %p114
      %p116 = scmp.ne.s32.totalorder %s105, %s108
      %p117 = scmp.eq.s32.totalorder %s39, 1
      %p118 = por %p116, %p117
      %p119 = scmp.ne.s32.totalorder %s108, %s109
      %p120 = scmp.eq.s32.totalorder %s39, 0
      %p121 = por %p119, %p120
      %p122 = scmp.ne.s32.totalorder %s108, %s109
      %p123 = scmp.eq.s32.totalorder %s40, 1
      %p124 = por %p122, %p123
      %p126 = scmp.ne.s32.totalorder %s109, %s125
      %p127 = scmp.eq.s32.totalorder %s40, 0
      %p128 = por %p126, %p127
      %s130 = sadd.s32 %s129, 1
      %p133 = scmp.eq.s32.totalorder %s34, 1
      %p134 = scmp.ne.s32.totalorder %s129, %s131
      %p135 = scmp.eq.s32.totalorder %s34, 0
      %p136 = por %p134, %p135
      %p137 = scmp.ne.s32.totalorder %s129, %s131
      %p138 = scmp.eq.s32.totalorder %s39, 1
      %p139 = por %p137, %p138
      %p140 = scmp.ne.s32.totalorder %s131, %s132
      %p141 = scmp.eq.s32.totalorder %s39, 0
      %p142 = por %p140, %p141
      %p143 = scmp.ne.s32.totalorder %s131, %s132
      %p144 = scmp.eq.s32.totalorder %s40, 1
      %p145 = por %p143, %p144
      %p147 = scmp.ne.s32.totalorder %s132, %s146
      %p148 = scmp.eq.s32.totalorder %s40, 0
      %p149 = por %p147, %p148
      %s151 = sadd.s32 %s150, 1
      %p154 = scmp.eq.s32.totalorder %s34, 1
      %p155 = scmp.ne.s32.totalorder %s150, %s152
      %p156 = scmp.eq.s32.totalorder %s34, 0
      %p157 = por %p155, %p156
      %p158 = scmp.ne.s32.totalorder %s150, %s152
      %p159 = scmp.eq.s32.totalorder %s39, 1
      %p160 = por %p158, %p159
      %p161 = scmp.ne.s32.totalorder %s152, %s153
      %p162 = scmp.eq.s32.totalorder %s39, 0
      %p163 = por %p161, %p162
      %p164 = scmp.ne.s32.totalorder %s152, %s153
      %p165 = scmp.eq.s32.totalorder %s40, 1
      %p166 = por %p164, %p165
      %p168 = scmp.ne.s32.totalorder %s153, %s167
      %p169 = scmp.eq.s32.totalorder %s40, 0
      %p170 = por %p168, %p169
      %s172 = sadd.s32 %s171, 1
      %p175 = scmp.eq.s32.totalorder %s34, 1
      %p176 = scmp.ne.s32.totalorder %s171, %s173
      %p177 = scmp.eq.s32.totalorder %s34, 0
      %p178 = por %p176, %p177
      %p179 = scmp.ne.s32.totalorder %s171, %s173
      %p180 = scmp.eq.s32.totalorder %s39, 1
      %p181 = por %p179, %p180
      %p182 = scmp.ne.s32.totalorder %s173, %s174
      %p183 = scmp.eq.s32.totalorder %s39, 0
      %p184 = por %p182, %p183
      %p185 = scmp.ne.s32.totalorder %s173, %s174
      %p186 = scmp.eq.s32.totalorder %s40, 1
      %p187 = por %p185, %p186
      %p189 = scmp.ne.s32.totalorder %s174, %s188
      %p190 = scmp.eq.s32.totalorder %s40, 0
      %p191 = por %p189, %p190
      %s193 = sadd.s32 %s192, 1
      %p196 = scmp.eq.s32.totalorder %s34, 1
      %p197 = scmp.ne.s32.totalorder %s192, %s194
      %p198 = scmp.eq.s32.totalorder %s34, 0
      %p199 = por %p197, %p198
      %p200 = scmp.ne.s32.totalorder %s192, %s194
      %p201 = scmp.eq.s32.totalorder %s39, 1
      %p202 = por %p200, %p201
      %p203 = scmp.ne.s32.totalorder %s194, %s195
      %p204 = scmp.eq.s32.totalorder %s39, 0
      %p205 = por %p203, %p204
      %p206 = scmp.ne.s32.totalorder %s194, %s195
      %p207 = scmp.eq.s32.totalorder %s40, 1
      %p208 = por %p206, %p207
      %p210 = scmp.ne.s32.totalorder %s195, %s209
      %p211 = scmp.eq.s32.totalorder %s40, 0
      %p212 = por %p210, %p211
      %s214 = sadd.s32 %s213, 1
      %p217 = scmp.eq.s32.totalorder %s34, 1
      %p218 = scmp.ne.s32.totalorder %s213, %s215
      %p219 = scmp.eq.s32.totalorder %s34, 0
      %p220 = por %p218, %p219
      %p221 = scmp.ne.s32.totalorder %s213, %s215
      %p222 = scmp.eq.s32.totalorder %s39, 1
      %p223 = por %p221, %p222
      %p224 = scmp.ne.s32.totalorder %s215, %s216
      %p225 = scmp.eq.s32.totalorder %s39, 0
      %p226 = por %p224, %p225
      %p227 = scmp.ne.s32.totalorder %s215, %s216
      %p228 = scmp.eq.s32.totalorder %s40, 1
      %p229 = por %p227, %p228
      %p231 = scmp.ne.s32.totalorder %s216, %s230
      %p232 = scmp.eq.s32.totalorder %s40, 0
      %p233 = por %p231, %p232
      %s234 = ssub.s32 %s41, %s53
      %p235 = scmp.eq.s32.totalorder %s234, 0
      %s237 = sadd.s32 %s236, 1
      %s238 = scalar_select %p235, %s236, %s237
      %p241 = pneg %p235
      %p242 = scmp.eq.s32.totalorder %s34, 1
      %p243 = por %p241, %p242
      %p244 = scmp.ne.s32.totalorder %s236, %s239
      %p245 = scmp.eq.s32.totalorder %s34, 0
      %p246 = por %p244, %p245
      %p247 = scmp.ne.s32.totalorder %s236, %s239
      %p248 = scmp.eq.s32.totalorder %s39, 1
      %p249 = por %p247, %p248
      %p250 = scmp.ne.s32.totalorder %s239, %s240
      %p251 = scmp.eq.s32.totalorder %s39, 0
      %p252 = por %p250, %p251
      %p253 = scmp.ne.s32.totalorder %s239, %s240
      %p254 = scmp.eq.s32.totalorder %s40, 1
      %p255 = por %p253, %p254
      %p257 = scmp.ne.s32.totalorder %s240, %s256
      %p258 = scmp.eq.s32.totalorder %s40, 0
      %p259 = por %p257, %p258
      %s260 = ssub.s32 %s41, %s53
      %p261 = scmp.eq.s32.totalorder %s260, 0
      %s263 = sadd.s32 %s262, 1
      %s264 = scalar_select %p261, %s262, %s263
      %p267 = pneg %p261
      %p268 = scmp.eq.s32.totalorder %s34, 1
      %p269 = por %p267, %p268
      %p270 = scmp.ne.s32.totalorder %s262, %s265
      %p271 = scmp.eq.s32.totalorder %s34, 0
      %p272 = por %p270, %p271
      %p273 = scmp.ne.s32.totalorder %s262, %s265
      %p274 = scmp.eq.s32.totalorder %s39, 1
      %p275 = por %p273, %p274
      %p276 = scmp.ne.s32.totalorder %s265, %s266
      %p277 = scmp.eq.s32.totalorder %s39, 0
      %p278 = por %p276, %p277
      %p279 = scmp.ne.s32.totalorder %s265, %s266
      %p280 = scmp.eq.s32.totalorder %s40, 1
      %p281 = por %p279, %p280
      %p283 = scmp.ne.s32.totalorder %s266, %s282
      %p284 = scmp.eq.s32.totalorder %s40, 0
      %p285 = por %p283, %p284
      %s286 = ssub.s32 %s41, %s53
      %p287 = scmp.eq.s32.totalorder %s286, 0
      %s289 = sadd.s32 %s288, 1
      %s290 = scalar_select %p287, %s288, %s289
      %p293 = pneg %p287
      %p294 = scmp.eq.s32.totalorder %s34, 1
      %p295 = por %p293, %p294
      %p296 = scmp.ne.s32.totalorder %s288, %s291
      %p297 = scmp.eq.s32.totalorder %s34, 0
      %p298 = por %p296, %p297
      %p299 = scmp.ne.s32.totalorder %s288, %s291
      %p300 = scmp.eq.s32.totalorder %s39, 1
      %p301 = por %p299, %p300
      %p302 = scmp.ne.s32.totalorder %s291, %s292
      %p303 = scmp.eq.s32.totalorder %s39, 0
      %p304 = por %p302, %p303
      %p305 = scmp.ne.s32.totalorder %s291, %s292
      %p306 = scmp.eq.s32.totalorder %s40, 1
      %p307 = por %p305, %p306
      %p309 = scmp.ne.s32.totalorder %s292, %s308
      %p310 = scmp.eq.s32.totalorder %s40, 0
      %p311 = por %p309, %p310
      %s312 = ssub.s32 %s41, %s53
      %p313 = scmp.eq.s32.totalorder %s312, 0
      %s315 = sadd.s32 %s314, 1
      %s316 = scalar_select %p313, %s314, %s315
      %p319 = pneg %p313
      %p320 = scmp.eq.s32.totalorder %s34, 1
      %p321 = por %p319, %p320
      %p322 = scmp.ne.s32.totalorder %s314, %s317
      %p323 = scmp.eq.s32.totalorder %s34, 0
      %p324 = por %p322, %p323
      %p325 = scmp.ne.s32.totalorder %s314, %s317
      %p326 = scmp.eq.s32.totalorder %s39, 1
      %p327 = por %p325, %p326
      %p328 = scmp.ne.s32.totalorder %s317, %s318
      %p329 = scmp.eq.s32.totalorder %s39, 0
      %p330 = por %p328, %p329
      %p331 = scmp.ne.s32.totalorder %s317, %s318
      %p332 = scmp.eq.s32.totalorder %s40, 1
      %p333 = por %p331, %p332
      %p335 = scmp.ne.s32.totalorder %s318, %s334
      %p336 = scmp.eq.s32.totalorder %s40, 0
      %p337 = por %p335, %p336
      %p338 = scmp.le.s32.totalorder 1, %s34
      %p339 = scmp.lt.s32.totalorder %s34, 3
      %p340 = pnand %p338, %p339
      %p341 = pneg %p340
      // Predicated region
      $region9: #{tpu_custom_call.1} parent=5 // pred_check
        _
      $region10: #{tpu_custom_call.1} parent=5 // pred_check_branch
        %343 = sbr.rel (%p340) target = $region12
      $region11: #{tpu_custom_call.1} parent=5 // pred_region
        %s344 = ssub.s32 %s34, 1
        // Predicated region
        $region13: #{tpu_custom_call.1} parent=11 // pred_check
          %p345 = pneg %p95
        $region14: #{tpu_custom_call.1} parent=11 // pred_check_branch
          %347 = sbr.rel (%p345) target = $region16
        $region15: #{tpu_custom_call.1} parent=11 // pred_region
          %s349 = ssub.s32 1152, 1152
          %350 = vsyncadd [#allocation7], %s349
          %s351 = sshll.u32 [#allocation6], 4
          %s352 = int_to_ptr.vmem [resolvable:$true] %s351
          %357 = dma.hbm_to_vmem [thread:$0]  %s1, 1152, %s352, [#allocation7], 128, 128, 8
        $region16: #{tpu_custom_call.1} parent=11 // pred_fallthru
          _
        // Predicated region
        $region17: #{tpu_custom_call.1} parent=11 // pred_check
          %p358 = pneg %p121
        $region18: #{tpu_custom_call.1} parent=11 // pred_check_branch
          %360 = sbr.rel (%p358) target = $region20
        $region19: #{tpu_custom_call.1} parent=11 // pred_region
          %s362 = ssub.s32 256, 256
          %363 = vsyncadd [#allocation7], %s362
          %s364 = smul.addr %s44, 64
          %s365 = scalar_lea.hbm %s2, %s364
          %s366 = sshll.u32 [#allocation8], 4
          %s367 = int_to_ptr.vmem [resolvable:$true] %s366
          %372 = dma.hbm_to_vmem [thread:$0]  %s365, 256, %s367, [#allocation7], 64, 64, 4
        $region20: #{tpu_custom_call.1} parent=11 // pred_fallthru
          _
        // Predicated region
        $region21: #{tpu_custom_call.1} parent=11 // pred_check
          %p373 = pneg %p142
        $region22: #{tpu_custom_call.1} parent=11 // pred_check_branch
          %375 = sbr.rel (%p373) target = $region24
        $region23: #{tpu_custom_call.1} parent=11 // pred_region
          %s377 = ssub.s32 64, 64
          %378 = vsyncadd [#allocation10], %s377
          %s379 = sshll.u32 [#allocation9], 4
          %s380 = int_to_ptr.vmem [resolvable:$true] %s379
          %385 = dma.hbm_to_vmem [thread:$0]  %s3, 64, %s380, [#allocation10], 16, 16, 1
        $region24: #{tpu_custom_call.1} parent=11 // pred_fallthru
          _
        // Predicated region
        $region25: #{tpu_custom_call.1} parent=11 // pred_check
          %p386 = pneg %p163
        $region26: #{tpu_custom_call.1} parent=11 // pred_check_branch
          %388 = sbr.rel (%p386) target = $region28
        $region27: #{tpu_custom_call.1} parent=11 // pred_region
          %s390 = ssub.s32 4096, 4096
          %391 = vsyncadd [#allocation10], %s390
          %s392 = sshll.u32 [#allocation11], 4
          %s393 = int_to_ptr.vmem [resolvable:$true] %s392
          %398 = dma.hbm_to_vmem [thread:$0]  %s4, 4096, %s393, [#allocation10], 128, 128, 8
        $region28: #{tpu_custom_call.1} parent=11 // pred_fallthru
          _
        // Predicated region
        $region29: #{tpu_custom_call.1} parent=11 // pred_check
          %p399 = pneg %p184
        $region30: #{tpu_custom_call.1} parent=11 // pred_check_branch
          %401 = sbr.rel (%p399) target = $region32
        $region31: #{tpu_custom_call.1} parent=11 // pred_region
          %s403 = ssub.s32 4096, 4096
          %404 = vsyncadd [#allocation13], %s403
          %s405 = sshll.u32 [#allocation12], 4
          %s406 = int_to_ptr.vmem [resolvable:$true] %s405
          %411 = dma.hbm_to_vmem [thread:$0]  %s5, 4096, %s406, [#allocation13], 128, 128, 8
        $region32: #{tpu_custom_call.1} parent=11 // pred_fallthru
          _
        // Predicated region
        $region33: #{tpu_custom_call.1} parent=11 // pred_check
          %p412 = pneg %p205
        $region34: #{tpu_custom_call.1} parent=11 // pred_check_branch
          %414 = sbr.rel (%p412) target = $region36
        $region35: #{tpu_custom_call.1} parent=11 // pred_region
          %s416 = ssub.s32 4096, 4096
          %417 = vsyncadd [#allocation13], %s416
          %s418 = sshll.u32 [#allocation14], 4
          %s419 = int_to_ptr.vmem [resolvable:$true] %s418
          %424 = dma.hbm_to_vmem [thread:$0]  %s6, 4096, %s419, [#allocation13], 128, 128, 8
        $region36: #{tpu_custom_call.1} parent=11 // pred_fallthru
          _
        // Predicated region
        $region37: #{tpu_custom_call.1} parent=11 // pred_check
          %p425 = pneg %p226
        $region38: #{tpu_custom_call.1} parent=11 // pred_check_branch
          %427 = sbr.rel (%p425) target = $region40
        $region39: #{tpu_custom_call.1} parent=11 // pred_region
          %s429 = ssub.s32 4096, 4096
          %430 = vsyncadd [#allocation16], %s429
          %s431 = sshll.u32 [#allocation15], 4
          %s432 = int_to_ptr.vmem [resolvable:$true] %s431
          %437 = dma.hbm_to_vmem [thread:$0]  %s7, 4096, %s432, [#allocation16], 128, 128, 8
        $region40: #{tpu_custom_call.1} parent=11 // pred_fallthru
          _
      $region12: #{tpu_custom_call.1} parent=5 // pred_fallthru
        _
      %p438 = scmp.lt.s32.totalorder %s34, 2
      // Predicated region
      $region41: #{tpu_custom_call.1} parent=5 // pred_check
        %p439 = pneg %p438
      $region42: #{tpu_custom_call.1} parent=5 // pred_check_branch
        %441 = sbr.rel (%p439) target = $region44
      $region43: #{tpu_custom_call.1} parent=5 // pred_region
        // Predicated region
        $region45: #{tpu_custom_call.1} parent=43 // pred_check
          %p442 = pneg %p68
        $region46: #{tpu_custom_call.1} parent=43 // pred_check_branch
          %444 = sbr.rel (%p442) target = $region48
        $region47: #{tpu_custom_call.1} parent=43 // pred_region
          %s445 = sand.u32 %s58, 1
          %s446 = scalar_lea.sflag [#allocation4], %s445
          %s447 = sand.u32 %s58, 1
          %s448 = smul.addr %s447, 128
          %s449 = scalar_lea.vmem [#allocation3], %s448
          %s451 = ssub.s32 2048, 2048
          %452 = vsyncadd %s446, %s451
          %s453 = smul.addr %s41, 32
          %s454 = sadd.s32 %s42, %s453
          %s455 = smul.addr %s454, 64
          %s456 = scalar_lea.hbm %s0, %s455
          %s457 = sshll.u32 %s449, 4
          %s458 = int_to_ptr.vmem [resolvable:$true] %s457
          %463 = dma.hbm_to_vmem [thread:$0]  %s456, 2048, %s458, %s446, 64, 64, 4
        $region48: #{tpu_custom_call.1} parent=43 // pred_fallthru
          _
      $region44: #{tpu_custom_call.1} parent=5 // pred_fallthru
        _
      %p464 = scmp.le.s32.totalorder 1, %s34
      %p465 = scmp.lt.s32.totalorder %s34, 3
      %p466 = pnand %p464, %p465
      %p467 = pneg %p466
      // Predicated region
      $region49: #{tpu_custom_call.1} parent=5 // pred_check
        _
      $region50: #{tpu_custom_call.1} parent=5 // pred_check_branch
        %469 = sbr.rel (%p466) target = $region52
      $region51: #{tpu_custom_call.1} parent=5 // pred_region
        %s470 = ssub.s32 %s34, 1
        %s471 = sand.u32 %s61, 1
        %s472 = scalar_lea.sflag [#allocation4], %s471
        %s473 = sand.u32 %s61, 1
        %s474 = smul.addr %s473, 128
        %s475 = scalar_lea.vmem [#allocation3], %s474
        // Predicated region
        $region53: #{tpu_custom_call.1} parent=51 // pred_check
          %p476 = pneg %p74
        $region54: #{tpu_custom_call.1} parent=51 // pred_check_branch
          %478 = sbr.rel (%p476) target = $region56
        $region55: #{tpu_custom_call.1} parent=51 // pred_region
          %479 = dma.done %s472, 2048
        $region56: #{tpu_custom_call.1} parent=51 // pred_fallthru
          _
        // Predicated region
        $region57: #{tpu_custom_call.1} parent=51 // pred_check
          %p480 = pneg %p95
        $region58: #{tpu_custom_call.1} parent=51 // pred_check_branch
          %482 = sbr.rel (%p480) target = $region60
        $region59: #{tpu_custom_call.1} parent=51 // pred_region
          %483 = dma.done [#allocation7], 1152
        $region60: #{tpu_custom_call.1} parent=51 // pred_fallthru
          _
        // Predicated region
        $region61: #{tpu_custom_call.1} parent=51 // pred_check
          %p484 = pneg %p121
        $region62: #{tpu_custom_call.1} parent=51 // pred_check_branch
          %486 = sbr.rel (%p484) target = $region64
        $region63: #{tpu_custom_call.1} parent=51 // pred_region
          %487 = dma.done [#allocation7], 256
        $region64: #{tpu_custom_call.1} parent=51 // pred_fallthru
          _
        // Predicated region
        $region65: #{tpu_custom_call.1} parent=51 // pred_check
          %p488 = pneg %p142
        $region66: #{tpu_custom_call.1} parent=51 // pred_check_branch
          %490 = sbr.rel (%p488) target = $region68
        $region67: #{tpu_custom_call.1} parent=51 // pred_region
          %491 = dma.done [#allocation10], 64
        $region68: #{tpu_custom_call.1} parent=51 // pred_fallthru
          _
        // Predicated region
        $region69: #{tpu_custom_call.1} parent=51 // pred_check
          %p492 = pneg %p163
        $region70: #{tpu_custom_call.1} parent=51 // pred_check_branch
          %494 = sbr.rel (%p492) target = $region72
        $region71: #{tpu_custom_call.1} parent=51 // pred_region
          %495 = dma.done [#allocation10], 4096
        $region72: #{tpu_custom_call.1} parent=51 // pred_fallthru
          _
        // Predicated region
        $region73: #{tpu_custom_call.1} parent=51 // pred_check
          %p496 = pneg %p184
        $region74: #{tpu_custom_call.1} parent=51 // pred_check_branch
          %498 = sbr.rel (%p496) target = $region76
        $region75: #{tpu_custom_call.1} parent=51 // pred_region
          %499 = dma.done [#allocation13], 4096
        $region76: #{tpu_custom_call.1} parent=51 // pred_fallthru
          _
        // Predicated region
        $region77: #{tpu_custom_call.1} parent=51 // pred_check
          %p500 = pneg %p205
        $region78: #{tpu_custom_call.1} parent=51 // pred_check_branch
          %502 = sbr.rel (%p500) target = $region80
        $region79: #{tpu_custom_call.1} parent=51 // pred_region
          %503 = dma.done [#allocation13], 4096
        $region80: #{tpu_custom_call.1} parent=51 // pred_fallthru
          _
        // Predicated region
        $region81: #{tpu_custom_call.1} parent=51 // pred_check
          %p504 = pneg %p226
        $region82: #{tpu_custom_call.1} parent=51 // pred_check_branch
          %506 = sbr.rel (%p504) target = $region84
        $region83: #{tpu_custom_call.1} parent=51 // pred_region
          %507 = dma.done [#allocation16], 4096
        $region84: #{tpu_custom_call.1} parent=51 // pred_fallthru
          _
        %s508 = sand.u32 %s61, 1
        %s509 = scalar_lea.sflag [#allocation4], %s508
        %s510 = sand.u32 %s61, 1
        %s511 = smul.addr %s510, 128
        %s512 = scalar_lea.vmem [#allocation3], %s511
        %p513 = pneg %p74
        %p514 = pneg %p71
        %p515 = pneg %p95
        %p516 = pneg %p92
        %p517 = pneg %p121
        %p518 = pneg %p118
        %p519 = pneg %p142
        %p520 = pneg %p139
        %p521 = pneg %p163
        %p522 = pneg %p160
        %p523 = pneg %p184
        %p524 = pneg %p181
        %p525 = pneg %p205
        %p526 = pneg %p202
        %p527 = pneg %p226
        %p528 = pneg %p223
        %p529 = pneg %p252
        %p530 = pneg %p249
        %s531 = sand.u32 %s239, 1
        %s532 = scalar_lea.sflag [#allocation5], %s531
        %s533 = sand.u32 %s239, 1
        %s534 = smul.addr %s533, 256
        %s535 = scalar_lea.vmem [#allocation17], %s534
        %p536 = pneg %p278
        %p537 = pneg %p275
        %s538 = sand.u32 %s39, 1
        %s539 = scalar_lea.sflag [#allocation19], %s538
        %s540 = sand.u32 %s265, 1
        %s541 = smul.addr %s540, 256
        %s542 = scalar_lea.vmem [#allocation18], %s541
        %p543 = pneg %p304
        %p544 = pneg %p301
        %s545 = sand.u32 %s39, 1
        %s546 = scalar_lea.sflag [#allocation19], %s545
        %s547 = sand.u32 %s291, 1
        %s548 = smul.addr %s547, 256
        %s549 = scalar_lea.vmem [#allocation20], %s548
        %p550 = pneg %p330
        %p551 = pneg %p327
        %s552 = sand.u32 %s317, 1
        %s553 = scalar_lea.sflag [#allocation22], %s552
        %s554 = sand.u32 %s317, 1
        %s555 = smul.addr %s554, 256
        %s556 = scalar_lea.vmem [#allocation21], %s555
        %p558 = scmp.eq.s32.totalorder %s44, 0
        // Predicated region
        $region85: #{tpu_custom_call.1} parent=51 // pred_check
          %p559 = pneg %p558
        $region86: #{tpu_custom_call.1} parent=51 // pred_check_branch
          %561 = sbr.rel (%p559) target = $region88
        $region87: #{tpu_custom_call.1} parent=51 // pred_region
          %vm562 = vcmask 64512
          %563 = vst.msk [vmem:[#allocation2] sm:$0xff] %vm562, 0.0
          %564 = vst.msk [vmem:[#allocation2 + $0x8] sm:$0xff] %vm562, 0.0
          %565 = vst.msk [vmem:[#allocation2 + $0x10] sm:$0xff] %vm562, 0.0
          %566 = vst.msk [vmem:[#allocation2 + $0x18] sm:$0xff] %vm562, 0.0
          %567 = vst.msk [vmem:[#allocation2 + $0x20] sm:$0xff] %vm562, 0.0
          %568 = vst.msk [vmem:[#allocation2 + $0x28] sm:$0xff] %vm562, 0.0
          %569 = vst.msk [vmem:[#allocation2 + $0x30] sm:$0xff] %vm562, 0.0
          %570 = vst.msk [vmem:[#allocation2 + $0x38] sm:$0xff] %vm562, 0.0
          %571 = vst.msk [vmem:[#allocation2 + $0x40] sm:$0xff] %vm562, 0.0
        $region88: #{tpu_custom_call.1} parent=51 // pred_fallthru
          _
        %v572 = vld [vmem:[%s475] sm:$0xf]
        %v573 = vld [vmem:[%s475 + $0x4] sm:$0xf]
        %v574 = vld [vmem:[%s475 + $0x8] sm:$0xf]
        %v575 = vld [vmem:[%s475 + $0xc] sm:$0xf]
        %v576 = vld [vmem:[%s475 + $0x10] sm:$0xf]
        %v577 = vld [vmem:[%s475 + $0x14] sm:$0xf]
        %v578 = vld [vmem:[%s475 + $0x18] sm:$0xf]
        %v579 = vld [vmem:[%s475 + $0x1c] sm:$0xf]
        %v580 = vld [vmem:[%s475 + $0x20] sm:$0xf]
        %v581 = vld [vmem:[%s475 + $0x24] sm:$0xf]
        %v582 = vld [vmem:[%s475 + $0x28] sm:$0xf]
        %v583 = vld [vmem:[%s475 + $0x2c] sm:$0xf]
        %v584 = vld [vmem:[%s475 + $0x30] sm:$0xf]
        %v585 = vld [vmem:[%s475 + $0x34] sm:$0xf]
        %v586 = vld [vmem:[%s475 + $0x38] sm:$0xf]
        %v587 = vld [vmem:[%s475 + $0x3c] sm:$0xf]
        %v588 = vld [vmem:[%s475 + $0x40] sm:$0xf]
        %v589 = vld [vmem:[%s475 + $0x44] sm:$0xf]
        %v590 = vld [vmem:[%s475 + $0x48] sm:$0xf]
        %v591 = vld [vmem:[%s475 + $0x4c] sm:$0xf]
        %v592 = vld [vmem:[%s475 + $0x50] sm:$0xf]
        %v593 = vld [vmem:[%s475 + $0x54] sm:$0xf]
        %v594 = vld [vmem:[%s475 + $0x58] sm:$0xf]
        %v595 = vld [vmem:[%s475 + $0x5c] sm:$0xf]
        %v596 = vld [vmem:[%s475 + $0x60] sm:$0xf]
        %v597 = vld [vmem:[%s475 + $0x64] sm:$0xf]
        %v598 = vld [vmem:[%s475 + $0x68] sm:$0xf]
        %v599 = vld [vmem:[%s475 + $0x6c] sm:$0xf]
        %v600 = vld [vmem:[%s475 + $0x70] sm:$0xf]
        %v601 = vld [vmem:[%s475 + $0x74] sm:$0xf]
        %v602 = vld [vmem:[%s475 + $0x78] sm:$0xf]
        %v603 = vld [vmem:[%s475 + $0x7c] sm:$0xf]
        %v604 = vld [vmem:[#allocation6] sm:$0xff]
        %v605 = vld [vmem:[#allocation6 + $0x8] sm:$0xff]
        %v606 = vld [vmem:[#allocation6 + $0x10] sm:$0xff]
        %v607 = vld [vmem:[#allocation6 + $0x18] sm:$0xff]
        %v608 = vld [vmem:[#allocation6 + $0x20] sm:$0xff]
        %v609 = vld [vmem:[#allocation6 + $0x28] sm:$0xff]
        %v610 = vld [vmem:[#allocation6 + $0x30] sm:$0xff]
        %v611 = vld [vmem:[#allocation6 + $0x38] sm:$0xff]
        %v612 = vld [vmem:[#allocation6 + $0x40] sm:$0xff]
        %v622 = vunpack.c.l.b16 %v604
        %v623 = vunpack.c.h.b16 %v604
        %v624 = vunpack.c.l.b16 %v605
        %v625 = vunpack.c.h.b16 %v605
        %v626 = vunpack.c.l.b16 %v606
        %v627 = vunpack.c.h.b16 %v606
        %v628 = vunpack.c.l.b16 %v607
        %v629 = vunpack.c.h.b16 %v607
        %v630 = vunpack.c.l.b16 %v608
        %v631 = vunpack.c.h.b16 %v608
        %v632 = vunpack.c.l.b16 %v609
        %v633 = vunpack.c.h.b16 %v609
        %v634 = vunpack.c.l.b16 %v610
        %v635 = vunpack.c.h.b16 %v610
        %v636 = vunpack.c.l.b16 %v611
        %v637 = vunpack.c.h.b16 %v611
        %v638 = vunpack.c.l.b16 %v612
        %v639 = vunpack.c.h.b16 %v612
        %v640 = vpack.c.b16 %v624, %v622
        %v641 = vpack.c.b16 %v625, %v623
        %v642 = vpack.c.b16 %v628, %v626
        %v643 = vpack.c.b16 %v629, %v627
        %v644 = vpack.c.b16 %v632, %v630
        %v645 = vpack.c.b16 %v633, %v631
        %v646 = vpack.c.b16 %v636, %v634
        %v647 = vpack.c.b16 %v637, %v635
        %v648 = vpack.c.b16 %v638, %v638
        %v649 = vpack.c.b16 %v639, %v639
        %v692 = vunpack.c.l.b16 %v572
        %v693 = vunpack.c.l.b16 %v573
        %v694 = vunpack.c.l.b16 %v574
        %v695 = vunpack.c.l.b16 %v575
        %v696 = vunpack.c.l.b16 %v576
        %v697 = vunpack.c.l.b16 %v577
        %v698 = vunpack.c.l.b16 %v578
        %v699 = vunpack.c.l.b16 %v579
        %v700 = vunpack.c.l.b16 %v580
        %v701 = vunpack.c.l.b16 %v581
        %v702 = vunpack.c.l.b16 %v582
        %v703 = vunpack.c.l.b16 %v583
        %v704 = vunpack.c.l.b16 %v584
        %v705 = vunpack.c.l.b16 %v585
        %v706 = vunpack.c.l.b16 %v586
        %v707 = vunpack.c.l.b16 %v587
        %v708 = vunpack.c.l.b16 %v588
        %v709 = vunpack.c.l.b16 %v589
        %v710 = vunpack.c.l.b16 %v590
        %v711 = vunpack.c.l.b16 %v591
        %v712 = vunpack.c.l.b16 %v592
        %v713 = vunpack.c.l.b16 %v593
        %v714 = vunpack.c.l.b16 %v594
        %v715 = vunpack.c.l.b16 %v595
        %v716 = vunpack.c.l.b16 %v596
        %v717 = vunpack.c.l.b16 %v597
        %v718 = vunpack.c.l.b16 %v598
        %v719 = vunpack.c.l.b16 %v599
        %v720 = vunpack.c.l.b16 %v600
        %v721 = vunpack.c.l.b16 %v601
        %v722 = vunpack.c.l.b16 %v602
        %v723 = vunpack.c.l.b16 %v603
        %v724 = vpack.c.b16 %v693, %v692
        %v725 = vpack.c.b16 %v695, %v694
        %v726 = vpack.c.b16 %v697, %v696
        %v727 = vpack.c.b16 %v699, %v698
        %v728 = vpack.c.b16 %v701, %v700
        %v729 = vpack.c.b16 %v703, %v702
        %v730 = vpack.c.b16 %v705, %v704
        %v731 = vpack.c.b16 %v707, %v706
        %v732 = vpack.c.b16 %v709, %v708
        %v733 = vpack.c.b16 %v711, %v710
        %v734 = vpack.c.b16 %v713, %v712
        %v735 = vpack.c.b16 %v715, %v714
        %v736 = vpack.c.b16 %v717, %v716
        %v737 = vpack.c.b16 %v719, %v718
        %v738 = vpack.c.b16 %v721, %v720
        %v739 = vpack.c.b16 %v723, %v722
        %756 = vmatprep.subr.bf16.mxu0 0
        %757 = vmatpush1.bf16.msra.mxu0 %v724
        %758 = vmatprep.subr.bf16.mxu0 0
        %759 = vmatpush1.bf16.msra.mxu0 %v725
        %760 = vmatprep.subr.bf16.mxu0 0
        %761 = vmatpush1.bf16.msra.mxu0 %v726
        %762 = vmatprep.subr.bf16.mxu0 0
        %763 = vmatpush1.bf16.msra.mxu0 %v727
        %764 = vmatprep.subr.bf16.mxu0 0
        %765 = vmatpush1.bf16.msra.mxu0 %v728
        %766 = vmatprep.subr.bf16.mxu0 0
        %767 = vmatpush1.bf16.msra.mxu0 %v729
        %768 = vmatprep.subr.bf16.mxu0 0
        %769 = vmatpush1.bf16.msra.mxu0 %v730
        %770 = vmatprep.subr.bf16.mxu0 0
        %771 = vmatpush1.bf16.msra.mxu0 %v731
        %772 = vmatprep.subr.bf16.mxu0 0
        %773 = vmatpush1.bf16.msra.mxu0 %v732
        %774 = vmatprep.subr.bf16.mxu0 0
        %775 = vmatpush1.bf16.msra.mxu0 %v733
        %776 = vmatprep.subr.bf16.mxu0 0
        %777 = vmatpush1.bf16.msra.mxu0 %v734
        %778 = vmatprep.subr.bf16.mxu0 0
        %779 = vmatpush1.bf16.msra.mxu0 %v735
        %780 = vmatprep.subr.bf16.mxu0 0
        %781 = vmatpush1.bf16.msra.mxu0 %v736
        %782 = vmatprep.subr.bf16.mxu0 0
        %783 = vmatpush1.bf16.msra.mxu0 %v737
        %784 = vmatprep.subr.bf16.mxu0 0
        %785 = vmatpush1.bf16.msra.mxu0 %v738
        %786 = vmatprep.subr.bf16.mxu0 0
        %787 = vmatpush1.bf16.msra.mxu0 %v739
        %788 = vmatprep.mubr.bf16.mxu0 %v641
        %789 = vmatmul.mubr.bf16.gmra.mrb[0].mxu0 %v640
        %v790 = vpop.f32.mrb[0].mxu0
        %v791 = vadd.f32 0.0, %v790
        %v792 = vpop.f32.mrb[0].mxu0
        %v793 = vpop.f32.mrb[0].mxu0
        %v794 = vadd.f32 0.0, %v793
        %v795 = vpop.f32.mrb[0].mxu0
        %796 = vmatprep.mubr.bf16.mxu0 %v643
        %797 = vmatmul.mubr.bf16.gmra.mrb[0].mxu0 %v642
        %v798 = vpop.f32.mrb[0].mxu0
        %v799 = vadd.f32 0.0, %v798
        %v800 = vpop.f32.mrb[0].mxu0
        %v801 = vpop.f32.mrb[0].mxu0
        %v802 = vadd.f32 0.0, %v801
        %v803 = vpop.f32.mrb[0].mxu0
        %804 = vmatprep.mubr.bf16.mxu0 %v645
        %805 = vmatmul.mubr.bf16.gmra.mrb[0].mxu0 %v644
        %v806 = vpop.f32.mrb[0].mxu0
        %v807 = vadd.f32 0.0, %v806
        %v808 = vpop.f32.mrb[0].mxu0
        %v809 = vpop.f32.mrb[0].mxu0
        %v810 = vadd.f32 0.0, %v809
        %v811 = vpop.f32.mrb[0].mxu0
        %812 = vmatprep.mubr.bf16.mxu0 %v647
        %813 = vmatmul.mubr.bf16.gmra.mrb[0].mxu0 %v646
        %v814 = vpop.f32.mrb[0].mxu0
        %v815 = vadd.f32 0.0, %v814
        %v816 = vpop.f32.mrb[0].mxu0
        %v817 = vpop.f32.mrb[0].mxu0
        %v818 = vadd.f32 0.0, %v817
        %v819 = vpop.f32.mrb[0].mxu0
        %820 = vmatprep.mubr.bf16.mxu0 %v649
        %821 = vmatmul.mubr.bf16.gmra.mrb[0].mxu0 %v648
        %v822 = vpop.f32.mrb[0].mxu0
        %v823 = vadd.f32 0.0, %v822
        %v824 = vpop.f32.mrb[0].mxu0
        %v825 = vpop.f32.mrb[0].mxu0
        %v826 = vpop.f32.mrb[0].mxu0
        %827 = vdwg.mxu0
        %v828 = vld [vmem:[#allocation2] sm:$0xff]
        %v829 = vld [vmem:[#allocation8] sm:$0xf]
        %vm830 = vcmask 31744
        %v832 = vsel %vm830, %v791, 0
        %vm834 = vcmask 1043456
        %v836 = vsel %vm834, %v829, 0
        %838 = vmatprep.subr.mxu0 0.0
        %839 = vmatpush1.msra.mxu0 %v836
        %840 = vmatprep.subr.mxu0 0.0
        %841 = vmatpush1.msra.mxu0 0.0
        %842 = vmatprep.subr.mxu0 0.0
        %843 = vmatpush1.msra.mxu0 0.0
        %844 = vmatprep.subr.mxu0 0.0
        %845 = vmatpush1.msra.mxu0 0.0
        %846 = vmatprep.subr.mxu0 0.0
        %847 = vmatpush1.msra.mxu0 0.0
        %848 = vmatprep.subr.mxu0 0.0
        %849 = vmatpush1.msra.mxu0 0.0
        %850 = vmatprep.subr.mxu0 0.0
        %851 = vmatpush1.msra.mxu0 0.0
        %852 = vmatprep.subr.mxu0 0.0
        %853 = vmatpush1.msra.mxu0 0.0
        %854 = vmatprep.subr.mxu0 0.0
        %855 = vmatpush1.msra.mxu0 0.0
        %856 = vmatprep.subr.mxu0 0.0
        %857 = vmatpush1.msra.mxu0 0.0
        %858 = vmatprep.subr.mxu0 0.0
        %859 = vmatpush1.msra.mxu0 0.0
        %860 = vmatprep.subr.mxu0 0.0
        %861 = vmatpush1.msra.mxu0 0.0
        %862 = vmatprep.subr.mxu0 0.0
        %863 = vmatpush1.msra.mxu0 0.0
        %864 = vmatprep.subr.mxu0 0.0
        %865 = vmatpush1.msra.mxu0 0.0
        %866 = vmatprep.subr.mxu0 0.0
        %867 = vmatpush1.msra.mxu0 0.0
        %868 = vmatprep.subr.mxu0 0.0
        %869 = vmatpush1.msra.mxu0 0.0
        %870 = vmatprep.subr.mxu0 0.0
        %871 = vmatpush1.msra.mxu0 0.0
        %872 = vmatprep.subr.mxu0 0.0
        %873 = vmatpush1.msra.mxu0 0.0
        %874 = vmatprep.subr.mxu0 0.0
        %875 = vmatpush1.msra.mxu0 0.0
        %876 = vmatprep.subr.mxu0 0.0
        %877 = vmatpush1.msra.mxu0 0.0
        %878 = vmatprep.subr.mxu0 0.0
        %879 = vmatpush1.msra.mxu0 0.0
        %880 = vmatprep.subr.mxu0 0.0
        %881 = vmatpush1.msra.mxu0 0.0
        %882 = vmatprep.subr.mxu0 0.0
        %883 = vmatpush1.msra.mxu0 0.0
        %884 = vmatprep.subr.mxu0 0.0
        %885 = vmatpush1.msra.mxu0 0.0
        %886 = vmatprep.subr.mxu0 0.0
        %887 = vmatpush1.msra.mxu0 0.0
        %888 = vmatprep.subr.mxu0 0.0
        %889 = vmatpush1.msra.mxu0 0.0
        %890 = vmatprep.subr.mxu0 0.0
        %891 = vmatpush1.msra.mxu0 0.0
        %892 = vmatprep.subr.mxu0 0.0
        %893 = vmatpush1.msra.mxu0 0.0
        %894 = vmatprep.subr.mxu0 0.0
        %895 = vmatpush1.msra.mxu0 0.0
        %896 = vmatprep.subr.mxu0 0.0
        %897 = vmatpush1.msra.mxu0 0.0
        %898 = vmatprep.subr.mxu0 0.0
        %899 = vmatpush1.msra.mxu0 0.0
        %900 = vmatprep.subr.mxu0 0.0
        %901 = vmatpush1.msra.mxu0 0.0
        %902 = vmatprep.mubr.f32.mxu0 0.0
        %903 = vmatmul.mubr.f32.gmra.mrb[0].mxu0 %v832
        %v904 = vpop.f32.mrb[0].mxu0
        %v905 = vadd.f32 0.0, %v904
        %v906 = vpop.f32.mrb[0].mxu0
        %907 = vdwg.mxu0
        %v908 = vadd.f32 %v828, %v905
        %vm909 = vcmask 64512
        %910 = vst.msk [vmem:[#allocation2] sm:$0xff] %vm909, %v908
        %v911 = vld [vmem:[#allocation2 + $0x8] sm:$0xff]
        %s912 = scalar_lea.vmem [#allocation8], 4
        %v913 = vld [vmem:[%s912] sm:$0xf]
        %v915 = vsel %vm830, %v794, 0
        %v918 = vsel %vm834, %v913, 0
        %920 = vmatprep.subr.mxu0 0.0
        %921 = vmatpush1.msra.mxu0 %v918
        %922 = vmatprep.subr.mxu0 0.0
        %923 = vmatpush1.msra.mxu0 0.0
        %924 = vmatprep.subr.mxu0 0.0
        %925 = vmatpush1.msra.mxu0 0.0
        %926 = vmatprep.subr.mxu0 0.0
        %927 = vmatpush1.msra.mxu0 0.0
        %928 = vmatprep.subr.mxu0 0.0
        %929 = vmatpush1.msra.mxu0 0.0
        %930 = vmatprep.subr.mxu0 0.0
        %931 = vmatpush1.msra.mxu0 0.0
        %932 = vmatprep.subr.mxu0 0.0
        %933 = vmatpush1.msra.mxu0 0.0
        %934 = vmatprep.subr.mxu0 0.0
        %935 = vmatpush1.msra.mxu0 0.0
        %936 = vmatprep.subr.mxu0 0.0
        %937 = vmatpush1.msra.mxu0 0.0
        %938 = vmatprep.subr.mxu0 0.0
        %939 = vmatpush1.msra.mxu0 0.0
        %940 = vmatprep.subr.mxu0 0.0
        %941 = vmatpush1.msra.mxu0 0.0
        %942 = vmatprep.subr.mxu0 0.0
        %943 = vmatpush1.msra.mxu0 0.0
        %944 = vmatprep.subr.mxu0 0.0
        %945 = vmatpush1.msra.mxu0 0.0
        %946 = vmatprep.subr.mxu0 0.0
        %947 = vmatpush1.msra.mxu0 0.0
        %948 = vmatprep.subr.mxu0 0.0
        %949 = vmatpush1.msra.mxu0 0.0
        %950 = vmatprep.subr.mxu0 0.0
        %951 = vmatpush1.msra.mxu0 0.0
        %952 = vmatprep.subr.mxu0 0.0
        %953 = vmatpush1.msra.mxu0 0.0
        %954 = vmatprep.subr.mxu0 0.0
        %955 = vmatpush1.msra.mxu0 0.0
        %956 = vmatprep.subr.mxu0 0.0
        %957 = vmatpush1.msra.mxu0 0.0
        %958 = vmatprep.subr.mxu0 0.0
        %959 = vmatpush1.msra.mxu0 0.0
        %960 = vmatprep.subr.mxu0 0.0
        %961 = vmatpush1.msra.mxu0 0.0
        %962 = vmatprep.subr.mxu0 0.0
        %963 = vmatpush1.msra.mxu0 0.0
        %964 = vmatprep.subr.mxu0 0.0
        %965 = vmatpush1.msra.mxu0 0.0
        %966 = vmatprep.subr.mxu0 0.0
        %967 = vmatpush1.msra.mxu0 0.0
        %968 = vmatprep.subr.mxu0 0.0
        %969 = vmatpush1.msra.mxu0 0.0
        %970 = vmatprep.subr.mxu0 0.0
        %971 = vmatpush1.msra.mxu0 0.0
        %972 = vmatprep.subr.mxu0 0.0
        %973 = vmatpush1.msra.mxu0 0.0
        %974 = vmatprep.subr.mxu0 0.0
        %975 = vmatpush1.msra.mxu0 0.0
        %976 = vmatprep.subr.mxu0 0.0
        %977 = vmatpush1.msra.mxu0 0.0
        %978 = vmatprep.subr.mxu0 0.0
        %979 = vmatpush1.msra.mxu0 0.0
        %980 = vmatprep.subr.mxu0 0.0
        %981 = vmatpush1.msra.mxu0 0.0
        %982 = vmatprep.subr.mxu0 0.0
        %983 = vmatpush1.msra.mxu0 0.0
        %984 = vmatprep.mubr.f32.mxu0 0.0
        %985 = vmatmul.mubr.f32.gmra.mrb[0].mxu0 %v915
        %v986 = vpop.f32.mrb[0].mxu0
        %v987 = vadd.f32 0.0, %v986
        %v988 = vpop.f32.mrb[0].mxu0
        %989 = vdwg.mxu0
        %v990 = vadd.f32 %v911, %v987
        %991 = vst.msk [vmem:[#allocation2 + $0x8] sm:$0xff] %vm909, %v990
        %v992 = vld [vmem:[#allocation2 + $0x10] sm:$0xff]
        %v993 = vld [vmem:[#allocation2 + $0x18] sm:$0xff]
        %s994 = scalar_lea.vmem [#allocation8], 8
        %v995 = vld [vmem:[%s994] sm:$0xf]
        %v997 = vsel %vm830, %v799, 0
        %v1000 = vsel %vm830, %v802, 0
        %v1003 = vsel %vm834, %v995, 0
        %1005 = vmatprep.subr.mxu0 0.0
        %1006 = vmatpush1.msra.mxu0 %v1003
        %1007 = vmatprep.subr.mxu0 0.0
        %1008 = vmatpush1.msra.mxu0 0.0
        %1009 = vmatprep.subr.mxu0 0.0
        %1010 = vmatpush1.msra.mxu0 0.0
        %1011 = vmatprep.subr.mxu0 0.0
        %1012 = vmatpush1.msra.mxu0 0.0
        %1013 = vmatprep.subr.mxu0 0.0
        %1014 = vmatpush1.msra.mxu0 0.0
        %1015 = vmatprep.subr.mxu0 0.0
        %1016 = vmatpush1.msra.mxu0 0.0
        %1017 = vmatprep.subr.mxu0 0.0
        %1018 = vmatpush1.msra.mxu0 0.0
        %1019 = vmatprep.subr.mxu0 0.0
        %1020 = vmatpush1.msra.mxu0 0.0
        %1021 = vmatprep.subr.mxu0 0.0
        %1022 = vmatpush1.msra.mxu0 0.0
        %1023 = vmatprep.subr.mxu0 0.0
        %1024 = vmatpush1.msra.mxu0 0.0
        %1025 = vmatprep.subr.mxu0 0.0
        %1026 = vmatpush1.msra.mxu0 0.0
        %1027 = vmatprep.subr.mxu0 0.0
        %1028 = vmatpush1.msra.mxu0 0.0
        %1029 = vmatprep.subr.mxu0 0.0
        %1030 = vmatpush1.msra.mxu0 0.0
        %1031 = vmatprep.subr.mxu0 0.0
        %1032 = vmatpush1.msra.mxu0 0.0
        %1033 = vmatprep.subr.mxu0 0.0
        %1034 = vmatpush1.msra.mxu0 0.0
        %1035 = vmatprep.subr.mxu0 0.0
        %1036 = vmatpush1.msra.mxu0 0.0
        %1037 = vmatprep.subr.mxu0 0.0
        %1038 = vmatpush1.msra.mxu0 0.0
        %1039 = vmatprep.subr.mxu0 0.0
        %1040 = vmatpush1.msra.mxu0 0.0
        %1041 = vmatprep.subr.mxu0 0.0
        %1042 = vmatpush1.msra.mxu0 0.0
        %1043 = vmatprep.subr.mxu0 0.0
        %1044 = vmatpush1.msra.mxu0 0.0
        %1045 = vmatprep.subr.mxu0 0.0
        %1046 = vmatpush1.msra.mxu0 0.0
        %1047 = vmatprep.subr.mxu0 0.0
        %1048 = vmatpush1.msra.mxu0 0.0
        %1049 = vmatprep.subr.mxu0 0.0
        %1050 = vmatpush1.msra.mxu0 0.0
        %1051 = vmatprep.subr.mxu0 0.0
        %1052 = vmatpush1.msra.mxu0 0.0
        %1053 = vmatprep.subr.mxu0 0.0
        %1054 = vmatpush1.msra.mxu0 0.0
        %1055 = vmatprep.subr.mxu0 0.0
        %1056 = vmatpush1.msra.mxu0 0.0
        %1057 = vmatprep.subr.mxu0 0.0
        %1058 = vmatpush1.msra.mxu0 0.0
        %1059 = vmatprep.subr.mxu0 0.0
        %1060 = vmatpush1.msra.mxu0 0.0
        %1061 = vmatprep.subr.mxu0 0.0
        %1062 = vmatpush1.msra.mxu0 0.0
        %1063 = vmatprep.subr.mxu0 0.0
        %1064 = vmatpush1.msra.mxu0 0.0
        %1065 = vmatprep.subr.mxu0 0.0
        %1066 = vmatpush1.msra.mxu0 0.0
        %1067 = vmatprep.subr.mxu0 0.0
        %1068 = vmatpush1.msra.mxu0 0.0
        %1069 = vmatprep.mubr.f32.mxu0 0.0
        %1070 = vmatmul.mubr.f32.gmra.mrb[0].mxu0 %v997
        %v1071 = vpop.f32.mrb[0].mxu0
        %v1072 = vadd.f32 0.0, %v1071
        %v1073 = vpop.f32.mrb[0].mxu0
        %1074 = vmatprep.mubr.f32.mxu0 0.0
        %1075 = vmatmul.mubr.f32.gmra.mrb[0].mxu0 %v1000
        %v1076 = vpop.f32.mrb[0].mxu0
        %v1077 = vadd.f32 0.0, %v1076
        %v1078 = vpop.f32.mrb[0].mxu0
        %1079 = vdwg.mxu0
        %v1080 = vadd.f32 %v992, %v1072
        %v1081 = vadd.f32 %v993, %v1077
        %1082 = vst.msk [vmem:[#allocation2 + $0x10] sm:$0xff] %vm909, %v1080
        %1083 = vst.msk [vmem:[#allocation2 + $0x18] sm:$0xff] %vm909, %v1081
        %v1084 = vld [vmem:[#allocation2 + $0x20] sm:$0xff]
        %v1085 = vld [vmem:[#allocation2 + $0x28] sm:$0xff]
        %v1086 = vld [vmem:[#allocation2 + $0x30] sm:$0xff]
        %v1087 = vld [vmem:[#allocation2 + $0x38] sm:$0xff]
        %v1088 = vld [vmem:[#allocation2 + $0x40] sm:$0xff]
        %s1089 = scalar_lea.vmem [#allocation8], 12
        %v1090 = vld [vmem:[%s1089] sm:$0xf]
        %v1092 = vsel %vm830, %v807, 0
        %v1095 = vsel %vm830, %v810, 0
        %v1098 = vsel %vm830, %v815, 0
        %v1101 = vsel %vm830, %v818, 0
        %v1104 = vsel %vm830, %v823, 0
        %v1107 = vsel %vm834, %v1090, 0
        %1109 = vmatprep.subr.mxu0 0.0
        %1110 = vmatpush1.msra.mxu0 %v1107
        %1111 = vmatprep.subr.mxu0 0.0
        %1112 = vmatpush1.msra.mxu0 0.0
        %1113 = vmatprep.subr.mxu0 0.0
        %1114 = vmatpush1.msra.mxu0 0.0
        %1115 = vmatprep.subr.mxu0 0.0
        %1116 = vmatpush1.msra.mxu0 0.0
        %1117 = vmatprep.subr.mxu0 0.0
        %1118 = vmatpush1.msra.mxu0 0.0
        %1119 = vmatprep.subr.mxu0 0.0
        %1120 = vmatpush1.msra.mxu0 0.0
        %1121 = vmatprep.subr.mxu0 0.0
        %1122 = vmatpush1.msra.mxu0 0.0
        %1123 = vmatprep.subr.mxu0 0.0
        %1124 = vmatpush1.msra.mxu0 0.0
        %1125 = vmatprep.subr.mxu0 0.0
        %1126 = vmatpush1.msra.mxu0 0.0
        %1127 = vmatprep.subr.mxu0 0.0
        %1128 = vmatpush1.msra.mxu0 0.0
        %1129 = vmatprep.subr.mxu0 0.0
        %1130 = vmatpush1.msra.mxu0 0.0
        %1131 = vmatprep.subr.mxu0 0.0
        %1132 = vmatpush1.msra.mxu0 0.0
        %1133 = vmatprep.subr.mxu0 0.0
        %1134 = vmatpush1.msra.mxu0 0.0
        %1135 = vmatprep.subr.mxu0 0.0
        %1136 = vmatpush1.msra.mxu0 0.0
        %1137 = vmatprep.subr.mxu0 0.0
        %1138 = vmatpush1.msra.mxu0 0.0
        %1139 = vmatprep.subr.mxu0 0.0
        %1140 = vmatpush1.msra.mxu0 0.0
        %1141 = vmatprep.subr.mxu0 0.0
        %1142 = vmatpush1.msra.mxu0 0.0
        %1143 = vmatprep.subr.mxu0 0.0
        %1144 = vmatpush1.msra.mxu0 0.0
        %1145 = vmatprep.subr.mxu0 0.0
        %1146 = vmatpush1.msra.mxu0 0.0
        %1147 = vmatprep.subr.mxu0 0.0
        %1148 = vmatpush1.msra.mxu0 0.0
        %1149 = vmatprep.subr.mxu0 0.0
        %1150 = vmatpush1.msra.mxu0 0.0
        %1151 = vmatprep.subr.mxu0 0.0
        %1152 = vmatpush1.msra.mxu0 0.0
        %1153 = vmatprep.subr.mxu0 0.0
        %1154 = vmatpush1.msra.mxu0 0.0
        %1155 = vmatprep.subr.mxu0 0.0
        %1156 = vmatpush1.msra.mxu0 0.0
        %1157 = vmatprep.subr.mxu0 0.0
        %1158 = vmatpush1.msra.mxu0 0.0
        %1159 = vmatprep.subr.mxu0 0.0
        %1160 = vmatpush1.msra.mxu0 0.0
        %1161 = vmatprep.subr.mxu0 0.0
        %1162 = vmatpush1.msra.mxu0 0.0
        %1163 = vmatprep.subr.mxu0 0.0
        %1164 = vmatpush1.msra.mxu0 0.0
        %1165 = vmatprep.subr.mxu0 0.0
        %1166 = vmatpush1.msra.mxu0 0.0
        %1167 = vmatprep.subr.mxu0 0.0
        %1168 = vmatpush1.msra.mxu0 0.0
        %1169 = vmatprep.subr.mxu0 0.0
        %1170 = vmatpush1.msra.mxu0 0.0
        %1171 = vmatprep.subr.mxu0 0.0
        %1172 = vmatpush1.msra.mxu0 0.0
        %1173 = vmatprep.mubr.f32.mxu0 0.0
        %1174 = vmatmul.mubr.f32.gmra.mrb[0].mxu0 %v1092
        %v1175 = vpop.f32.mrb[0].mxu0
        %v1176 = vadd.f32 0.0, %v1175
        %v1177 = vpop.f32.mrb[0].mxu0
        %1178 = vmatprep.mubr.f32.mxu0 0.0
        %1179 = vmatmul.mubr.f32.gmra.mrb[0].mxu0 %v1095
        %v1180 = vpop.f32.mrb[0].mxu0
        %v1181 = vadd.f32 0.0, %v1180
        %v1182 = vpop.f32.mrb[0].mxu0
        %1183 = vmatprep.mubr.f32.mxu0 0.0
        %1184 = vmatmul.mubr.f32.gmra.mrb[0].mxu0 %v1098
        %v1185 = vpop.f32.mrb[0].mxu0
        %v1186 = vadd.f32 0.0, %v1185
        %v1187 = vpop.f32.mrb[0].mxu0
        %1188 = vmatprep.mubr.f32.mxu0 0.0
        %1189 = vmatmul.mubr.f32.gmra.mrb[0].mxu0 %v1101
        %v1190 = vpop.f32.mrb[0].mxu0
        %v1191 = vadd.f32 0.0, %v1190
        %v1192 = vpop.f32.mrb[0].mxu0
        %1193 = vmatprep.mubr.f32.mxu0 0.0
        %1194 = vmatmul.mubr.f32.gmra.mrb[0].mxu0 %v1104
        %v1195 = vpop.f32.mrb[0].mxu0
        %v1196 = vadd.f32 0.0, %v1195
        %v1197 = vpop.f32.mrb[0].mxu0
        %1198 = vdwg.mxu0
        %v1199 = vadd.f32 %v1084, %v1176
        %v1200 = vadd.f32 %v1085, %v1181
        %v1201 = vadd.f32 %v1086, %v1186
        %v1202 = vadd.f32 %v1087, %v1191
        %v1203 = vadd.f32 %v1088, %v1196
        %1204 = vst.msk [vmem:[#allocation2 + $0x20] sm:$0xff] %vm909, %v1199
        %1205 = vst.msk [vmem:[#allocation2 + $0x28] sm:$0xff] %vm909, %v1200
        %1206 = vst.msk [vmem:[#allocation2 + $0x30] sm:$0xff] %vm909, %v1201
        %1207 = vst.msk [vmem:[#allocation2 + $0x38] sm:$0xff] %vm909, %v1202
        %1208 = vst.msk [vmem:[#allocation2 + $0x40] sm:$0xff] %vm909, %v1203
        // Predicated region
        $region89: #{tpu_custom_call.1} parent=51 // pred_check
          %p1209 = pneg %p558
        $region90: #{tpu_custom_call.1} parent=51 // pred_check_branch
          %1211 = sbr.rel (%p1209) target = $region92
        $region91: #{tpu_custom_call.1} parent=51 // pred_region
          %v1212 = vld [vmem:[#allocation2] sm:$0xff]
          %v1213 = vld [vmem:[#allocation9] sm:$0x1]
          %v1215 = vlaneseq
          %v1216 = vshrl.u32 %v1215, 7
          %v1217 = vsub.s32 0, %v1216
          %v1218 = vrot.slane %v1213, %v1217
          %v1220 = vadd.f32 %v1212, %v1218
          %v1221 = vmax.f32 %v1220, 0.0
          %v1222 = vld [vmem:[#allocation11] sm:$0xff]
          %v1223 = vld [vmem:[#allocation11 + $0x8] sm:$0xff]
          %v1224 = vld [vmem:[#allocation11 + $0x10] sm:$0xff]
          %v1225 = vld [vmem:[#allocation11 + $0x18] sm:$0xff]
          %v1226 = vld [vmem:[#allocation11 + $0x20] sm:$0xff]
          %v1227 = vld [vmem:[#allocation11 + $0x28] sm:$0xff]
          %v1228 = vld [vmem:[#allocation11 + $0x30] sm:$0xff]
          %v1229 = vld [vmem:[#allocation11 + $0x38] sm:$0xff]
          %v1230 = vld [vmem:[#allocation11 + $0x40] sm:$0xff]
          %v1231 = vld [vmem:[#allocation11 + $0x48] sm:$0xff]
          %v1232 = vld [vmem:[#allocation11 + $0x50] sm:$0xff]
          %v1233 = vld [vmem:[#allocation11 + $0x58] sm:$0xff]
          %v1234 = vld [vmem:[#allocation11 + $0x60] sm:$0xff]
          %v1235 = vld [vmem:[#allocation11 + $0x68] sm:$0xff]
          %v1236 = vld [vmem:[#allocation11 + $0x70] sm:$0xff]
          %v1237 = vld [vmem:[#allocation11 + $0x78] sm:$0xff]
          %v1238 = vld [vmem:[#allocation11 + $0x80] sm:$0xff]
          %v1239 = vld [vmem:[#allocation11 + $0x88] sm:$0xff]
          %v1240 = vld [vmem:[#allocation11 + $0x90] sm:$0xff]
          %v1241 = vld [vmem:[#allocation11 + $0x98] sm:$0xff]
          %v1242 = vld [vmem:[#allocation11 + $0xa0] sm:$0xff]
          %v1243 = vld [vmem:[#allocation11 + $0xa8] sm:$0xff]
          %v1244 = vld [vmem:[#allocation11 + $0xb0] sm:$0xff]
          %v1245 = vld [vmem:[#allocation11 + $0xb8] sm:$0xff]
          %v1246 = vld [vmem:[#allocation11 + $0xc0] sm:$0xff]
          %v1247 = vld [vmem:[#allocation11 + $0xc8] sm:$0xff]
          %v1248 = vld [vmem:[#allocation11 + $0xd0] sm:$0xff]
          %v1249 = vld [vmem:[#allocation11 + $0xd8] sm:$0xff]
          %v1250 = vld [vmem:[#allocation11 + $0xe0] sm:$0xff]
          %v1251 = vld [vmem:[#allocation11 + $0xe8] sm:$0xff]
          %v1252 = vld [vmem:[#allocation11 + $0xf0] sm:$0xff]
          %v1253 = vld [vmem:[#allocation11 + $0xf8] sm:$0xff]
          %v1255 = vsel %vm909, %v1222, 0
          %v1258 = vsel %vm909, %v1223, 0
          %v1261 = vsel %vm909, %v1224, 0
          %v1264 = vsel %vm909, %v1225, 0
          %v1267 = vsel %vm909, %v1226, 0
          %v1270 = vsel %vm909, %v1227, 0
          %v1273 = vsel %vm909, %v1228, 0
          %v1276 = vsel %vm909, %v1229, 0
          %v1279 = vsel %vm909, %v1230, 0
          %v1282 = vsel %vm909, %v1231, 0
          %v1285 = vsel %vm909, %v1232, 0
          %v1288 = vsel %vm909, %v1233, 0
          %v1291 = vsel %vm909, %v1234, 0
          %v1294 = vsel %vm909, %v1235, 0
          %v1297 = vsel %vm909, %v1236, 0
          %v1300 = vsel %vm909, %v1237, 0
          %v1303 = vsel %vm909, %v1238, 0
          %v1306 = vsel %vm909, %v1239, 0
          %v1309 = vsel %vm909, %v1240, 0
          %v1312 = vsel %vm909, %v1241, 0
          %v1315 = vsel %vm909, %v1242, 0
          %v1318 = vsel %vm909, %v1243, 0
          %v1321 = vsel %vm909, %v1244, 0
          %v1324 = vsel %vm909, %v1245, 0
          %v1327 = vsel %vm909, %v1246, 0
          %v1330 = vsel %vm909, %v1247, 0
          %v1333 = vsel %vm909, %v1248, 0
          %v1336 = vsel %vm909, %v1249, 0
          %v1339 = vsel %vm909, %v1250, 0
          %v1342 = vsel %vm909, %v1251, 0
          %v1345 = vsel %vm909, %v1252, 0
          %v1348 = vsel %vm909, %v1253, 0
          %1350 = vmatprep.subr.mxu0 0.0
          %1351 = vmatpush1.msra.mxu0 %v1221
          %1352 = vmatprep.subr.mxu0 0.0
          %1353 = vmatpush1.msra.mxu0 0.0
          %1354 = vmatprep.subr.mxu0 0.0
          %1355 = vmatpush1.msra.mxu0 0.0
          %1356 = vmatprep.subr.mxu0 0.0
          %1357 = vmatpush1.msra.mxu0 0.0
          %1358 = vmatprep.subr.mxu0 0.0
          %1359 = vmatpush1.msra.mxu0 0.0
          %1360 = vmatprep.subr.mxu0 0.0
          %1361 = vmatpush1.msra.mxu0 0.0
          %1362 = vmatprep.subr.mxu0 0.0
          %1363 = vmatpush1.msra.mxu0 0.0
          %1364 = vmatprep.subr.mxu0 0.0
          %1365 = vmatpush1.msra.mxu0 0.0
          %1366 = vmatprep.subr.mxu0 0.0
          %1367 = vmatpush1.msra.mxu0 0.0
          %1368 = vmatprep.subr.mxu0 0.0
          %1369 = vmatpush1.msra.mxu0 0.0
          %1370 = vmatprep.subr.mxu0 0.0
          %1371 = vmatpush1.msra.mxu0 0.0
          %1372 = vmatprep.subr.mxu0 0.0
          %1373 = vmatpush1.msra.mxu0 0.0
          %1374 = vmatprep.subr.mxu0 0.0
          %1375 = vmatpush1.msra.mxu0 0.0
          %1376 = vmatprep.subr.mxu0 0.0
          %1377 = vmatpush1.msra.mxu0 0.0
          %1378 = vmatprep.subr.mxu0 0.0
          %1379 = vmatpush1.msra.mxu0 0.0
          %1380 = vmatprep.subr.mxu0 0.0
          %1381 = vmatpush1.msra.mxu0 0.0
          %1382 = vmatprep.subr.mxu0 0.0
          %1383 = vmatpush1.msra.mxu0 0.0
          %1384 = vmatprep.subr.mxu0 0.0
          %1385 = vmatpush1.msra.mxu0 0.0
          %1386 = vmatprep.subr.mxu0 0.0
          %1387 = vmatpush1.msra.mxu0 0.0
          %1388 = vmatprep.subr.mxu0 0.0
          %1389 = vmatpush1.msra.mxu0 0.0
          %1390 = vmatprep.subr.mxu0 0.0
          %1391 = vmatpush1.msra.mxu0 0.0
          %1392 = vmatprep.subr.mxu0 0.0
          %1393 = vmatpush1.msra.mxu0 0.0
          %1394 = vmatprep.subr.mxu0 0.0
          %1395 = vmatpush1.msra.mxu0 0.0
          %1396 = vmatprep.subr.mxu0 0.0
          %1397 = vmatpush1.msra.mxu0 0.0
          %1398 = vmatprep.subr.mxu0 0.0
          %1399 = vmatpush1.msra.mxu0 0.0
          %1400 = vmatprep.subr.mxu0 0.0
          %1401 = vmatpush1.msra.mxu0 0.0
          %1402 = vmatprep.subr.mxu0 0.0
          %1403 = vmatpush1.msra.mxu0 0.0
          %1404 = vmatprep.subr.mxu0 0.0
          %1405 = vmatpush1.msra.mxu0 0.0
          %1406 = vmatprep.subr.mxu0 0.0
          %1407 = vmatpush1.msra.mxu0 0.0
          %1408 = vmatprep.subr.mxu0 0.0
          %1409 = vmatpush1.msra.mxu0 0.0
          %1410 = vmatprep.subr.mxu0 0.0
          %1411 = vmatpush1.msra.mxu0 0.0
          %1412 = vmatprep.subr.mxu0 0.0
          %1413 = vmatpush1.msra.mxu0 0.0
          %1414 = vmatprep.mubr.f32.mxu0 0.0
          %1415 = vmatmul.mubr.f32.gmra.mrb[0].mxu0 %v1255
          %v1416 = vpop.f32.mrb[0].mxu0
          %v1417 = vadd.f32 0.0, %v1416
          %v1418 = vpop.f32.mrb[0].mxu0
          %1419 = vmatprep.mubr.f32.mxu0 0.0
          %1420 = vmatmul.mubr.f32.gmra.mrb[0].mxu0 %v1258
          %v1421 = vpop.f32.mrb[0].mxu0
          %v1422 = vadd.f32 0.0, %v1421
          %v1423 = vpop.f32.mrb[0].mxu0
          %1424 = vmatprep.mubr.f32.mxu0 0.0
          %1425 = vmatmul.mubr.f32.gmra.mrb[0].mxu0 %v1261
          %v1426 = vpop.f32.mrb[0].mxu0
          %v1427 = vadd.f32 0.0, %v1426
          %v1428 = vpop.f32.mrb[0].mxu0
          %1429 = vmatprep.mubr.f32.mxu0 0.0
          %1430 = vmatmul.mubr.f32.gmra.mrb[0].mxu0 %v1264
          %v1431 = vpop.f32.mrb[0].mxu0
          %v1432 = vadd.f32 0.0, %v1431
          %v1433 = vpop.f32.mrb[0].mxu0
          %1434 = vmatprep.mubr.f32.mxu0 0.0
          %1435 = vmatmul.mubr.f32.gmra.mrb[0].mxu0 %v1267
          %v1436 = vpop.f32.mrb[0].mxu0
          %v1437 = vadd.f32 0.0, %v1436
          %v1438 = vpop.f32.mrb[0].mxu0
          %1439 = vmatprep.mubr.f32.mxu0 0.0
          %1440 = vmatmul.mubr.f32.gmra.mrb[0].mxu0 %v1270
          %v1441 = vpop.f32.mrb[0].mxu0
          %v1442 = vadd.f32 0.0, %v1441
          %v1443 = vpop.f32.mrb[0].mxu0
          %1444 = vmatprep.mubr.f32.mxu0 0.0
          %1445 = vmatmul.mubr.f32.gmra.mrb[0].mxu0 %v1273
          %v1446 = vpop.f32.mrb[0].mxu0
          %v1447 = vadd.f32 0.0, %v1446
          %v1448 = vpop.f32.mrb[0].mxu0
          %1449 = vmatprep.mubr.f32.mxu0 0.0
          %1450 = vmatmul.mubr.f32.gmra.mrb[0].mxu0 %v1276
          %v1451 = vpop.f32.mrb[0].mxu0
          %v1452 = vadd.f32 0.0, %v1451
          %v1453 = vpop.f32.mrb[0].mxu0
          %1454 = vmatprep.mubr.f32.mxu0 0.0
          %1455 = vmatmul.mubr.f32.gmra.mrb[0].mxu0 %v1279
          %v1456 = vpop.f32.mrb[0].mxu0
          %v1457 = vadd.f32 0.0, %v1456
          %v1458 = vpop.f32.mrb[0].mxu0
          %1459 = vmatprep.mubr.f32.mxu0 0.0
          %1460 = vmatmul.mubr.f32.gmra.mrb[0].mxu0 %v1282
          %v1461 = vpop.f32.mrb[0].mxu0
          %v1462 = vadd.f32 0.0, %v1461
          %v1463 = vpop.f32.mrb[0].mxu0
          %1464 = vmatprep.mubr.f32.mxu0 0.0
          %1465 = vmatmul.mubr.f32.gmra.mrb[0].mxu0 %v1285
          %v1466 = vpop.f32.mrb[0].mxu0
          %v1467 = vadd.f32 0.0, %v1466
          %v1468 = vpop.f32.mrb[0].mxu0
          %1469 = vmatprep.mubr.f32.mxu0 0.0
          %1470 = vmatmul.mubr.f32.gmra.mrb[0].mxu0 %v1288
          %v1471 = vpop.f32.mrb[0].mxu0
          %v1472 = vadd.f32 0.0, %v1471
          %v1473 = vpop.f32.mrb[0].mxu0
          %1474 = vmatprep.mubr.f32.mxu0 0.0
          %1475 = vmatmul.mubr.f32.gmra.mrb[0].mxu0 %v1291
          %v1476 = vpop.f32.mrb[0].mxu0
          %v1477 = vadd.f32 0.0, %v1476
          %v1478 = vpop.f32.mrb[0].mxu0
          %1479 = vmatprep.mubr.f32.mxu0 0.0
          %1480 = vmatmul.mubr.f32.gmra.mrb[0].mxu0 %v1294
          %v1481 = vpop.f32.mrb[0].mxu0
          %v1482 = vadd.f32 0.0, %v1481
          %v1483 = vpop.f32.mrb[0].mxu0
          %1484 = vmatprep.mubr.f32.mxu0 0.0
          %1485 = vmatmul.mubr.f32.gmra.mrb[0].mxu0 %v1297
          %v1486 = vpop.f32.mrb[0].mxu0
          %v1487 = vadd.f32 0.0, %v1486
          %v1488 = vpop.f32.mrb[0].mxu0
          %1489 = vmatprep.mubr.f32.mxu0 0.0
          %1490 = vmatmul.mubr.f32.gmra.mrb[0].mxu0 %v1300
          %v1491 = vpop.f32.mrb[0].mxu0
          %v1492 = vadd.f32 0.0, %v1491
          %v1493 = vpop.f32.mrb[0].mxu0
          %1494 = vmatprep.mubr.f32.mxu0 0.0
          %1495 = vmatmul.mubr.f32.gmra.mrb[0].mxu0 %v1303
          %v1496 = vpop.f32.mrb[0].mxu0
          %v1497 = vadd.f32 0.0, %v1496
          %v1498 = vpop.f32.mrb[0].mxu0
          %1499 = vmatprep.mubr.f32.mxu0 0.0
          %1500 = vmatmul.mubr.f32.gmra.mrb[0].mxu0 %v1306
          %v1501 = vpop.f32.mrb[0].mxu0
          %v1502 = vadd.f32 0.0, %v1501
          %v1503 = vpop.f32.mrb[0].mxu0
          %1504 = vmatprep.mubr.f32.mxu0 0.0
          %1505 = vmatmul.mubr.f32.gmra.mrb[0].mxu0 %v1309
          %v1506 = vpop.f32.mrb[0].mxu0
          %v1507 = vadd.f32 0.0, %v1506
          %v1508 = vpop.f32.mrb[0].mxu0
          %1509 = vmatprep.mubr.f32.mxu0 0.0
          %1510 = vmatmul.mubr.f32.gmra.mrb[0].mxu0 %v1312
          %v1511 = vpop.f32.mrb[0].mxu0
          %v1512 = vadd.f32 0.0, %v1511
          %v1513 = vpop.f32.mrb[0].mxu0
          %1514 = vmatprep.mubr.f32.mxu0 0.0
          %1515 = vmatmul.mubr.f32.gmra.mrb[0].mxu0 %v1315
          %v1516 = vpop.f32.mrb[0].mxu0
          %v1517 = vadd.f32 0.0, %v1516
          %v1518 = vpop.f32.mrb[0].mxu0
          %1519 = vmatprep.mubr.f32.mxu0 0.0
          %1520 = vmatmul.mubr.f32.gmra.mrb[0].mxu0 %v1318
          %v1521 = vpop.f32.mrb[0].mxu0
          %v1522 = vadd.f32 0.0, %v1521
          %v1523 = vpop.f32.mrb[0].mxu0
          %1524 = vmatprep.mubr.f32.mxu0 0.0
          %1525 = vmatmul.mubr.f32.gmra.mrb[0].mxu0 %v1321
          %v1526 = vpop.f32.mrb[0].mxu0
          %v1527 = vadd.f32 0.0, %v1526
          %v1528 = vpop.f32.mrb[0].mxu0
          %1529 = vmatprep.mubr.f32.mxu0 0.0
          %1530 = vmatmul.mubr.f32.gmra.mrb[0].mxu0 %v1324
          %v1531 = vpop.f32.mrb[0].mxu0
          %v1532 = vadd.f32 0.0, %v1531
          %v1533 = vpop.f32.mrb[0].mxu0
          %1534 = vmatprep.mubr.f32.mxu0 0.0
          %1535 = vmatmul.mubr.f32.gmra.mrb[0].mxu0 %v1327
          %v1536 = vpop.f32.mrb[0].mxu0
          %v1537 = vadd.f32 0.0, %v1536
          %v1538 = vpop.f32.mrb[0].mxu0
          %1539 = vmatprep.mubr.f32.mxu0 0.0
          %1540 = vmatmul.mubr.f32.gmra.mrb[0].mxu0 %v1330
          %v1541 = vpop.f32.mrb[0].mxu0
          %v1542 = vadd.f32 0.0, %v1541
          %v1543 = vpop.f32.mrb[0].mxu0
          %1544 = vmatprep.mubr.f32.mxu0 0.0
          %1545 = vmatmul.mubr.f32.gmra.mrb[0].mxu0 %v1333
          %v1546 = vpop.f32.mrb[0].mxu0
          %v1547 = vadd.f32 0.0, %v1546
          %v1548 = vpop.f32.mrb[0].mxu0
          %1549 = vmatprep.mubr.f32.mxu0 0.0
          %1550 = vmatmul.mubr.f32.gmra.mrb[0].mxu0 %v1336
          %v1551 = vpop.f32.mrb[0].mxu0
          %v1552 = vadd.f32 0.0, %v1551
          %v1553 = vpop.f32.mrb[0].mxu0
          %1554 = vmatprep.mubr.f32.mxu0 0.0
          %1555 = vmatmul.mubr.f32.gmra.mrb[0].mxu0 %v1339
          %v1556 = vpop.f32.mrb[0].mxu0
          %v1557 = vadd.f32 0.0, %v1556
          %v1558 = vpop.f32.mrb[0].mxu0
          %1559 = vmatprep.mubr.f32.mxu0 0.0
          %1560 = vmatmul.mubr.f32.gmra.mrb[0].mxu0 %v1342
          %v1561 = vpop.f32.mrb[0].mxu0
          %v1562 = vadd.f32 0.0, %v1561
          %v1563 = vpop.f32.mrb[0].mxu0
          %1564 = vmatprep.mubr.f32.mxu0 0.0
          %1565 = vmatmul.mubr.f32.gmra.mrb[0].mxu0 %v1345
          %v1566 = vpop.f32.mrb[0].mxu0
          %v1567 = vadd.f32 0.0, %v1566
          %v1568 = vpop.f32.mrb[0].mxu0
          %1569 = vmatprep.mubr.f32.mxu0 0.0
          %1570 = vmatmul.mubr.f32.gmra.mrb[0].mxu0 %v1348
          %v1571 = vpop.f32.mrb[0].mxu0
          %v1572 = vadd.f32 0.0, %v1571
          %v1573 = vpop.f32.mrb[0].mxu0
          %1574 = vdwg.mxu0
          %1575 = vst.msk [vmem:[%s535] sm:$0xff] %vm909, %v1417
          %1576 = vst.msk [vmem:[%s535 + $0x8] sm:$0xff] %vm909, %v1422
          %1577 = vst.msk [vmem:[%s535 + $0x10] sm:$0xff] %vm909, %v1427
          %1578 = vst.msk [vmem:[%s535 + $0x18] sm:$0xff] %vm909, %v1432
          %1579 = vst.msk [vmem:[%s535 + $0x20] sm:$0xff] %vm909, %v1437
          %1580 = vst.msk [vmem:[%s535 + $0x28] sm:$0xff] %vm909, %v1442
          %1581 = vst.msk [vmem:[%s535 + $0x30] sm:$0xff] %vm909, %v1447
          %1582 = vst.msk [vmem:[%s535 + $0x38] sm:$0xff] %vm909, %v1452
          %1583 = vst.msk [vmem:[%s535 + $0x40] sm:$0xff] %vm909, %v1457
          %1584 = vst.msk [vmem:[%s535 + $0x48] sm:$0xff] %vm909, %v1462
          %1585 = vst.msk [vmem:[%s535 + $0x50] sm:$0xff] %vm909, %v1467
          %1586 = vst.msk [vmem:[%s535 + $0x58] sm:$0xff] %vm909, %v1472
          %1587 = vst.msk [vmem:[%s535 + $0x60] sm:$0xff] %vm909, %v1477
          %1588 = vst.msk [vmem:[%s535 + $0x68] sm:$0xff] %vm909, %v1482
          %1589 = vst.msk [vmem:[%s535 + $0x70] sm:$0xff] %vm909, %v1487
          %1590 = vst.msk [vmem:[%s535 + $0x78] sm:$0xff] %vm909, %v1492
          %1591 = vst.msk [vmem:[%s535 + $0x80] sm:$0xff] %vm909, %v1497
          %1592 = vst.msk [vmem:[%s535 + $0x88] sm:$0xff] %vm909, %v1502
          %1593 = vst.msk [vmem:[%s535 + $0x90] sm:$0xff] %vm909, %v1507
          %1594 = vst.msk [vmem:[%s535 + $0x98] sm:$0xff] %vm909, %v1512
          %1595 = vst.msk [vmem:[%s535 + $0xa0] sm:$0xff] %vm909, %v1517
          %1596 = vst.msk [vmem:[%s535 + $0xa8] sm:$0xff] %vm909, %v1522
          %1597 = vst.msk [vmem:[%s535 + $0xb0] sm:$0xff] %vm909, %v1527
          %1598 = vst.msk [vmem:[%s535 + $0xb8] sm:$0xff] %vm909, %v1532
          %1599 = vst.msk [vmem:[%s535 + $0xc0] sm:$0xff] %vm909, %v1537
          %1600 = vst.msk [vmem:[%s535 + $0xc8] sm:$0xff] %vm909, %v1542
          %1601 = vst.msk [vmem:[%s535 + $0xd0] sm:$0xff] %vm909, %v1547
          %1602 = vst.msk [vmem:[%s535 + $0xd8] sm:$0xff] %vm909, %v1552
          %1603 = vst.msk [vmem:[%s535 + $0xe0] sm:$0xff] %vm909, %v1557
          %1604 = vst.msk [vmem:[%s535 + $0xe8] sm:$0xff] %vm909, %v1562
          %1605 = vst.msk [vmem:[%s535 + $0xf0] sm:$0xff] %vm909, %v1567
          %1606 = vst.msk [vmem:[%s535 + $0xf8] sm:$0xff] %vm909, %v1572
          %v1607 = vld [vmem:[#allocation2 + $0x8] sm:$0xff]
          %s1608 = scalar_lea.vmem [#allocation9], 1
          %v1609 = vld [vmem:[%s1608] sm:$0x1]
          %v1611 = vlaneseq
          %v1612 = vshrl.u32 %v1611, 7
          %v1613 = vsub.s32 0, %v1612
          %v1614 = vrot.slane %v1609, %v1613
          %v1616 = vadd.f32 %v1607, %v1614
          %v1617 = vmax.f32 %v1616, 0.0
          %v1618 = vld [vmem:[#allocation12] sm:$0xff]
          %v1619 = vld [vmem:[#allocation12 + $0x8] sm:$0xff]
          %v1620 = vld [vmem:[#allocation12 + $0x10] sm:$0xff]
          %v1621 = vld [vmem:[#allocation12 + $0x18] sm:$0xff]
          %v1622 = vld [vmem:[#allocation12 + $0x20] sm:$0xff]
          %v1623 = vld [vmem:[#allocation12 + $0x28] sm:$0xff]
          %v1624 = vld [vmem:[#allocation12 + $0x30] sm:$0xff]
          %v1625 = vld [vmem:[#allocation12 + $0x38] sm:$0xff]
          %v1626 = vld [vmem:[#allocation12 + $0x40] sm:$0xff]
          %v1627 = vld [vmem:[#allocation12 + $0x48] sm:$0xff]
          %v1628 = vld [vmem:[#allocation12 + $0x50] sm:$0xff]
          %v1629 = vld [vmem:[#allocation12 + $0x58] sm:$0xff]
          %v1630 = vld [vmem:[#allocation12 + $0x60] sm:$0xff]
          %v1631 = vld [vmem:[#allocation12 + $0x68] sm:$0xff]
          %v1632 = vld [vmem:[#allocation12 + $0x70] sm:$0xff]
          %v1633 = vld [vmem:[#allocation12 + $0x78] sm:$0xff]
          %v1634 = vld [vmem:[#allocation12 + $0x80] sm:$0xff]
          %v1635 = vld [vmem:[#allocation12 + $0x88] sm:$0xff]
          %v1636 = vld [vmem:[#allocation12 + $0x90] sm:$0xff]
          %v1637 = vld [vmem:[#allocation12 + $0x98] sm:$0xff]
          %v1638 = vld [vmem:[#allocation12 + $0xa0] sm:$0xff]
          %v1639 = vld [vmem:[#allocation12 + $0xa8] sm:$0xff]
          %v1640 = vld [vmem:[#allocation12 + $0xb0] sm:$0xff]
          %v1641 = vld [vmem:[#allocation12 + $0xb8] sm:$0xff]
          %v1642 = vld [vmem:[#allocation12 + $0xc0] sm:$0xff]
          %v1643 = vld [vmem:[#allocation12 + $0xc8] sm:$0xff]
          %v1644 = vld [vmem:[#allocation12 + $0xd0] sm:$0xff]
          %v1645 = vld [vmem:[#allocation12 + $0xd8] sm:$0xff]
          %v1646 = vld [vmem:[#allocation12 + $0xe0] sm:$0xff]
          %v1647 = vld [vmem:[#allocation12 + $0xe8] sm:$0xff]
          %v1648 = vld [vmem:[#allocation12 + $0xf0] sm:$0xff]
          %v1649 = vld [vmem:[#allocation12 + $0xf8] sm:$0xff]
          %v1651 = vsel %vm909, %v1618, 0
          %v1654 = vsel %vm909, %v1619, 0
          %v1657 = vsel %vm909, %v1620, 0
          %v1660 = vsel %vm909, %v1621, 0
          %v1663 = vsel %vm909, %v1622, 0
          %v1666 = vsel %vm909, %v1623, 0
          %v1669 = vsel %vm909, %v1624, 0
          %v1672 = vsel %vm909, %v1625, 0
          %v1675 = vsel %vm909, %v1626, 0
          %v1678 = vsel %vm909, %v1627, 0
          %v1681 = vsel %vm909, %v1628, 0
          %v1684 = vsel %vm909, %v1629, 0
          %v1687 = vsel %vm909, %v1630, 0
          %v1690 = vsel %vm909, %v1631, 0
          %v1693 = vsel %vm909, %v1632, 0
          %v1696 = vsel %vm909, %v1633, 0
          %v1699 = vsel %vm909, %v1634, 0
          %v1702 = vsel %vm909, %v1635, 0
          %v1705 = vsel %vm909, %v1636, 0
          %v1708 = vsel %vm909, %v1637, 0
          %v1711 = vsel %vm909, %v1638, 0
          %v1714 = vsel %vm909, %v1639, 0
          %v1717 = vsel %vm909, %v1640, 0
          %v1720 = vsel %vm909, %v1641, 0
          %v1723 = vsel %vm909, %v1642, 0
          %v1726 = vsel %vm909, %v1643, 0
          %v1729 = vsel %vm909, %v1644, 0
          %v1732 = vsel %vm909, %v1645, 0
          %v1735 = vsel %vm909, %v1646, 0
          %v1738 = vsel %vm909, %v1647, 0
          %v1741 = vsel %vm909, %v1648, 0
          %v1744 = vsel %vm909, %v1649, 0
          %1746 = vmatprep.subr.mxu0 0.0
          %1747 = vmatpush1.msra.mxu0 %v1617
          %1748 = vmatprep.subr.mxu0 0.0
          %1749 = vmatpush1.msra.mxu0 0.0
          %1750 = vmatprep.subr.mxu0 0.0
          %1751 = vmatpush1.msra.mxu0 0.0
          %1752 = vmatprep.subr.mxu0 0.0
          %1753 = vmatpush1.msra.mxu0 0.0
          %1754 = vmatprep.subr.mxu0 0.0
          %1755 = vmatpush1.msra.mxu0 0.0
          %1756 = vmatprep.subr.mxu0 0.0
          %1757 = vmatpush1.msra.mxu0 0.0
          %1758 = vmatprep.subr.mxu0 0.0
          %1759 = vmatpush1.msra.mxu0 0.0
          %1760 = vmatprep.subr.mxu0 0.0
          %1761 = vmatpush1.msra.mxu0 0.0
          %1762 = vmatprep.subr.mxu0 0.0
          %1763 = vmatpush1.msra.mxu0 0.0
          %1764 = vmatprep.subr.mxu0 0.0
          %1765 = vmatpush1.msra.mxu0 0.0
          %1766 = vmatprep.subr.mxu0 0.0
          %1767 = vmatpush1.msra.mxu0 0.0
          %1768 = vmatprep.subr.mxu0 0.0
          %1769 = vmatpush1.msra.mxu0 0.0
          %1770 = vmatprep.subr.mxu0 0.0
          %1771 = vmatpush1.msra.mxu0 0.0
          %1772 = vmatprep.subr.mxu0 0.0
          %1773 = vmatpush1.msra.mxu0 0.0
          %1774 = vmatprep.subr.mxu0 0.0
          %1775 = vmatpush1.msra.mxu0 0.0
          %1776 = vmatprep.subr.mxu0 0.0
          %1777 = vmatpush1.msra.mxu0 0.0
          %1778 = vmatprep.subr.mxu0 0.0
          %1779 = vmatpush1.msra.mxu0 0.0
          %1780 = vmatprep.subr.mxu0 0.0
          %1781 = vmatpush1.msra.mxu0 0.0
          %1782 = vmatprep.subr.mxu0 0.0
          %1783 = vmatpush1.msra.mxu0 0.0
          %1784 = vmatprep.subr.mxu0 0.0
          %1785 = vmatpush1.msra.mxu0 0.0
          %1786 = vmatprep.subr.mxu0 0.0
          %1787 = vmatpush1.msra.mxu0 0.0
          %1788 = vmatprep.subr.mxu0 0.0
          %1789 = vmatpush1.msra.mxu0 0.0
          %1790 = vmatprep.subr.mxu0 0.0
          %1791 = vmatpush1.msra.mxu0 0.0
          %1792 = vmatprep.subr.mxu0 0.0
          %1793 = vmatpush1.msra.mxu0 0.0
          %1794 = vmatprep.subr.mxu0 0.0
          %1795 = vmatpush1.msra.mxu0 0.0
          %1796 = vmatprep.subr.mxu0 0.0
          %1797 = vmatpush1.msra.mxu0 0.0
          %1798 = vmatprep.subr.mxu0 0.0
          %1799 = vmatpush1.msra.mxu0 0.0
          %1800 = vmatprep.subr.mxu0 0.0
          %1801 = vmatpush1.msra.mxu0 0.0
          %1802 = vmatprep.subr.mxu0 0.0
          %1803 = vmatpush1.msra.mxu0 0.0
          %1804 = vmatprep.subr.mxu0 0.0
          %1805 = vmatpush1.msra.mxu0 0.0
          %1806 = vmatprep.subr.mxu0 0.0
          %1807 = vmatpush1.msra.mxu0 0.0
          %1808 = vmatprep.subr.mxu0 0.0
          %1809 = vmatpush1.msra.mxu0 0.0
          %1810 = vmatprep.mubr.f32.mxu0 0.0
          %1811 = vmatmul.mubr.f32.gmra.mrb[0].mxu0 %v1651
          %v1812 = vpop.f32.mrb[0].mxu0
          %v1813 = vadd.f32 0.0, %v1812
          %v1814 = vpop.f32.mrb[0].mxu0
          %1815 = vmatprep.mubr.f32.mxu0 0.0
          %1816 = vmatmul.mubr.f32.gmra.mrb[0].mxu0 %v1654
          %v1817 = vpop.f32.mrb[0].mxu0
          %v1818 = vadd.f32 0.0, %v1817
          %v1819 = vpop.f32.mrb[0].mxu0
          %1820 = vmatprep.mubr.f32.mxu0 0.0
          %1821 = vmatmul.mubr.f32.gmra.mrb[0].mxu0 %v1657
          %v1822 = vpop.f32.mrb[0].mxu0
          %v1823 = vadd.f32 0.0, %v1822
          %v1824 = vpop.f32.mrb[0].mxu0
          %1825 = vmatprep.mubr.f32.mxu0 0.0
          %1826 = vmatmul.mubr.f32.gmra.mrb[0].mxu0 %v1660
          %v1827 = vpop.f32.mrb[0].mxu0
          %v1828 = vadd.f32 0.0, %v1827
          %v1829 = vpop.f32.mrb[0].mxu0
          %1830 = vmatprep.mubr.f32.mxu0 0.0
          %1831 = vmatmul.mubr.f32.gmra.mrb[0].mxu0 %v1663
          %v1832 = vpop.f32.mrb[0].mxu0
          %v1833 = vadd.f32 0.0, %v1832
          %v1834 = vpop.f32.mrb[0].mxu0
          %1835 = vmatprep.mubr.f32.mxu0 0.0
          %1836 = vmatmul.mubr.f32.gmra.mrb[0].mxu0 %v1666
          %v1837 = vpop.f32.mrb[0].mxu0
          %v1838 = vadd.f32 0.0, %v1837
          %v1839 = vpop.f32.mrb[0].mxu0
          %1840 = vmatprep.mubr.f32.mxu0 0.0
          %1841 = vmatmul.mubr.f32.gmra.mrb[0].mxu0 %v1669
          %v1842 = vpop.f32.mrb[0].mxu0
          %v1843 = vadd.f32 0.0, %v1842
          %v1844 = vpop.f32.mrb[0].mxu0
          %1845 = vmatprep.mubr.f32.mxu0 0.0
          %1846 = vmatmul.mubr.f32.gmra.mrb[0].mxu0 %v1672
          %v1847 = vpop.f32.mrb[0].mxu0
          %v1848 = vadd.f32 0.0, %v1847
          %v1849 = vpop.f32.mrb[0].mxu0
          %1850 = vmatprep.mubr.f32.mxu0 0.0
          %1851 = vmatmul.mubr.f32.gmra.mrb[0].mxu0 %v1675
          %v1852 = vpop.f32.mrb[0].mxu0
          %v1853 = vadd.f32 0.0, %v1852
          %v1854 = vpop.f32.mrb[0].mxu0
          %1855 = vmatprep.mubr.f32.mxu0 0.0
          %1856 = vmatmul.mubr.f32.gmra.mrb[0].mxu0 %v1678
          %v1857 = vpop.f32.mrb[0].mxu0
          %v1858 = vadd.f32 0.0, %v1857
          %v1859 = vpop.f32.mrb[0].mxu0
          %1860 = vmatprep.mubr.f32.mxu0 0.0
          %1861 = vmatmul.mubr.f32.gmra.mrb[0].mxu0 %v1681
          %v1862 = vpop.f32.mrb[0].mxu0
          %v1863 = vadd.f32 0.0, %v1862
          %v1864 = vpop.f32.mrb[0].mxu0
          %1865 = vmatprep.mubr.f32.mxu0 0.0
          %1866 = vmatmul.mubr.f32.gmra.mrb[0].mxu0 %v1684
          %v1867 = vpop.f32.mrb[0].mxu0
          %v1868 = vadd.f32 0.0, %v1867
          %v1869 = vpop.f32.mrb[0].mxu0
          %1870 = vmatprep.mubr.f32.mxu0 0.0
          %1871 = vmatmul.mubr.f32.gmra.mrb[0].mxu0 %v1687
          %v1872 = vpop.f32.mrb[0].mxu0
          %v1873 = vadd.f32 0.0, %v1872
          %v1874 = vpop.f32.mrb[0].mxu0
          %1875 = vmatprep.mubr.f32.mxu0 0.0
          %1876 = vmatmul.mubr.f32.gmra.mrb[0].mxu0 %v1690
          %v1877 = vpop.f32.mrb[0].mxu0
          %v1878 = vadd.f32 0.0, %v1877
          %v1879 = vpop.f32.mrb[0].mxu0
          %1880 = vmatprep.mubr.f32.mxu0 0.0
          %1881 = vmatmul.mubr.f32.gmra.mrb[0].mxu0 %v1693
          %v1882 = vpop.f32.mrb[0].mxu0
          %v1883 = vadd.f32 0.0, %v1882
          %v1884 = vpop.f32.mrb[0].mxu0
          %1885 = vmatprep.mubr.f32.mxu0 0.0
          %1886 = vmatmul.mubr.f32.gmra.mrb[0].mxu0 %v1696
          %v1887 = vpop.f32.mrb[0].mxu0
          %v1888 = vadd.f32 0.0, %v1887
          %v1889 = vpop.f32.mrb[0].mxu0
          %1890 = vmatprep.mubr.f32.mxu0 0.0
          %1891 = vmatmul.mubr.f32.gmra.mrb[0].mxu0 %v1699
          %v1892 = vpop.f32.mrb[0].mxu0
          %v1893 = vadd.f32 0.0, %v1892
          %v1894 = vpop.f32.mrb[0].mxu0
          %1895 = vmatprep.mubr.f32.mxu0 0.0
          %1896 = vmatmul.mubr.f32.gmra.mrb[0].mxu0 %v1702
          %v1897 = vpop.f32.mrb[0].mxu0
          %v1898 = vadd.f32 0.0, %v1897
          %v1899 = vpop.f32.mrb[0].mxu0
          %1900 = vmatprep.mubr.f32.mxu0 0.0
          %1901 = vmatmul.mubr.f32.gmra.mrb[0].mxu0 %v1705
          %v1902 = vpop.f32.mrb[0].mxu0
          %v1903 = vadd.f32 0.0, %v1902
          %v1904 = vpop.f32.mrb[0].mxu0
          %1905 = vmatprep.mubr.f32.mxu0 0.0
          %1906 = vmatmul.mubr.f32.gmra.mrb[0].mxu0 %v1708
          %v1907 = vpop.f32.mrb[0].mxu0
          %v1908 = vadd.f32 0.0, %v1907
          %v1909 = vpop.f32.mrb[0].mxu0
          %1910 = vmatprep.mubr.f32.mxu0 0.0
          %1911 = vmatmul.mubr.f32.gmra.mrb[0].mxu0 %v1711
          %v1912 = vpop.f32.mrb[0].mxu0
          %v1913 = vadd.f32 0.0, %v1912
          %v1914 = vpop.f32.mrb[0].mxu0
          %1915 = vmatprep.mubr.f32.mxu0 0.0
          %1916 = vmatmul.mubr.f32.gmra.mrb[0].mxu0 %v1714
          %v1917 = vpop.f32.mrb[0].mxu0
          %v1918 = vadd.f32 0.0, %v1917
          %v1919 = vpop.f32.mrb[0].mxu0
          %1920 = vmatprep.mubr.f32.mxu0 0.0
          %1921 = vmatmul.mubr.f32.gmra.mrb[0].mxu0 %v1717
          %v1922 = vpop.f32.mrb[0].mxu0
          %v1923 = vadd.f32 0.0, %v1922
          %v1924 = vpop.f32.mrb[0].mxu0
          %1925 = vmatprep.mubr.f32.mxu0 0.0
          %1926 = vmatmul.mubr.f32.gmra.mrb[0].mxu0 %v1720
          %v1927 = vpop.f32.mrb[0].mxu0
          %v1928 = vadd.f32 0.0, %v1927
          %v1929 = vpop.f32.mrb[0].mxu0
          %1930 = vmatprep.mubr.f32.mxu0 0.0
          %1931 = vmatmul.mubr.f32.gmra.mrb[0].mxu0 %v1723
          %v1932 = vpop.f32.mrb[0].mxu0
          %v1933 = vadd.f32 0.0, %v1932
          %v1934 = vpop.f32.mrb[0].mxu0
          %1935 = vmatprep.mubr.f32.mxu0 0.0
          %1936 = vmatmul.mubr.f32.gmra.mrb[0].mxu0 %v1726
          %v1937 = vpop.f32.mrb[0].mxu0
          %v1938 = vadd.f32 0.0, %v1937
          %v1939 = vpop.f32.mrb[0].mxu0
          %1940 = vmatprep.mubr.f32.mxu0 0.0
          %1941 = vmatmul.mubr.f32.gmra.mrb[0].mxu0 %v1729
          %v1942 = vpop.f32.mrb[0].mxu0
          %v1943 = vadd.f32 0.0, %v1942
          %v1944 = vpop.f32.mrb[0].mxu0
          %1945 = vmatprep.mubr.f32.mxu0 0.0
          %1946 = vmatmul.mubr.f32.gmra.mrb[0].mxu0 %v1732
          %v1947 = vpop.f32.mrb[0].mxu0
          %v1948 = vadd.f32 0.0, %v1947
          %v1949 = vpop.f32.mrb[0].mxu0
          %1950 = vmatprep.mubr.f32.mxu0 0.0
          %1951 = vmatmul.mubr.f32.gmra.mrb[0].mxu0 %v1735
          %v1952 = vpop.f32.mrb[0].mxu0
          %v1953 = vadd.f32 0.0, %v1952
          %v1954 = vpop.f32.mrb[0].mxu0
          %1955 = vmatprep.mubr.f32.mxu0 0.0
          %1956 = vmatmul.mubr.f32.gmra.mrb[0].mxu0 %v1738
          %v1957 = vpop.f32.mrb[0].mxu0
          %v1958 = vadd.f32 0.0, %v1957
          %v1959 = vpop.f32.mrb[0].mxu0
          %1960 = vmatprep.mubr.f32.mxu0 0.0
          %1961 = vmatmul.mubr.f32.gmra.mrb[0].mxu0 %v1741
          %v1962 = vpop.f32.mrb[0].mxu0
          %v1963 = vadd.f32 0.0, %v1962
          %v1964 = vpop.f32.mrb[0].mxu0
          %1965 = vmatprep.mubr.f32.mxu0 0.0
          %1966 = vmatmul.mubr.f32.gmra.mrb[0].mxu0 %v1744
          %v1967 = vpop.f32.mrb[0].mxu0
          %v1968 = vadd.f32 0.0, %v1967
          %v1969 = vpop.f32.mrb[0].mxu0
          %1970 = vdwg.mxu0
          %1971 = vst.msk [vmem:[%s542] sm:$0xff] %vm909, %v1813
          %1972 = vst.msk [vmem:[%s542 + $0x8] sm:$0xff] %vm909, %v1818
          %1973 = vst.msk [vmem:[%s542 + $0x10] sm:$0xff] %vm909, %v1823
          %1974 = vst.msk [vmem:[%s542 + $0x18] sm:$0xff] %vm909, %v1828
          %1975 = vst.msk [vmem:[%s542 + $0x20] sm:$0xff] %vm909, %v1833
          %1976 = vst.msk [vmem:[%s542 + $0x28] sm:$0xff] %vm909, %v1838
          %1977 = vst.msk [vmem:[%s542 + $0x30] sm:$0xff] %vm909, %v1843
          %1978 = vst.msk [vmem:[%s542 + $0x38] sm:$0xff] %vm909, %v1848
          %1979 = vst.msk [vmem:[%s542 + $0x40] sm:$0xff] %vm909, %v1853
          %1980 = vst.msk [vmem:[%s542 + $0x48] sm:$0xff] %vm909, %v1858
          %1981 = vst.msk [vmem:[%s542 + $0x50] sm:$0xff] %vm909, %v1863
          %1982 = vst.msk [vmem:[%s542 + $0x58] sm:$0xff] %vm909, %v1868
          %1983 = vst.msk [vmem:[%s542 + $0x60] sm:$0xff] %vm909, %v1873
          %1984 = vst.msk [vmem:[%s542 + $0x68] sm:$0xff] %vm909, %v1878
          %1985 = vst.msk [vmem:[%s542 + $0x70] sm:$0xff] %vm909, %v1883
          %1986 = vst.msk [vmem:[%s542 + $0x78] sm:$0xff] %vm909, %v1888
          %1987 = vst.msk [vmem:[%s542 + $0x80] sm:$0xff] %vm909, %v1893
          %1988 = vst.msk [vmem:[%s542 + $0x88] sm:$0xff] %vm909, %v1898
          %1989 = vst.msk [vmem:[%s542 + $0x90] sm:$0xff] %vm909, %v1903
          %1990 = vst.msk [vmem:[%s542 + $0x98] sm:$0xff] %vm909, %v1908
          %1991 = vst.msk [vmem:[%s542 + $0xa0] sm:$0xff] %vm909, %v1913
          %1992 = vst.msk [vmem:[%s542 + $0xa8] sm:$0xff] %vm909, %v1918
          %1993 = vst.msk [vmem:[%s542 + $0xb0] sm:$0xff] %vm909, %v1923
          %1994 = vst.msk [vmem:[%s542 + $0xb8] sm:$0xff] %vm909, %v1928
          %1995 = vst.msk [vmem:[%s542 + $0xc0] sm:$0xff] %vm909, %v1933
          %1996 = vst.msk [vmem:[%s542 + $0xc8] sm:$0xff] %vm909, %v1938
          %1997 = vst.msk [vmem:[%s542 + $0xd0] sm:$0xff] %vm909, %v1943
          %1998 = vst.msk [vmem:[%s542 + $0xd8] sm:$0xff] %vm909, %v1948
          %1999 = vst.msk [vmem:[%s542 + $0xe0] sm:$0xff] %vm909, %v1953
          %2000 = vst.msk [vmem:[%s542 + $0xe8] sm:$0xff] %vm909, %v1958
          %2001 = vst.msk [vmem:[%s542 + $0xf0] sm:$0xff] %vm909, %v1963
          %2002 = vst.msk [vmem:[%s542 + $0xf8] sm:$0xff] %vm909, %v1968
          %v2003 = vld [vmem:[#allocation2 + $0x10] sm:$0xff]
          %v2004 = vld [vmem:[#allocation2 + $0x18] sm:$0xff]
          %s2005 = scalar_lea.vmem [#allocation9], 2
          %v2006 = vld [vmem:[%s2005] sm:$0x1]
          %v2008 = vlaneseq
          %v2009 = vshrl.u32 %v2008, 7
          %v2010 = vsub.s32 0, %v2009
          %v2011 = vrot.slane %v2006, %v2010
          %v2013 = vadd.f32 %v2003, %v2011
          %v2014 = vadd.f32 %v2004, %v2011
          %v2015 = vmax.f32 %v2013, 0.0
          %v2016 = vmax.f32 %v2014, 0.0
          %v2017 = vld [vmem:[#allocation14] sm:$0xff]
          %v2018 = vld [vmem:[#allocation14 + $0x8] sm:$0xff]
          %v2019 = vld [vmem:[#allocation14 + $0x10] sm:$0xff]
          %v2020 = vld [vmem:[#allocation14 + $0x18] sm:$0xff]
          %v2021 = vld [vmem:[#allocation14 + $0x20] sm:$0xff]
          %v2022 = vld [vmem:[#allocation14 + $0x28] sm:$0xff]
          %v2023 = vld [vmem:[#allocation14 + $0x30] sm:$0xff]
          %v2024 = vld [vmem:[#allocation14 + $0x38] sm:$0xff]
          %v2025 = vld [vmem:[#allocation14 + $0x40] sm:$0xff]
          %v2026 = vld [vmem:[#allocation14 + $0x48] sm:$0xff]
          %v2027 = vld [vmem:[#allocation14 + $0x50] sm:$0xff]
          %v2028 = vld [vmem:[#allocation14 + $0x58] sm:$0xff]
          %v2029 = vld [vmem:[#allocation14 + $0x60] sm:$0xff]
          %v2030 = vld [vmem:[#allocation14 + $0x68] sm:$0xff]
          %v2031 = vld [vmem:[#allocation14 + $0x70] sm:$0xff]
          %v2032 = vld [vmem:[#allocation14 + $0x78] sm:$0xff]
          %v2033 = vld [vmem:[#allocation14 + $0x80] sm:$0xff]
          %v2034 = vld [vmem:[#allocation14 + $0x88] sm:$0xff]
          %v2035 = vld [vmem:[#allocation14 + $0x90] sm:$0xff]
          %v2036 = vld [vmem:[#allocation14 + $0x98] sm:$0xff]
          %v2037 = vld [vmem:[#allocation14 + $0xa0] sm:$0xff]
          %v2038 = vld [vmem:[#allocation14 + $0xa8] sm:$0xff]
          %v2039 = vld [vmem:[#allocation14 + $0xb0] sm:$0xff]
          %v2040 = vld [vmem:[#allocation14 + $0xb8] sm:$0xff]
          %v2041 = vld [vmem:[#allocation14 + $0xc0] sm:$0xff]
          %v2042 = vld [vmem:[#allocation14 + $0xc8] sm:$0xff]
          %v2043 = vld [vmem:[#allocation14 + $0xd0] sm:$0xff]
          %v2044 = vld [vmem:[#allocation14 + $0xd8] sm:$0xff]
          %v2045 = vld [vmem:[#allocation14 + $0xe0] sm:$0xff]
          %v2046 = vld [vmem:[#allocation14 + $0xe8] sm:$0xff]
          %v2047 = vld [vmem:[#allocation14 + $0xf0] sm:$0xff]
          %v2048 = vld [vmem:[#allocation14 + $0xf8] sm:$0xff]
          %vm2049 = vcmask 130048
          %v2051 = vsel %vm2049, %v2017, 0
          %v2054 = vsel %vm2049, %v2018, 0
          %v2057 = vsel %vm2049, %v2019, 0
          %v2060 = vsel %vm2049, %v2020, 0
          %v2063 = vsel %vm2049, %v2021, 0
          %v2066 = vsel %vm2049, %v2022, 0
          %v2069 = vsel %vm2049, %v2023, 0
          %v2072 = vsel %vm2049, %v2024, 0
          %v2075 = vsel %vm2049, %v2025, 0
          %v2078 = vsel %vm2049, %v2026, 0
          %v2081 = vsel %vm2049, %v2027, 0
          %v2084 = vsel %vm2049, %v2028, 0
          %v2087 = vsel %vm2049, %v2029, 0
          %v2090 = vsel %vm2049, %v2030, 0
          %v2093 = vsel %vm2049, %v2031, 0
          %v2096 = vsel %vm2049, %v2032, 0
          %v2099 = vsel %vm2049, %v2033, 0
          %v2102 = vsel %vm2049, %v2034, 0
          %v2105 = vsel %vm2049, %v2035, 0
          %v2108 = vsel %vm2049, %v2036, 0
          %v2111 = vsel %vm2049, %v2037, 0
          %v2114 = vsel %vm2049, %v2038, 0
          %v2117 = vsel %vm2049, %v2039, 0
          %v2120 = vsel %vm2049, %v2040, 0
          %v2123 = vsel %vm2049, %v2041, 0
          %v2126 = vsel %vm2049, %v2042, 0
          %v2129 = vsel %vm2049, %v2043, 0
          %v2132 = vsel %vm2049, %v2044, 0
          %v2135 = vsel %vm2049, %v2045, 0
          %v2138 = vsel %vm2049, %v2046, 0
          %v2141 = vsel %vm2049, %v2047, 0
          %v2144 = vsel %vm2049, %v2048, 0
          %2146 = vmatprep.subr.mxu0 0.0
          %2147 = vmatpush1.msra.mxu0 %v2015
          %2148 = vmatprep.subr.mxu0 0.0
          %2149 = vmatpush1.msra.mxu0 %v2016
          %2150 = vmatprep.subr.mxu0 0.0
          %2151 = vmatpush1.msra.mxu0 0.0
          %2152 = vmatprep.subr.mxu0 0.0
          %2153 = vmatpush1.msra.mxu0 0.0
          %2154 = vmatprep.subr.mxu0 0.0
          %2155 = vmatpush1.msra.mxu0 0.0
          %2156 = vmatprep.subr.mxu0 0.0
          %2157 = vmatpush1.msra.mxu0 0.0
          %2158 = vmatprep.subr.mxu0 0.0
          %2159 = vmatpush1.msra.mxu0 0.0
          %2160 = vmatprep.subr.mxu0 0.0
          %2161 = vmatpush1.msra.mxu0 0.0
          %2162 = vmatprep.subr.mxu0 0.0
          %2163 = vmatpush1.msra.mxu0 0.0
          %2164 = vmatprep.subr.mxu0 0.0
          %2165 = vmatpush1.msra.mxu0 0.0
          %2166 = vmatprep.subr.mxu0 0.0
          %2167 = vmatpush1.msra.mxu0 0.0
          %2168 = vmatprep.subr.mxu0 0.0
          %2169 = vmatpush1.msra.mxu0 0.0
          %2170 = vmatprep.subr.mxu0 0.0
          %2171 = vmatpush1.msra.mxu0 0.0
          %2172 = vmatprep.subr.mxu0 0.0
          %2173 = vmatpush1.msra.mxu0 0.0
          %2174 = vmatprep.subr.mxu0 0.0
          %2175 = vmatpush1.msra.mxu0 0.0
          %2176 = vmatprep.subr.mxu0 0.0
          %2177 = vmatpush1.msra.mxu0 0.0
          %2178 = vmatprep.subr.mxu0 0.0
          %2179 = vmatpush1.msra.mxu0 0.0
          %2180 = vmatprep.subr.mxu0 0.0
          %2181 = vmatpush1.msra.mxu0 0.0
          %2182 = vmatprep.subr.mxu0 0.0
          %2183 = vmatpush1.msra.mxu0 0.0
          %2184 = vmatprep.subr.mxu0 0.0
          %2185 = vmatpush1.msra.mxu0 0.0
          %2186 = vmatprep.subr.mxu0 0.0
          %2187 = vmatpush1.msra.mxu0 0.0
          %2188 = vmatprep.subr.mxu0 0.0
          %2189 = vmatpush1.msra.mxu0 0.0
          %2190 = vmatprep.subr.mxu0 0.0
          %2191 = vmatpush1.msra.mxu0 0.0
          %2192 = vmatprep.subr.mxu0 0.0
          %2193 = vmatpush1.msra.mxu0 0.0
          %2194 = vmatprep.subr.mxu0 0.0
          %2195 = vmatpush1.msra.mxu0 0.0
          %2196 = vmatprep.subr.mxu0 0.0
          %2197 = vmatpush1.msra.mxu0 0.0
          %2198 = vmatprep.subr.mxu0 0.0
          %2199 = vmatpush1.msra.mxu0 0.0
          %2200 = vmatprep.subr.mxu0 0.0
          %2201 = vmatpush1.msra.mxu0 0.0
          %2202 = vmatprep.subr.mxu0 0.0
          %2203 = vmatpush1.msra.mxu0 0.0
          %2204 = vmatprep.subr.mxu0 0.0
          %2205 = vmatpush1.msra.mxu0 0.0
          %2206 = vmatprep.subr.mxu0 0.0
          %2207 = vmatpush1.msra.mxu0 0.0
          %2208 = vmatprep.subr.mxu0 0.0
          %2209 = vmatpush1.msra.mxu0 0.0
          %2210 = vmatprep.mubr.f32.mxu0 0.0
          %2211 = vmatmul.mubr.f32.gmra.mrb[0].mxu0 %v2051
          %v2212 = vpop.f32.mrb[0].mxu0
          %v2213 = vadd.f32 0.0, %v2212
          %v2214 = vpop.f32.mrb[0].mxu0
          %2215 = vmatprep.mubr.f32.mxu0 0.0
          %2216 = vmatmul.mubr.f32.gmra.mrb[0].mxu0 %v2054
          %v2217 = vpop.f32.mrb[0].mxu0
          %v2218 = vadd.f32 0.0, %v2217
          %v2219 = vpop.f32.mrb[0].mxu0
          %2220 = vmatprep.mubr.f32.mxu0 0.0
          %2221 = vmatmul.mubr.f32.gmra.mrb[0].mxu0 %v2057
          %v2222 = vpop.f32.mrb[0].mxu0
          %v2223 = vadd.f32 0.0, %v2222
          %v2224 = vpop.f32.mrb[0].mxu0
          %2225 = vmatprep.mubr.f32.mxu0 0.0
          %2226 = vmatmul.mubr.f32.gmra.mrb[0].mxu0 %v2060
          %v2227 = vpop.f32.mrb[0].mxu0
          %v2228 = vadd.f32 0.0, %v2227
          %v2229 = vpop.f32.mrb[0].mxu0
          %2230 = vmatprep.mubr.f32.mxu0 0.0
          %2231 = vmatmul.mubr.f32.gmra.mrb[0].mxu0 %v2063
          %v2232 = vpop.f32.mrb[0].mxu0
          %v2233 = vadd.f32 0.0, %v2232
          %v2234 = vpop.f32.mrb[0].mxu0
          %2235 = vmatprep.mubr.f32.mxu0 0.0
          %2236 = vmatmul.mubr.f32.gmra.mrb[0].mxu0 %v2066
          %v2237 = vpop.f32.mrb[0].mxu0
          %v2238 = vadd.f32 0.0, %v2237
          %v2239 = vpop.f32.mrb[0].mxu0
          %2240 = vmatprep.mubr.f32.mxu0 0.0
          %2241 = vmatmul.mubr.f32.gmra.mrb[0].mxu0 %v2069
          %v2242 = vpop.f32.mrb[0].mxu0
          %v2243 = vadd.f32 0.0, %v2242
          %v2244 = vpop.f32.mrb[0].mxu0
          %2245 = vmatprep.mubr.f32.mxu0 0.0
          %2246 = vmatmul.mubr.f32.gmra.mrb[0].mxu0 %v2072
          %v2247 = vpop.f32.mrb[0].mxu0
          %v2248 = vadd.f32 0.0, %v2247
          %v2249 = vpop.f32.mrb[0].mxu0
          %2250 = vmatprep.mubr.f32.mxu0 0.0
          %2251 = vmatmul.mubr.f32.gmra.mrb[0].mxu0 %v2075
          %v2252 = vpop.f32.mrb[0].mxu0
          %v2253 = vadd.f32 0.0, %v2252
          %v2254 = vpop.f32.mrb[0].mxu0
          %2255 = vmatprep.mubr.f32.mxu0 0.0
          %2256 = vmatmul.mubr.f32.gmra.mrb[0].mxu0 %v2078
          %v2257 = vpop.f32.mrb[0].mxu0
          %v2258 = vadd.f32 0.0, %v2257
          %v2259 = vpop.f32.mrb[0].mxu0
          %2260 = vmatprep.mubr.f32.mxu0 0.0
          %2261 = vmatmul.mubr.f32.gmra.mrb[0].mxu0 %v2081
          %v2262 = vpop.f32.mrb[0].mxu0
          %v2263 = vadd.f32 0.0, %v2262
          %v2264 = vpop.f32.mrb[0].mxu0
          %2265 = vmatprep.mubr.f32.mxu0 0.0
          %2266 = vmatmul.mubr.f32.gmra.mrb[0].mxu0 %v2084
          %v2267 = vpop.f32.mrb[0].mxu0
          %v2268 = vadd.f32 0.0, %v2267
          %v2269 = vpop.f32.mrb[0].mxu0
          %2270 = vmatprep.mubr.f32.mxu0 0.0
          %2271 = vmatmul.mubr.f32.gmra.mrb[0].mxu0 %v2087
          %v2272 = vpop.f32.mrb[0].mxu0
          %v2273 = vadd.f32 0.0, %v2272
          %v2274 = vpop.f32.mrb[0].mxu0
          %2275 = vmatprep.mubr.f32.mxu0 0.0
          %2276 = vmatmul.mubr.f32.gmra.mrb[0].mxu0 %v2090
          %v2277 = vpop.f32.mrb[0].mxu0
          %v2278 = vadd.f32 0.0, %v2277
          %v2279 = vpop.f32.mrb[0].mxu0
          %2280 = vmatprep.mubr.f32.mxu0 0.0
          %2281 = vmatmul.mubr.f32.gmra.mrb[0].mxu0 %v2093
          %v2282 = vpop.f32.mrb[0].mxu0
          %v2283 = vadd.f32 0.0, %v2282
          %v2284 = vpop.f32.mrb[0].mxu0
          %2285 = vmatprep.mubr.f32.mxu0 0.0
          %2286 = vmatmul.mubr.f32.gmra.mrb[0].mxu0 %v2096
          %v2287 = vpop.f32.mrb[0].mxu0
          %v2288 = vadd.f32 0.0, %v2287
          %v2289 = vpop.f32.mrb[0].mxu0
          %2290 = vmatprep.mubr.f32.mxu0 0.0
          %2291 = vmatmul.mubr.f32.gmra.mrb[0].mxu0 %v2099
          %v2292 = vpop.f32.mrb[0].mxu0
          %v2293 = vadd.f32 0.0, %v2292
          %v2294 = vpop.f32.mrb[0].mxu0
          %2295 = vmatprep.mubr.f32.mxu0 0.0
          %2296 = vmatmul.mubr.f32.gmra.mrb[0].mxu0 %v2102
          %v2297 = vpop.f32.mrb[0].mxu0
          %v2298 = vadd.f32 0.0, %v2297
          %v2299 = vpop.f32.mrb[0].mxu0
          %2300 = vmatprep.mubr.f32.mxu0 0.0
          %2301 = vmatmul.mubr.f32.gmra.mrb[0].mxu0 %v2105
          %v2302 = vpop.f32.mrb[0].mxu0
          %v2303 = vadd.f32 0.0, %v2302
          %v2304 = vpop.f32.mrb[0].mxu0
          %2305 = vmatprep.mubr.f32.mxu0 0.0
          %2306 = vmatmul.mubr.f32.gmra.mrb[0].mxu0 %v2108
          %v2307 = vpop.f32.mrb[0].mxu0
          %v2308 = vadd.f32 0.0, %v2307
          %v2309 = vpop.f32.mrb[0].mxu0
          %2310 = vmatprep.mubr.f32.mxu0 0.0
          %2311 = vmatmul.mubr.f32.gmra.mrb[0].mxu0 %v2111
          %v2312 = vpop.f32.mrb[0].mxu0
          %v2313 = vadd.f32 0.0, %v2312
          %v2314 = vpop.f32.mrb[0].mxu0
          %2315 = vmatprep.mubr.f32.mxu0 0.0
          %2316 = vmatmul.mubr.f32.gmra.mrb[0].mxu0 %v2114
          %v2317 = vpop.f32.mrb[0].mxu0
          %v2318 = vadd.f32 0.0, %v2317
          %v2319 = vpop.f32.mrb[0].mxu0
          %2320 = vmatprep.mubr.f32.mxu0 0.0
          %2321 = vmatmul.mubr.f32.gmra.mrb[0].mxu0 %v2117
          %v2322 = vpop.f32.mrb[0].mxu0
          %v2323 = vadd.f32 0.0, %v2322
          %v2324 = vpop.f32.mrb[0].mxu0
          %2325 = vmatprep.mubr.f32.mxu0 0.0
          %2326 = vmatmul.mubr.f32.gmra.mrb[0].mxu0 %v2120
          %v2327 = vpop.f32.mrb[0].mxu0
          %v2328 = vadd.f32 0.0, %v2327
          %v2329 = vpop.f32.mrb[0].mxu0
          %2330 = vmatprep.mubr.f32.mxu0 0.0
          %2331 = vmatmul.mubr.f32.gmra.mrb[0].mxu0 %v2123
          %v2332 = vpop.f32.mrb[0].mxu0
          %v2333 = vadd.f32 0.0, %v2332
          %v2334 = vpop.f32.mrb[0].mxu0
          %2335 = vmatprep.mubr.f32.mxu0 0.0
          %2336 = vmatmul.mubr.f32.gmra.mrb[0].mxu0 %v2126
          %v2337 = vpop.f32.mrb[0].mxu0
          %v2338 = vadd.f32 0.0, %v2337
          %v2339 = vpop.f32.mrb[0].mxu0
          %2340 = vmatprep.mubr.f32.mxu0 0.0
          %2341 = vmatmul.mubr.f32.gmra.mrb[0].mxu0 %v2129
          %v2342 = vpop.f32.mrb[0].mxu0
          %v2343 = vadd.f32 0.0, %v2342
          %v2344 = vpop.f32.mrb[0].mxu0
          %2345 = vmatprep.mubr.f32.mxu0 0.0
          %2346 = vmatmul.mubr.f32.gmra.mrb[0].mxu0 %v2132
          %v2347 = vpop.f32.mrb[0].mxu0
          %v2348 = vadd.f32 0.0, %v2347
          %v2349 = vpop.f32.mrb[0].mxu0
          %2350 = vmatprep.mubr.f32.mxu0 0.0
          %2351 = vmatmul.mubr.f32.gmra.mrb[0].mxu0 %v2135
          %v2352 = vpop.f32.mrb[0].mxu0
          %v2353 = vadd.f32 0.0, %v2352
          %v2354 = vpop.f32.mrb[0].mxu0
          %2355 = vmatprep.mubr.f32.mxu0 0.0
          %2356 = vmatmul.mubr.f32.gmra.mrb[0].mxu0 %v2138
          %v2357 = vpop.f32.mrb[0].mxu0
          %v2358 = vadd.f32 0.0, %v2357
          %v2359 = vpop.f32.mrb[0].mxu0
          %2360 = vmatprep.mubr.f32.mxu0 0.0
          %2361 = vmatmul.mubr.f32.gmra.mrb[0].mxu0 %v2141
          %v2362 = vpop.f32.mrb[0].mxu0
          %v2363 = vadd.f32 0.0, %v2362
          %v2364 = vpop.f32.mrb[0].mxu0
          %2365 = vmatprep.mubr.f32.mxu0 0.0
          %2366 = vmatmul.mubr.f32.gmra.mrb[0].mxu0 %v2144
          %v2367 = vpop.f32.mrb[0].mxu0
          %v2368 = vadd.f32 0.0, %v2367
          %v2369 = vpop.f32.mrb[0].mxu0
          %2370 = vdwg.mxu0
          %2371 = vst.msk [vmem:[%s549] sm:$0xff] %vm909, %v2213
          %2372 = vst.msk [vmem:[%s549 + $0x8] sm:$0xff] %vm909, %v2218
          %2373 = vst.msk [vmem:[%s549 + $0x10] sm:$0xff] %vm909, %v2223
          %2374 = vst.msk [vmem:[%s549 + $0x18] sm:$0xff] %vm909, %v2228
          %2375 = vst.msk [vmem:[%s549 + $0x20] sm:$0xff] %vm909, %v2233
          %2376 = vst.msk [vmem:[%s549 + $0x28] sm:$0xff] %vm909, %v2238
          %2377 = vst.msk [vmem:[%s549 + $0x30] sm:$0xff] %vm909, %v2243
          %2378 = vst.msk [vmem:[%s549 + $0x38] sm:$0xff] %vm909, %v2248
          %2379 = vst.msk [vmem:[%s549 + $0x40] sm:$0xff] %vm909, %v2253
          %2380 = vst.msk [vmem:[%s549 + $0x48] sm:$0xff] %vm909, %v2258
          %2381 = vst.msk [vmem:[%s549 + $0x50] sm:$0xff] %vm909, %v2263
          %2382 = vst.msk [vmem:[%s549 + $0x58] sm:$0xff] %vm909, %v2268
          %2383 = vst.msk [vmem:[%s549 + $0x60] sm:$0xff] %vm909, %v2273
          %2384 = vst.msk [vmem:[%s549 + $0x68] sm:$0xff] %vm909, %v2278
          %2385 = vst.msk [vmem:[%s549 + $0x70] sm:$0xff] %vm909, %v2283
          %2386 = vst.msk [vmem:[%s549 + $0x78] sm:$0xff] %vm909, %v2288
          %2387 = vst.msk [vmem:[%s549 + $0x80] sm:$0xff] %vm909, %v2293
          %2388 = vst.msk [vmem:[%s549 + $0x88] sm:$0xff] %vm909, %v2298
          %2389 = vst.msk [vmem:[%s549 + $0x90] sm:$0xff] %vm909, %v2303
          %2390 = vst.msk [vmem:[%s549 + $0x98] sm:$0xff] %vm909, %v2308
          %2391 = vst.msk [vmem:[%s549 + $0xa0] sm:$0xff] %vm909, %v2313
          %2392 = vst.msk [vmem:[%s549 + $0xa8] sm:$0xff] %vm909, %v2318
          %2393 = vst.msk [vmem:[%s549 + $0xb0] sm:$0xff] %vm909, %v2323
          %2394 = vst.msk [vmem:[%s549 + $0xb8] sm:$0xff] %vm909, %v2328
          %2395 = vst.msk [vmem:[%s549 + $0xc0] sm:$0xff] %vm909, %v2333
          %2396 = vst.msk [vmem:[%s549 + $0xc8] sm:$0xff] %vm909, %v2338
          %2397 = vst.msk [vmem:[%s549 + $0xd0] sm:$0xff] %vm909, %v2343
          %2398 = vst.msk [vmem:[%s549 + $0xd8] sm:$0xff] %vm909, %v2348
          %2399 = vst.msk [vmem:[%s549 + $0xe0] sm:$0xff] %vm909, %v2353
          %2400 = vst.msk [vmem:[%s549 + $0xe8] sm:$0xff] %vm909, %v2358
          %2401 = vst.msk [vmem:[%s549 + $0xf0] sm:$0xff] %vm909, %v2363
          %2402 = vst.msk [vmem:[%s549 + $0xf8] sm:$0xff] %vm909, %v2368
          %v2403 = vld [vmem:[#allocation2 + $0x20] sm:$0xff]
          %v2404 = vld [vmem:[#allocation2 + $0x28] sm:$0xff]
          %v2405 = vld [vmem:[#allocation2 + $0x30] sm:$0xff]
          %v2406 = vld [vmem:[#allocation2 + $0x38] sm:$0xff]
          %v2407 = vld [vmem:[#allocation2 + $0x40] sm:$0xff]
          %s2408 = scalar_lea.vmem [#allocation9], 3
          %v2409 = vld [vmem:[%s2408] sm:$0x1]
          %v2411 = vlaneseq
          %v2412 = vshrl.u32 %v2411, 7
          %v2413 = vsub.s32 0, %v2412
          %v2414 = vrot.slane %v2409, %v2413
          %v2416 = vadd.f32 %v2403, %v2414
          %v2417 = vadd.f32 %v2404, %v2414
          %v2418 = vadd.f32 %v2405, %v2414
          %v2419 = vadd.f32 %v2406, %v2414
          %v2420 = vadd.f32 %v2407, %v2414
          %v2421 = vmax.f32 %v2416, 0.0
          %v2422 = vmax.f32 %v2417, 0.0
          %v2423 = vmax.f32 %v2418, 0.0
          %v2424 = vmax.f32 %v2419, 0.0
          %v2425 = vmax.f32 %v2420, 0.0
          %v2426 = vld [vmem:[#allocation15] sm:$0xff]
          %v2427 = vld [vmem:[#allocation15 + $0x8] sm:$0xff]
          %v2428 = vld [vmem:[#allocation15 + $0x10] sm:$0xff]
          %v2429 = vld [vmem:[#allocation15 + $0x18] sm:$0xff]
          %v2430 = vld [vmem:[#allocation15 + $0x20] sm:$0xff]
          %v2431 = vld [vmem:[#allocation15 + $0x28] sm:$0xff]
          %v2432 = vld [vmem:[#allocation15 + $0x30] sm:$0xff]
          %v2433 = vld [vmem:[#allocation15 + $0x38] sm:$0xff]
          %v2434 = vld [vmem:[#allocation15 + $0x40] sm:$0xff]
          %v2435 = vld [vmem:[#allocation15 + $0x48] sm:$0xff]
          %v2436 = vld [vmem:[#allocation15 + $0x50] sm:$0xff]
          %v2437 = vld [vmem:[#allocation15 + $0x58] sm:$0xff]
          %v2438 = vld [vmem:[#allocation15 + $0x60] sm:$0xff]
          %v2439 = vld [vmem:[#allocation15 + $0x68] sm:$0xff]
          %v2440 = vld [vmem:[#allocation15 + $0x70] sm:$0xff]
          %v2441 = vld [vmem:[#allocation15 + $0x78] sm:$0xff]
          %v2442 = vld [vmem:[#allocation15 + $0x80] sm:$0xff]
          %v2443 = vld [vmem:[#allocation15 + $0x88] sm:$0xff]
          %v2444 = vld [vmem:[#allocation15 + $0x90] sm:$0xff]
          %v2445 = vld [vmem:[#allocation15 + $0x98] sm:$0xff]
          %v2446 = vld [vmem:[#allocation15 + $0xa0] sm:$0xff]
          %v2447 = vld [vmem:[#allocation15 + $0xa8] sm:$0xff]
          %v2448 = vld [vmem:[#allocation15 + $0xb0] sm:$0xff]
          %v2449 = vld [vmem:[#allocation15 + $0xb8] sm:$0xff]
          %v2450 = vld [vmem:[#allocation15 + $0xc0] sm:$0xff]
          %v2451 = vld [vmem:[#allocation15 + $0xc8] sm:$0xff]
          %v2452 = vld [vmem:[#allocation15 + $0xd0] sm:$0xff]
          %v2453 = vld [vmem:[#allocation15 + $0xd8] sm:$0xff]
          %v2454 = vld [vmem:[#allocation15 + $0xe0] sm:$0xff]
          %v2455 = vld [vmem:[#allocation15 + $0xe8] sm:$0xff]
          %v2456 = vld [vmem:[#allocation15 + $0xf0] sm:$0xff]
          %v2457 = vld [vmem:[#allocation15 + $0xf8] sm:$0xff]
          %vm2458 = vcmask 326656
          %v2460 = vsel %vm2458, %v2426, 0
          %v2463 = vsel %vm2458, %v2427, 0
          %v2466 = vsel %vm2458, %v2428, 0
          %v2469 = vsel %vm2458, %v2429, 0
          %v2472 = vsel %vm2458, %v2430, 0
          %v2475 = vsel %vm2458, %v2431, 0
          %v2478 = vsel %vm2458, %v2432, 0
          %v2481 = vsel %vm2458, %v2433, 0
          %v2484 = vsel %vm2458, %v2434, 0
          %v2487 = vsel %vm2458, %v2435, 0
          %v2490 = vsel %vm2458, %v2436, 0
          %v2493 = vsel %vm2458, %v2437, 0
          %v2496 = vsel %vm2458, %v2438, 0
          %v2499 = vsel %vm2458, %v2439, 0
          %v2502 = vsel %vm2458, %v2440, 0
          %v2505 = vsel %vm2458, %v2441, 0
          %v2508 = vsel %vm2458, %v2442, 0
          %v2511 = vsel %vm2458, %v2443, 0
          %v2514 = vsel %vm2458, %v2444, 0
          %v2517 = vsel %vm2458, %v2445, 0
          %v2520 = vsel %vm2458, %v2446, 0
          %v2523 = vsel %vm2458, %v2447, 0
          %v2526 = vsel %vm2458, %v2448, 0
          %v2529 = vsel %vm2458, %v2449, 0
          %v2532 = vsel %vm2458, %v2450, 0
          %v2535 = vsel %vm2458, %v2451, 0
          %v2538 = vsel %vm2458, %v2452, 0
          %v2541 = vsel %vm2458, %v2453, 0
          %v2544 = vsel %vm2458, %v2454, 0
          %v2547 = vsel %vm2458, %v2455, 0
          %v2550 = vsel %vm2458, %v2456, 0
          %v2553 = vsel %vm2458, %v2457, 0
          %2555 = vmatprep.subr.mxu0 0.0
          %2556 = vmatpush1.msra.mxu0 %v2421
          %2557 = vmatprep.subr.mxu0 0.0
          %2558 = vmatpush1.msra.mxu0 %v2422
          %2559 = vmatprep.subr.mxu0 0.0
          %2560 = vmatpush1.msra.mxu0 %v2423
          %2561 = vmatprep.subr.mxu0 0.0
          %2562 = vmatpush1.msra.mxu0 %v2424
          %2563 = vmatprep.subr.mxu0 0.0
          %2564 = vmatpush1.msra.mxu0 %v2425
          %2565 = vmatprep.subr.mxu0 0.0
          %2566 = vmatpush1.msra.mxu0 0.0
          %2567 = vmatprep.subr.mxu0 0.0
          %2568 = vmatpush1.msra.mxu0 0.0
          %2569 = vmatprep.subr.mxu0 0.0
          %2570 = vmatpush1.msra.mxu0 0.0
          %2571 = vmatprep.subr.mxu0 0.0
          %2572 = vmatpush1.msra.mxu0 0.0
          %2573 = vmatprep.subr.mxu0 0.0
          %2574 = vmatpush1.msra.mxu0 0.0
          %2575 = vmatprep.subr.mxu0 0.0
          %2576 = vmatpush1.msra.mxu0 0.0
          %2577 = vmatprep.subr.mxu0 0.0
          %2578 = vmatpush1.msra.mxu0 0.0
          %2579 = vmatprep.subr.mxu0 0.0
          %2580 = vmatpush1.msra.mxu0 0.0
          %2581 = vmatprep.subr.mxu0 0.0
          %2582 = vmatpush1.msra.mxu0 0.0
          %2583 = vmatprep.subr.mxu0 0.0
          %2584 = vmatpush1.msra.mxu0 0.0
          %2585 = vmatprep.subr.mxu0 0.0
          %2586 = vmatpush1.msra.mxu0 0.0
          %2587 = vmatprep.subr.mxu0 0.0
          %2588 = vmatpush1.msra.mxu0 0.0
          %2589 = vmatprep.subr.mxu0 0.0
          %2590 = vmatpush1.msra.mxu0 0.0
          %2591 = vmatprep.subr.mxu0 0.0
          %2592 = vmatpush1.msra.mxu0 0.0
          %2593 = vmatprep.subr.mxu0 0.0
          %2594 = vmatpush1.msra.mxu0 0.0
          %2595 = vmatprep.subr.mxu0 0.0
          %2596 = vmatpush1.msra.mxu0 0.0
          %2597 = vmatprep.subr.mxu0 0.0
          %2598 = vmatpush1.msra.mxu0 0.0
          %2599 = vmatprep.subr.mxu0 0.0
          %2600 = vmatpush1.msra.mxu0 0.0
          %2601 = vmatprep.subr.mxu0 0.0
          %2602 = vmatpush1.msra.mxu0 0.0
          %2603 = vmatprep.subr.mxu0 0.0
          %2604 = vmatpush1.msra.mxu0 0.0
          %2605 = vmatprep.subr.mxu0 0.0
          %2606 = vmatpush1.msra.mxu0 0.0
          %2607 = vmatprep.subr.mxu0 0.0
          %2608 = vmatpush1.msra.mxu0 0.0
          %2609 = vmatprep.subr.mxu0 0.0
          %2610 = vmatpush1.msra.mxu0 0.0
          %2611 = vmatprep.subr.mxu0 0.0
          %2612 = vmatpush1.msra.mxu0 0.0
          %2613 = vmatprep.subr.mxu0 0.0
          %2614 = vmatpush1.msra.mxu0 0.0
          %2615 = vmatprep.subr.mxu0 0.0
          %2616 = vmatpush1.msra.mxu0 0.0
          %2617 = vmatprep.subr.mxu0 0.0
          %2618 = vmatpush1.msra.mxu0 0.0
          %2619 = vmatprep.mubr.f32.mxu0 0.0
          %2620 = vmatmul.mubr.f32.gmra.mrb[0].mxu0 %v2460
          %v2621 = vpop.f32.mrb[0].mxu0
          %v2622 = vadd.f32 0.0, %v2621
          %v2623 = vpop.f32.mrb[0].mxu0
          %2624 = vmatprep.mubr.f32.mxu0 0.0
          %2625 = vmatmul.mubr.f32.gmra.mrb[0].mxu0 %v2463
          %v2626 = vpop.f32.mrb[0].mxu0
          %v2627 = vadd.f32 0.0, %v2626
          %v2628 = vpop.f32.mrb[0].mxu0
          %2629 = vmatprep.mubr.f32.mxu0 0.0
          %2630 = vmatmul.mubr.f32.gmra.mrb[0].mxu0 %v2466
          %v2631 = vpop.f32.mrb[0].mxu0
          %v2632 = vadd.f32 0.0, %v2631
          %v2633 = vpop.f32.mrb[0].mxu0
          %2634 = vmatprep.mubr.f32.mxu0 0.0
          %2635 = vmatmul.mubr.f32.gmra.mrb[0].mxu0 %v2469
          %v2636 = vpop.f32.mrb[0].mxu0
          %v2637 = vadd.f32 0.0, %v2636
          %v2638 = vpop.f32.mrb[0].mxu0
          %2639 = vmatprep.mubr.f32.mxu0 0.0
          %2640 = vmatmul.mubr.f32.gmra.mrb[0].mxu0 %v2472
          %v2641 = vpop.f32.mrb[0].mxu0
          %v2642 = vadd.f32 0.0, %v2641
          %v2643 = vpop.f32.mrb[0].mxu0
          %2644 = vmatprep.mubr.f32.mxu0 0.0
          %2645 = vmatmul.mubr.f32.gmra.mrb[0].mxu0 %v2475
          %v2646 = vpop.f32.mrb[0].mxu0
          %v2647 = vadd.f32 0.0, %v2646
          %v2648 = vpop.f32.mrb[0].mxu0
          %2649 = vmatprep.mubr.f32.mxu0 0.0
          %2650 = vmatmul.mubr.f32.gmra.mrb[0].mxu0 %v2478
          %v2651 = vpop.f32.mrb[0].mxu0
          %v2652 = vadd.f32 0.0, %v2651
          %v2653 = vpop.f32.mrb[0].mxu0
          %2654 = vmatprep.mubr.f32.mxu0 0.0
          %2655 = vmatmul.mubr.f32.gmra.mrb[0].mxu0 %v2481
          %v2656 = vpop.f32.mrb[0].mxu0
          %v2657 = vadd.f32 0.0, %v2656
          %v2658 = vpop.f32.mrb[0].mxu0
          %2659 = vmatprep.mubr.f32.mxu0 0.0
          %2660 = vmatmul.mubr.f32.gmra.mrb[0].mxu0 %v2484
          %v2661 = vpop.f32.mrb[0].mxu0
          %v2662 = vadd.f32 0.0, %v2661
          %v2663 = vpop.f32.mrb[0].mxu0
          %2664 = vmatprep.mubr.f32.mxu0 0.0
          %2665 = vmatmul.mubr.f32.gmra.mrb[0].mxu0 %v2487
          %v2666 = vpop.f32.mrb[0].mxu0
          %v2667 = vadd.f32 0.0, %v2666
          %v2668 = vpop.f32.mrb[0].mxu0
          %2669 = vmatprep.mubr.f32.mxu0 0.0
          %2670 = vmatmul.mubr.f32.gmra.mrb[0].mxu0 %v2490
          %v2671 = vpop.f32.mrb[0].mxu0
          %v2672 = vadd.f32 0.0, %v2671
          %v2673 = vpop.f32.mrb[0].mxu0
          %2674 = vmatprep.mubr.f32.mxu0 0.0
          %2675 = vmatmul.mubr.f32.gmra.mrb[0].mxu0 %v2493
          %v2676 = vpop.f32.mrb[0].mxu0
          %v2677 = vadd.f32 0.0, %v2676
          %v2678 = vpop.f32.mrb[0].mxu0
          %2679 = vmatprep.mubr.f32.mxu0 0.0
          %2680 = vmatmul.mubr.f32.gmra.mrb[0].mxu0 %v2496
          %v2681 = vpop.f32.mrb[0].mxu0
          %v2682 = vadd.f32 0.0, %v2681
          %v2683 = vpop.f32.mrb[0].mxu0
          %2684 = vmatprep.mubr.f32.mxu0 0.0
          %2685 = vmatmul.mubr.f32.gmra.mrb[0].mxu0 %v2499
          %v2686 = vpop.f32.mrb[0].mxu0
          %v2687 = vadd.f32 0.0, %v2686
          %v2688 = vpop.f32.mrb[0].mxu0
          %2689 = vmatprep.mubr.f32.mxu0 0.0
          %2690 = vmatmul.mubr.f32.gmra.mrb[0].mxu0 %v2502
          %v2691 = vpop.f32.mrb[0].mxu0
          %v2692 = vadd.f32 0.0, %v2691
          %v2693 = vpop.f32.mrb[0].mxu0
          %2694 = vmatprep.mubr.f32.mxu0 0.0
          %2695 = vmatmul.mubr.f32.gmra.mrb[0].mxu0 %v2505
          %v2696 = vpop.f32.mrb[0].mxu0
          %v2697 = vadd.f32 0.0, %v2696
          %v2698 = vpop.f32.mrb[0].mxu0
          %2699 = vmatprep.mubr.f32.mxu0 0.0
          %2700 = vmatmul.mubr.f32.gmra.mrb[0].mxu0 %v2508
          %v2701 = vpop.f32.mrb[0].mxu0
          %v2702 = vadd.f32 0.0, %v2701
          %v2703 = vpop.f32.mrb[0].mxu0
          %2704 = vmatprep.mubr.f32.mxu0 0.0
          %2705 = vmatmul.mubr.f32.gmra.mrb[0].mxu0 %v2511
          %v2706 = vpop.f32.mrb[0].mxu0
          %v2707 = vadd.f32 0.0, %v2706
          %v2708 = vpop.f32.mrb[0].mxu0
          %2709 = vmatprep.mubr.f32.mxu0 0.0
          %2710 = vmatmul.mubr.f32.gmra.mrb[0].mxu0 %v2514
          %v2711 = vpop.f32.mrb[0].mxu0
          %v2712 = vadd.f32 0.0, %v2711
          %v2713 = vpop.f32.mrb[0].mxu0
          %2714 = vmatprep.mubr.f32.mxu0 0.0
          %2715 = vmatmul.mubr.f32.gmra.mrb[0].mxu0 %v2517
          %v2716 = vpop.f32.mrb[0].mxu0
          %v2717 = vadd.f32 0.0, %v2716
          %v2718 = vpop.f32.mrb[0].mxu0
          %2719 = vmatprep.mubr.f32.mxu0 0.0
          %2720 = vmatmul.mubr.f32.gmra.mrb[0].mxu0 %v2520
          %v2721 = vpop.f32.mrb[0].mxu0
          %v2722 = vadd.f32 0.0, %v2721
          %v2723 = vpop.f32.mrb[0].mxu0
          %2724 = vmatprep.mubr.f32.mxu0 0.0
          %2725 = vmatmul.mubr.f32.gmra.mrb[0].mxu0 %v2523
          %v2726 = vpop.f32.mrb[0].mxu0
          %v2727 = vadd.f32 0.0, %v2726
          %v2728 = vpop.f32.mrb[0].mxu0
          %2729 = vmatprep.mubr.f32.mxu0 0.0
          %2730 = vmatmul.mubr.f32.gmra.mrb[0].mxu0 %v2526
          %v2731 = vpop.f32.mrb[0].mxu0
          %v2732 = vadd.f32 0.0, %v2731
          %v2733 = vpop.f32.mrb[0].mxu0
          %2734 = vmatprep.mubr.f32.mxu0 0.0
          %2735 = vmatmul.mubr.f32.gmra.mrb[0].mxu0 %v2529
          %v2736 = vpop.f32.mrb[0].mxu0
          %v2737 = vadd.f32 0.0, %v2736
          %v2738 = vpop.f32.mrb[0].mxu0
          %2739 = vmatprep.mubr.f32.mxu0 0.0
          %2740 = vmatmul.mubr.f32.gmra.mrb[0].mxu0 %v2532
          %v2741 = vpop.f32.mrb[0].mxu0
          %v2742 = vadd.f32 0.0, %v2741
          %v2743 = vpop.f32.mrb[0].mxu0
          %2744 = vmatprep.mubr.f32.mxu0 0.0
          %2745 = vmatmul.mubr.f32.gmra.mrb[0].mxu0 %v2535
          %v2746 = vpop.f32.mrb[0].mxu0
          %v2747 = vadd.f32 0.0, %v2746
          %v2748 = vpop.f32.mrb[0].mxu0
          %2749 = vmatprep.mubr.f32.mxu0 0.0
          %2750 = vmatmul.mubr.f32.gmra.mrb[0].mxu0 %v2538
          %v2751 = vpop.f32.mrb[0].mxu0
          %v2752 = vadd.f32 0.0, %v2751
          %v2753 = vpop.f32.mrb[0].mxu0
          %2754 = vmatprep.mubr.f32.mxu0 0.0
          %2755 = vmatmul.mubr.f32.gmra.mrb[0].mxu0 %v2541
          %v2756 = vpop.f32.mrb[0].mxu0
          %v2757 = vadd.f32 0.0, %v2756
          %v2758 = vpop.f32.mrb[0].mxu0
          %2759 = vmatprep.mubr.f32.mxu0 0.0
          %2760 = vmatmul.mubr.f32.gmra.mrb[0].mxu0 %v2544
          %v2761 = vpop.f32.mrb[0].mxu0
          %v2762 = vadd.f32 0.0, %v2761
          %v2763 = vpop.f32.mrb[0].mxu0
          %2764 = vmatprep.mubr.f32.mxu0 0.0
          %2765 = vmatmul.mubr.f32.gmra.mrb[0].mxu0 %v2547
          %v2766 = vpop.f32.mrb[0].mxu0
          %v2767 = vadd.f32 0.0, %v2766
          %v2768 = vpop.f32.mrb[0].mxu0
          %2769 = vmatprep.mubr.f32.mxu0 0.0
          %2770 = vmatmul.mubr.f32.gmra.mrb[0].mxu0 %v2550
          %v2771 = vpop.f32.mrb[0].mxu0
          %v2772 = vadd.f32 0.0, %v2771
          %v2773 = vpop.f32.mrb[0].mxu0
          %2774 = vmatprep.mubr.f32.mxu0 0.0
          %2775 = vmatmul.mubr.f32.gmra.mrb[0].mxu0 %v2553
          %v2776 = vpop.f32.mrb[0].mxu0
          %v2777 = vadd.f32 0.0, %v2776
          %v2778 = vpop.f32.mrb[0].mxu0
          %2779 = vdwg.mxu0
          %2780 = vst.msk [vmem:[%s556] sm:$0xff] %vm909, %v2622
          %2781 = vst.msk [vmem:[%s556 + $0x8] sm:$0xff] %vm909, %v2627
          %2782 = vst.msk [vmem:[%s556 + $0x10] sm:$0xff] %vm909, %v2632
          %2783 = vst.msk [vmem:[%s556 + $0x18] sm:$0xff] %vm909, %v2637
          %2784 = vst.msk [vmem:[%s556 + $0x20] sm:$0xff] %vm909, %v2642
          %2785 = vst.msk [vmem:[%s556 + $0x28] sm:$0xff] %vm909, %v2647
          %2786 = vst.msk [vmem:[%s556 + $0x30] sm:$0xff] %vm909, %v2652
          %2787 = vst.msk [vmem:[%s556 + $0x38] sm:$0xff] %vm909, %v2657
          %2788 = vst.msk [vmem:[%s556 + $0x40] sm:$0xff] %vm909, %v2662
          %2789 = vst.msk [vmem:[%s556 + $0x48] sm:$0xff] %vm909, %v2667
          %2790 = vst.msk [vmem:[%s556 + $0x50] sm:$0xff] %vm909, %v2672
          %2791 = vst.msk [vmem:[%s556 + $0x58] sm:$0xff] %vm909, %v2677
          %2792 = vst.msk [vmem:[%s556 + $0x60] sm:$0xff] %vm909, %v2682
          %2793 = vst.msk [vmem:[%s556 + $0x68] sm:$0xff] %vm909, %v2687
          %2794 = vst.msk [vmem:[%s556 + $0x70] sm:$0xff] %vm909, %v2692
          %2795 = vst.msk [vmem:[%s556 + $0x78] sm:$0xff] %vm909, %v2697
          %2796 = vst.msk [vmem:[%s556 + $0x80] sm:$0xff] %vm909, %v2702
          %2797 = vst.msk [vmem:[%s556 + $0x88] sm:$0xff] %vm909, %v2707
          %2798 = vst.msk [vmem:[%s556 + $0x90] sm:$0xff] %vm909, %v2712
          %2799 = vst.msk [vmem:[%s556 + $0x98] sm:$0xff] %vm909, %v2717
          %2800 = vst.msk [vmem:[%s556 + $0xa0] sm:$0xff] %vm909, %v2722
          %2801 = vst.msk [vmem:[%s556 + $0xa8] sm:$0xff] %vm909, %v2727
          %2802 = vst.msk [vmem:[%s556 + $0xb0] sm:$0xff] %vm909, %v2732
          %2803 = vst.msk [vmem:[%s556 + $0xb8] sm:$0xff] %vm909, %v2737
          %2804 = vst.msk [vmem:[%s556 + $0xc0] sm:$0xff] %vm909, %v2742
          %2805 = vst.msk [vmem:[%s556 + $0xc8] sm:$0xff] %vm909, %v2747
          %2806 = vst.msk [vmem:[%s556 + $0xd0] sm:$0xff] %vm909, %v2752
          %2807 = vst.msk [vmem:[%s556 + $0xd8] sm:$0xff] %vm909, %v2757
          %2808 = vst.msk [vmem:[%s556 + $0xe0] sm:$0xff] %vm909, %v2762
          %2809 = vst.msk [vmem:[%s556 + $0xe8] sm:$0xff] %vm909, %v2767
          %2810 = vst.msk [vmem:[%s556 + $0xf0] sm:$0xff] %vm909, %v2772
          %2811 = vst.msk [vmem:[%s556 + $0xf8] sm:$0xff] %vm909, %v2777
        $region92: #{tpu_custom_call.1} parent=51 // pred_fallthru
          _
        %s2812 = sand.u32 %s239, 1
        %s2813 = scalar_lea.sflag [#allocation5], %s2812
        %s2814 = sand.u32 %s239, 1
        %s2815 = smul.addr %s2814, 256
        %s2816 = scalar_lea.vmem [#allocation17], %s2815
        %s2817 = sand.u32 %s39, 1
        %s2818 = scalar_lea.sflag [#allocation19], %s2817
        %s2819 = sand.u32 %s265, 1
        %s2820 = smul.addr %s2819, 256
        %s2821 = scalar_lea.vmem [#allocation18], %s2820
        %s2822 = sand.u32 %s39, 1
        %s2823 = scalar_lea.sflag [#allocation19], %s2822
        %s2824 = sand.u32 %s291, 1
        %s2825 = smul.addr %s2824, 256
        %s2826 = scalar_lea.vmem [#allocation20], %s2825
        %s2827 = sand.u32 %s317, 1
        %s2828 = scalar_lea.sflag [#allocation22], %s2827
        %s2829 = sand.u32 %s317, 1
        %s2830 = smul.addr %s2829, 256
        %s2831 = scalar_lea.vmem [#allocation21], %s2830
        // Predicated region
        $region93: #{tpu_custom_call.1} parent=51 // pred_check
          %p2832 = pneg %p249
        $region94: #{tpu_custom_call.1} parent=51 // pred_check_branch
          %2834 = sbr.rel (%p2832) target = $region96
        $region95: #{tpu_custom_call.1} parent=51 // pred_region
          %s2836 = ssub.s32 4096, 4096
          %2837 = vsyncadd %s2813, %s2836
          %s2838 = smul.addr %s43, 32
          %s2839 = smul.addr %s2838, 128
          %s2840 = scalar_lea.hbm %s8, %s2839
          %s2841 = sshll.u32 %s2816, 4
          %s2842 = int_to_ptr.vmem [resolvable:$true] %s2841
          %2847 = dma.vmem_to_hbm [thread:$0]  %s2842, 4096, %s2840, %s2813, 128, 128, 8
        $region96: #{tpu_custom_call.1} parent=51 // pred_fallthru
          _
        // Predicated region
        $region97: #{tpu_custom_call.1} parent=51 // pred_check
          %p2848 = pneg %p275
        $region98: #{tpu_custom_call.1} parent=51 // pred_check_branch
          %2850 = sbr.rel (%p2848) target = $region100
        $region99: #{tpu_custom_call.1} parent=51 // pred_region
          %s2852 = ssub.s32 4096, 4096
          %2853 = vsyncadd %s2818, %s2852
          %s2854 = smul.addr %s43, 32
          %s2855 = smul.addr %s2854, 128
          %s2856 = scalar_lea.hbm %s9, %s2855
          %s2857 = sshll.u32 %s2821, 4
          %s2858 = int_to_ptr.vmem [resolvable:$true] %s2857
          %2863 = dma.vmem_to_hbm [thread:$0]  %s2858, 4096, %s2856, %s2818, 128, 128, 8
        $region100: #{tpu_custom_call.1} parent=51 // pred_fallthru
          _
        // Predicated region
        $region101: #{tpu_custom_call.1} parent=51 // pred_check
          %p2864 = pneg %p301
        $region102: #{tpu_custom_call.1} parent=51 // pred_check_branch
          %2866 = sbr.rel (%p2864) target = $region104
        $region103: #{tpu_custom_call.1} parent=51 // pred_region
          %s2868 = ssub.s32 4096, 4096
          %2869 = vsyncadd %s2823, %s2868
          %s2870 = smul.addr %s43, 32
          %s2871 = smul.addr %s2870, 128
          %s2872 = scalar_lea.hbm %s10, %s2871
          %s2873 = sshll.u32 %s2826, 4
          %s2874 = int_to_ptr.vmem [resolvable:$true] %s2873
          %2879 = dma.vmem_to_hbm [thread:$0]  %s2874, 4096, %s2872, %s2823, 128, 128, 8
        $region104: #{tpu_custom_call.1} parent=51 // pred_fallthru
          _
        // Predicated region
        $region105: #{tpu_custom_call.1} parent=51 // pred_check
          %p2880 = pneg %p327
        $region106: #{tpu_custom_call.1} parent=51 // pred_check_branch
          %2882 = sbr.rel (%p2880) target = $region108
        $region107: #{tpu_custom_call.1} parent=51 // pred_region
          %s2884 = ssub.s32 4096, 4096
          %2885 = vsyncadd %s2828, %s2884
          %s2886 = smul.addr %s43, 32
          %s2887 = smul.addr %s2886, 128
          %s2888 = scalar_lea.hbm %s11, %s2887
          %s2889 = sshll.u32 %s2831, 4
          %s2890 = int_to_ptr.vmem [resolvable:$true] %s2889
          %2895 = dma.vmem_to_hbm [thread:$0]  %s2890, 4096, %s2888, %s2828, 128, 128, 8
        $region108: #{tpu_custom_call.1} parent=51 // pred_fallthru
          _
      $region52: #{tpu_custom_call.1} parent=5 // pred_fallthru
        _
      %p2896 = scmp.le.s32.totalorder 2, %s34
      // Predicated region
      $region109: #{tpu_custom_call.1} parent=5 // pred_check
        %p2897 = pneg %p2896
      $region110: #{tpu_custom_call.1} parent=5 // pred_check_branch
        %2899 = sbr.rel (%p2897) target = $region112
      $region111: #{tpu_custom_call.1} parent=5 // pred_region
        %s2900 = ssub.s32 %s34, 2
        // Predicated region
        $region113: #{tpu_custom_call.1} parent=111 // pred_check
          %p2901 = pneg %p255
        $region114: #{tpu_custom_call.1} parent=111 // pred_check_branch
          %2903 = sbr.rel (%p2901) target = $region116
        $region115: #{tpu_custom_call.1} parent=111 // pred_region
          %s2904 = sand.u32 %s240, 1
          %s2905 = scalar_lea.sflag [#allocation5], %s2904
          %s2906 = sand.u32 %s240, 1
          %s2907 = smul.addr %s2906, 256
          %s2908 = scalar_lea.vmem [#allocation17], %s2907
          %2909 = dma.done %s2905, 4096
        $region116: #{tpu_custom_call.1} parent=111 // pred_fallthru
          _
        // Predicated region
        $region117: #{tpu_custom_call.1} parent=111 // pred_check
          %p2910 = pneg %p281
        $region118: #{tpu_custom_call.1} parent=111 // pred_check_branch
          %2912 = sbr.rel (%p2910) target = $region120
        $region119: #{tpu_custom_call.1} parent=111 // pred_region
          %s2913 = sand.u32 %s40, 1
          %s2914 = scalar_lea.sflag [#allocation19], %s2913
          %s2915 = sand.u32 %s266, 1
          %s2916 = smul.addr %s2915, 256
          %s2917 = scalar_lea.vmem [#allocation18], %s2916
          %2918 = dma.done %s2914, 4096
        $region120: #{tpu_custom_call.1} parent=111 // pred_fallthru
          _
        // Predicated region
        $region121: #{tpu_custom_call.1} parent=111 // pred_check
          %p2919 = pneg %p307
        $region122: #{tpu_custom_call.1} parent=111 // pred_check_branch
          %2921 = sbr.rel (%p2919) target = $region124
        $region123: #{tpu_custom_call.1} parent=111 // pred_region
          %s2922 = sand.u32 %s40, 1
          %s2923 = scalar_lea.sflag [#allocation19], %s2922
          %s2924 = sand.u32 %s292, 1
          %s2925 = smul.addr %s2924, 256
          %s2926 = scalar_lea.vmem [#allocation20], %s2925
          %2927 = dma.done %s2923, 4096
        $region124: #{tpu_custom_call.1} parent=111 // pred_fallthru
          _
        // Predicated region
        $region125: #{tpu_custom_call.1} parent=111 // pred_check
          %p2928 = pneg %p333
        $region126: #{tpu_custom_call.1} parent=111 // pred_check_branch
          %2930 = sbr.rel (%p2928) target = $region128
        $region127: #{tpu_custom_call.1} parent=111 // pred_region
          %s2931 = sand.u32 %s318, 1
          %s2932 = scalar_lea.sflag [#allocation22], %s2931
          %s2933 = sand.u32 %s318, 1
          %s2934 = smul.addr %s2933, 256
          %s2935 = scalar_lea.vmem [#allocation21], %s2934
          %2936 = dma.done %s2932, 4096
        $region128: #{tpu_custom_call.1} parent=111 // pred_fallthru
          _
      $region112: #{tpu_custom_call.1} parent=5 // pred_fallthru
        _
    $region6: #{tpu_custom_call.1} parent=1 // loop_footer
      %s38 = sadd.s32 1, %s34
    $region7: #{tpu_custom_call.1} parent=1 // loop_footer_branch
      %33 = sbr.rel target = $region3
    $region8: #{tpu_custom_call.1} parent=1 // loop_exit
      _
    %2937 = vsyncpa [#allocation4], 1
    %s2938 = scalar_lea.sflag [#allocation4], 1
    %2939 = vsyncpa %s2938, 1
    %2940 = vsyncpa [#allocation7], 1
    %2941 = vsyncpa [#allocation10], 1
    %2942 = vsyncpa [#allocation13], 1
    %2943 = vsyncpa [#allocation16], 1
    %2944 = vsyncpa [#allocation5], 1
    %s2945 = scalar_lea.sflag [#allocation5], 1
    %2946 = vsyncpa %s2945, 1
    %2947 = vsyncpa [#allocation19], 1
    %s2948 = scalar_lea.sflag [#allocation19], 1
    %2949 = vsyncpa %s2948, 1
    %2950 = vsyncpa [#allocation22], 1
    %s2951 = scalar_lea.sflag [#allocation22], 1
    %2952 = vsyncpa %s2951, 1

</llo_original>
